<compile_context>
chip_gen: v5e
topology: v5e:2x2
jax: 0.10.0
libtpu: 0.0.40
codegen_flags: <defaults>
</compile_context>

<pallas_src>
import functools
import math

import jax
import jax.numpy as jnp
from jax.experimental import pallas as pl
from jax.experimental.pallas import tpu as pltpu


# ----------------------------- kernel helpers --------------------------------


def _layer_norm(t, g, b):
    """t: (N, H) f32; g/b broadcastable to t. eps matches torch.nn.LayerNorm."""
    mu = jnp.mean(t, axis=-1, keepdims=True)
    var = jnp.mean(jnp.square(t - mu), axis=-1, keepdims=True)
    return (t - mu) * jax.lax.rsqrt(var + 1e-5) * g + b


def _mha(q_in, kv_in, wqkv_ref, bqkv_ref, wo_ref, batch, sq, sk, heads, dk):
    """Multi-head attention on pre-normed bf16 activations.

    q_in: (batch*sq, H) bf16, kv_in: (batch*sk, H) bf16.
    wqkv_ref block: (1, 3*heads, H, dk) bf16, head-major packing -> every
    per-head weight is a free major-axis ref index (no lane slicing).
    The output projection is accumulated per head (no concatenate):
        concat(o_h) @ Wo == sum_h o_h @ Wo[h]        with Wo packed (heads, dk, H).
    1/sqrt(dk) is already folded into the Q weights/bias by the host packer.
    Returns (batch*sq, H) f32.
    """
    H = heads * dk
    out = jnp.zeros((batch * sq, H), jnp.float32)
    for h in range(heads):                       # static unroll; no relayouts
        # projections: bf16 operands, f32 accumulation (K = H)
        qh = (jnp.dot(q_in, wqkv_ref[0, h],
                      preferred_element_type=jnp.float32) + bqkv_ref[0, h])
        kh = (jnp.dot(kv_in, wqkv_ref[0, heads + h],
                      preferred_element_type=jnp.float32) + bqkv_ref[0, heads + h])
        vh = (jnp.dot(kv_in, wqkv_ref[0, 2 * heads + h],
                      preferred_element_type=jnp.float32) + bqkv_ref[0, 2 * heads + h])
        # attention core in f32 (weight-free, tiny; leading-dim reshape only)
        q3 = qh.reshape(batch, sq, dk)
        k3 = kh.reshape(batch, sk, dk)
        v3 = vh.reshape(batch, sk, dk)
        s = jnp.einsum("bqd,bkd->bqk", q3, k3,
                       preferred_element_type=jnp.float32)       # (b, sq, sk)
        s = s - jnp.max(s, axis=-1, keepdims=True)
        e = jnp.exp(s)
        p = e * pl.reciprocal(jnp.sum(e, axis=-1, keepdims=True), approx=True)
        o3 = jnp.einsum("bqk,bkd->bqd", p, v3,
                        preferred_element_type=jnp.float32)      # (b, sq, dk)
        # per-head output projection, accumulated (replaces concat + (H,H) dot)
        out = out + jnp.dot(o3.reshape(batch * sq, dk),
                            wo_ref[0, h].astype(jnp.float32),
                            preferred_element_type=jnp.float32)
    return out


# ------------------------------ fused kernel ----------------------------------


def _decoder_kernel(
    # inputs
    x_ref, enc_ref,
    lng_ref, lnb_ref,
    wqkv1_ref, bqkv1_ref, wo1_ref, bo1_ref,
    wqkv2_ref, bqkv2_ref, wo2_ref, bo2_ref,
    wff1_ref, bff1_ref, wff2_ref, bff2_ref,
    lnfg_ref, lnfb_ref,
    # outputs
    o_ref,
    # scratch
    x_scr,
    *, batch, seq, seq_enc, heads,
):
    i = pl.program_id(0)
    H = x_scr.shape[-1]
    dk = H // heads

    # prologue: load the (host-positional-encoded, flattened) input once
    @pl.when(i == 0)
    def _():
        x_scr[...] = x_ref[...]

    x2 = x_scr[...]                       # (B*S, H) f32 carried activation
    lng = lng_ref[0]                      # (3, H) gammas for norm1..norm3
    lnb = lnb_ref[0]                      # (3, H) betas

    # --- self-attention sub-layer (pre-norm + residual) -----------------------
    t2 = _layer_norm(x2, lng[0:1, :], lnb[0:1, :]).astype(jnp.bfloat16)
    x2 = x2 + _mha(t2, t2, wqkv1_ref, bqkv1_ref, wo1_ref,
                   batch, seq, seq, heads, dk) + bo1_ref[0]
    # TODO(synk): tgt_mask (masked_fill -1e9) not applied; reference default None.

    # --- cross-attention sub-layer --------------------------------------------
    t2 = _layer_norm(x2, lng[1:2, :], lnb[1:2, :]).astype(jnp.bfloat16)
    x2 = x2 + _mha(t2, enc_ref[...], wqkv2_ref, bqkv2_ref, wo2_ref,
                   batch, seq, seq_enc, heads, dk) + bo2_ref[0]

    # --- feed-forward sub-layer -------------------------------------------------
    t2 = _layer_norm(x2, lng[2:3, :], lnb[2:3, :]).astype(jnp.bfloat16)
    h1 = jnp.maximum(
        jnp.dot(t2, wff1_ref[0], preferred_element_type=jnp.float32) + bff1_ref[0],
        0.0)
    x2 = x2 + jnp.dot(h1.astype(jnp.bfloat16), wff2_ref[0],
                      preferred_element_type=jnp.float32) + bff2_ref[0]

    # carry to next layer
    x_scr[...] = x2

    # epilogue: final LayerNorm, written once (constant out index_map defers
    # the HBM writeback to the end of the grid).
    @pl.when(i == pl.num_programs(0) - 1)
    def _():
        o_ref[...] = _layer_norm(x2, lnfg_ref[...], lnfb_ref[...])


# ------------------------------ host wrapper -----------------------------------


def decoder_forward(params, x, enc_output, heads):
    B, S, H = x.shape
    S_enc = enc_output.shape[1]
    assert H % heads == 0
    dk = H // heads
    L = params["lng"].shape[0]
    d_ff = params["wff1"].shape[-1]
    N, Ne = B * S, B * S_enc

    # Positional encoding + flattening on the host: keeps the kernel's carried
    # activation 2-D and removes the PE table from resident VMEM.
    x2 = (x.astype(jnp.float32) * math.sqrt(H)
          + params["pe"][:S][None, :, :]).reshape(N, H)
    enc2 = enc_output.reshape(Ne, H).astype(jnp.bfloat16)

    per_layer3 = lambda i: (i, 0, 0)
    per_layer4 = lambda i: (i, 0, 0, 0)
    const2 = lambda i: (0, 0)

    kernel = functools.partial(_decoder_kernel, batch=B, seq=S,
                               seq_enc=S_enc, heads=heads)

    out2 = pl.pallas_call(
        kernel,
        out_shape=jax.ShapeDtypeStruct((N, H), jnp.float32),
        grid_spec=pltpu.PrefetchScalarGridSpec(
            num_scalar_prefetch=0,
            grid=(L,),
            in_specs=[
                pl.BlockSpec((N, H), const2),                     # x (PE applied)
                pl.BlockSpec((Ne, H), const2),                    # enc_output (bf16)
                pl.BlockSpec((1, 3, H), per_layer3),              # ln gammas
                pl.BlockSpec((1, 3, H), per_layer3),              # ln betas
                pl.BlockSpec((1, 3 * heads, H, dk), per_layer4),  # attn1 Wqkv
                pl.BlockSpec((1, 3 * heads, 1, dk), per_layer4),  # attn1 b_qkv
                pl.BlockSpec((1, heads, dk, H), per_layer4),      # attn1 Wo
                pl.BlockSpec((1, 1, H), per_layer3),              # attn1 bo
                pl.BlockSpec((1, 3 * heads, H, dk), per_layer4),  # attn2 Wqkv
                pl.BlockSpec((1, 3 * heads, 1, dk), per_layer4),  # attn2 b_qkv
                pl.BlockSpec((1, heads, dk, H), per_layer4),      # attn2 Wo
                pl.BlockSpec((1, 1, H), per_layer3),              # attn2 bo
                pl.BlockSpec((1, H, d_ff), per_layer3),           # ff W1
                pl.BlockSpec((1, 1, d_ff), per_layer3),           # ff b1
                pl.BlockSpec((1, d_ff, H), per_layer3),           # ff W2
                pl.BlockSpec((1, 1, H), per_layer3),              # ff b2
                pl.BlockSpec((1, H), const2),                     # final ln gamma
                pl.BlockSpec((1, H), const2),                     # final ln beta
            ],
            out_specs=pl.BlockSpec((N, H), const2),
            scratch_shapes=[pltpu.VMEM((N, H), jnp.float32)],
        ),
        compiler_params=pltpu.CompilerParams(
            dimension_semantics=("arbitrary",),       # layers carry state
            vmem_limit_bytes=32 * 1024 * 1024,
        ),
    )(
        x2, enc2,
        params["lng"], params["lnb"],
        params["wqkv1"], params["bqkv1"], params["wo1"], params["bo1"],
        params["wqkv2"], params["bqkv2"], params["wo2"], params["bo2"],
        params["wff1"], params["bff1"], params["wff2"], params["bff2"],
        params["lnfg"], params["lnfb"],
    )
    return out2.reshape(B, S, H)


# ------------------------------- param init -------------------------------------


def make_pe_table(max_seq_len, h):
    # Matches the PyTorch loop exactly:
    #   even j: sin(pos / 10000**(2*j/h)),  odd j: cos(pos / 10000**(2*j/h))
    pos = jnp.arange(max_seq_len, dtype=jnp.float32)[:, None]
    j = jnp.arange(h, dtype=jnp.float32)[None, :]
    angle = pos / jnp.power(10000.0, 2.0 * j / h)
    even = (jnp.arange(h)[None, :] % 2) == 0
    return jnp.where(even, jnp.sin(angle), jnp.cos(angle)).astype(jnp.float32)


def init_linear(key, din, dout):
    k1, k2 = jax.random.split(key)
    bound = 1.0 / math.sqrt(din)
    w = jax.random.uniform(k1, (din, dout), jnp.float32, -bound, bound)
    b = jax.random.uniform(k2, (dout,), jnp.float32, -bound, bound)
    return w, b


def init_natural_params(key, hidden_size, heads, d_ff=2048, max_seq_len=1500):
    """Unpacked ("PyTorch-shaped") parameters, x @ W + b convention."""
    h = hidden_size
    ks = jax.random.split(key, 4)

    def attn_params(k):
        ka = jax.random.split(k, 4)
        wq, bq = init_linear(ka[0], h, h)
        wk, bk = init_linear(ka[1], h, h)
        wv, bv = init_linear(ka[2], h, h)
        wo, bo = init_linear(ka[3], h, h)
        return dict(wq=wq, bq=bq, wk=wk, bk=bk, wv=wv, bv=bv, wo=wo, bo=bo)

    w1, b1 = init_linear(ks[2], h, d_ff)
    w2, b2 = init_linear(ks[3], d_ff, h)
    return {
        "pe": make_pe_table(max_seq_len, h),
        "ln_g": jnp.ones((3, h), jnp.float32),
        "ln_b": jnp.zeros((3, h), jnp.float32),
        "attn1": attn_params(ks[0]),
        "attn2": attn_params(ks[1]),
        "ff_w1": w1, "ff_b1": b1, "ff_w2": w2, "ff_b2": b2,
        "lnf_g": jnp.ones((h,), jnp.float32),
        "lnf_b": jnp.zeros((h,), jnp.float32),
    }


def pack_decoder_params(nat, num_layer, heads):
    """Head-major, bf16, per-layer-stacked packing for the fused kernel."""
    H = nat["ln_g"].shape[-1]
    dk = H // heads
    bf16, f32 = jnp.bfloat16, jnp.float32
    scale = 1.0 / math.sqrt(dk)            # folded into Wq / bq

    def split_w(w):                         # (H, H) -> (heads, H, dk)
        return jnp.transpose(w.reshape(H, heads, dk), (1, 0, 2))

    def split_b(b):                         # (H,) -> (heads, 1, dk)
        return b.reshape(heads, 1, dk)

    def pack_attn(p):
        wqkv = jnp.concatenate(
            [split_w(p["wq"] * scale), split_w(p["wk"]), split_w(p["wv"])], axis=0)
        bqkv = jnp.concatenate(
            [split_b(p["bq"] * scale), split_b(p["bk"]), split_b(p["bv"])], axis=0)
        wo = p["wo"].reshape(heads, dk, H)  # concat(o_h)@Wo == sum_h o_h@Wo[h]
        return (wqkv.astype(bf16), bqkv.astype(f32),
                wo.astype(bf16), p["bo"][None, :].astype(f32))

    wqkv1, bqkv1, wo1, bo1 = pack_attn(nat["attn1"])
    wqkv2, bqkv2, wo2, bo2 = pack_attn(nat["attn2"])

    # get_clones deepcopies the SAME layer N times -> identical initial weights.
    stack = lambda a: jnp.stack([a] * num_layer, axis=0)

    return {
        "pe": nat["pe"],
        "lng": stack(nat["ln_g"]), "lnb": stack(nat["ln_b"]),
        "wqkv1": stack(wqkv1), "bqkv1": stack(bqkv1),
        "wo1": stack(wo1), "bo1": stack(bo1),
        "wqkv2": stack(wqkv2), "bqkv2": stack(bqkv2),
        "wo2": stack(wo2), "bo2": stack(bo2),
        "wff1": stack(nat["ff_w1"].astype(bf16)),
        "bff1": stack(nat["ff_b1"][None, :].astype(f32)),
        "wff2": stack(nat["ff_w2"].astype(bf16)),
        "bff2": stack(nat["ff_b2"][None, :].astype(f32)),
        "lnfg": nat["lnf_g"][None, :], "lnfb": nat["lnf_b"][None, :],
    }


# --------------------------- pure-JAX reference ----------------------------------


def _reference_forward(nat, x, enc, heads, num_layer):
    """Unpacked, PyTorch-structured forward with the same bf16/f32 mixed
    precision as the kernel (bf16 weights, f32 accumulation / LN / softmax)."""
    B, S, H = x.shape
    dk = H // heads
    bf16, f32 = jnp.bfloat16, jnp.float32

    def mm(a, w):
        return jnp.dot(a.astype(bf16), w.astype(bf16), preferred_element_type=f32)

    def ln(t, g, b):
        mu = jnp.mean(t, -1, keepdims=True)
        var = jnp.mean((t - mu) ** 2, -1, keepdims=True)
        return (t - mu) / jnp.sqrt(var + 1e-5) * g + b

    def mha(p, q_in, kv_in):
        sq, sk = q_in.shape[1], kv_in.shape[1]
        q = mm(q_in, p["wq"]) + p["bq"]
        k = mm(kv_in, p["wk"]) + p["bk"]
        v = mm(kv_in, p["wv"]) + p["bv"]
        qh = q.reshape(B, sq, heads, dk).transpose(0, 2, 1, 3)
        kh = k.reshape(B, sk, heads, dk).transpose(0, 2, 1, 3)
        vh = v.reshape(B, sk, heads, dk).transpose(0, 2, 1, 3)
        s = jnp.einsum("bhqd,bhkd->bhqk", qh, kh) / math.sqrt(dk)
        pr = jax.nn.softmax(s, axis=-1)
        o = jnp.einsum("bhqk,bhkd->bhqd", pr, vh)
        concat = o.transpose(0, 2, 1, 3).reshape(B, sq, H)
        wo = p["wo"].astype(bf16).astype(f32)    # same rounded weights as kernel
        return concat @ wo + p["bo"]

    x = x * math.sqrt(H) + nat["pe"][:S][None]
    for _ in range(num_layer):
        t = ln(x, nat["ln_g"][0], nat["ln_b"][0])
        x = x + mha(nat["attn1"], t, t)
        t = ln(x, nat["ln_g"][1], nat["ln_b"][1])
        x = x + mha(nat["attn2"], t, enc)
        t = ln(x, nat["ln_g"][2], nat["ln_b"][2])
        h1 = jax.nn.relu(mm(t, nat["ff_w1"]) + nat["ff_b1"])
        x = x + mm(h1, nat["ff_w2"]) + nat["ff_b2"]
    return ln(x, nat["lnf_g"], nat["lnf_b"])


# ---------------------------------- main -------------------------------------------


if __name__ == "__main__":
    B, S, S_ENC, H, HEADS, NUM_LAYER = 2, 8, 8, 32, 4, 2

    key = jax.random.PRNGKey(0)
    k_params, k_x, k_enc = jax.random.split(key, 3)

    nat = init_natural_params(k_params, H, HEADS)
    params = pack_decoder_params(nat, NUM_LAYER, HEADS)
    x = jax.random.normal(k_x, (B, S, H), jnp.float32)
    enc_output = jax.random.normal(k_enc, (B, S_ENC, H), jnp.float32)

    out = jax.block_until_ready(decoder_forward(params, x, enc_output, HEADS))
    assert out.shape == (B, S, H) and out.dtype == jnp.float32
    assert bool(jnp.all(jnp.isfinite(out)))

    # sanity check against a pure-JAX reference using the same mixed precision
    ref = jax.block_until_ready(
        _reference_forward(nat, x, enc_output, HEADS, NUM_LAYER))
    max_err = float(jnp.max(jnp.abs(out - ref)))
    assert bool(jnp.allclose(out, ref, rtol=5e-2, atol=5e-2)), max_err

    print("KERNEL_OK")
</pallas_src>

<mosaic_0001>
module attributes {stable_mosaic.version = 11 : i64} {
  func.func @_decoder_kernel(%arg0: i32, %arg1: memref<16x32xf32, #tpu.memory_space<vmem>>, %arg2: memref<16x32xbf16, #tpu.memory_space<vmem>>, %arg3: memref<1x3x32xf32, #tpu.memory_space<vmem>>, %arg4: memref<1x3x32xf32, #tpu.memory_space<vmem>>, %arg5: memref<1x12x32x8xbf16, #tpu.memory_space<vmem>>, %arg6: memref<1x12x1x8xf32, #tpu.memory_space<vmem>>, %arg7: memref<1x4x8x32xbf16, #tpu.memory_space<vmem>>, %arg8: memref<1x1x32xf32, #tpu.memory_space<vmem>>, %arg9: memref<1x12x32x8xbf16, #tpu.memory_space<vmem>>, %arg10: memref<1x12x1x8xf32, #tpu.memory_space<vmem>>, %arg11: memref<1x4x8x32xbf16, #tpu.memory_space<vmem>>, %arg12: memref<1x1x32xf32, #tpu.memory_space<vmem>>, %arg13: memref<1x32x2048xbf16, #tpu.memory_space<vmem>>, %arg14: memref<1x1x2048xf32, #tpu.memory_space<vmem>>, %arg15: memref<1x2048x32xbf16, #tpu.memory_space<vmem>>, %arg16: memref<1x1x32xf32, #tpu.memory_space<vmem>>, %arg17: memref<1x32xf32, #tpu.memory_space<vmem>>, %arg18: memref<1x32xf32, #tpu.memory_space<vmem>>, %arg19: memref<16x32xf32, #tpu.memory_space<vmem>>, %arg20: memref<16x32xf32, #tpu.memory_space<vmem>>) attributes {dimension_semantics = [#tpu.dimension_semantics<arbitrary>], iteration_bounds = array<i64: 2>, scalar_prefetch = 0 : i64, scratch_operands = 1 : i64, tpu.core_type = #tpu.core_type<tc>, window_params = [{pipeline_mode = #tpu.pipeline_mode<synchronous>, transform_indices = @transform_0, window_bounds = array<i64: 16, 32>}, {pipeline_mode = #tpu.pipeline_mode<synchronous>, transform_indices = @transform_1, window_bounds = array<i64: 16, 32>}, {transform_indices = @transform_2, window_bounds = array<i64: 1, 3, 32>}, {transform_indices = @transform_3, window_bounds = array<i64: 1, 3, 32>}, {transform_indices = @transform_4, window_bounds = array<i64: 1, 12, 32, 8>}, {transform_indices = @transform_5, window_bounds = array<i64: 1, 12, 1, 8>}, {transform_indices = @transform_6, window_bounds = array<i64: 1, 4, 8, 32>}, {transform_indices = @transform_7, window_bounds = array<i64: 1, 1, 32>}, {transform_indices = @transform_8, window_bounds = array<i64: 1, 12, 32, 8>}, {transform_indices = @transform_9, window_bounds = array<i64: 1, 12, 1, 8>}, {transform_indices = @transform_10, window_bounds = array<i64: 1, 4, 8, 32>}, {transform_indices = @transform_11, window_bounds = array<i64: 1, 1, 32>}, {transform_indices = @transform_12, window_bounds = array<i64: 1, 32, 2048>}, {transform_indices = @transform_13, window_bounds = array<i64: 1, 1, 2048>}, {transform_indices = @transform_14, window_bounds = array<i64: 1, 2048, 32>}, {transform_indices = @transform_15, window_bounds = array<i64: 1, 1, 32>}, {pipeline_mode = #tpu.pipeline_mode<synchronous>, transform_indices = @transform_16, window_bounds = array<i64: 1, 32>}, {pipeline_mode = #tpu.pipeline_mode<synchronous>, transform_indices = @transform_17, window_bounds = array<i64: 1, 32>}, {pipeline_mode = #tpu.pipeline_mode<synchronous>, transform_indices = @transform_18, window_bounds = array<i64: 16, 32>}]} {
    %c0_i32 = arith.constant 0 : i32
    %0 = arith.cmpi eq, %arg0, %c0_i32 : i32
    %1 = arith.extui %0 : i1 to i32
    %c0_i32_0 = arith.constant 0 : i32
    %2 = arith.cmpi ne, %1, %c0_i32_0 : i32
    scf.if %2 {
      %c0_327 = arith.constant 0 : index
      %c0_328 = arith.constant 0 : index
      %454 = vector.load %arg1[%c0_327, %c0_328] : memref<16x32xf32, #tpu.memory_space<vmem>>, vector<16x32xf32>
      %c0_329 = arith.constant 0 : index
      %c0_330 = arith.constant 0 : index
      %455 = vector.load %arg20[%c0_329, %c0_330] : memref<16x32xf32, #tpu.memory_space<vmem>>, vector<16x32xf32>
      tpu.vector_store %arg20[%c0_329, %c0_330], %454 {strides = array<i32>} : memref<16x32xf32, #tpu.memory_space<vmem>>, vector<16x32xf32>,
    } else {
    }
    %c0 = arith.constant 0 : index
    %c0_1 = arith.constant 0 : index
    %3 = vector.load %arg20[%c0, %c0_1] : memref<16x32xf32, #tpu.memory_space<vmem>>, vector<16x32xf32>
    %c0_2 = arith.constant 0 : index
    %c0_3 = arith.constant 0 : index
    %c0_4 = arith.constant 0 : index
    %4 = vector.load %arg3[%c0_2, %c0_3, %c0_4] : memref<1x3x32xf32, #tpu.memory_space<vmem>>, vector<1x3x32xf32>
    %5 = vector.shape_cast %4 : vector<1x3x32xf32> to vector<3x32xf32>
    %c0_5 = arith.constant 0 : index
    %c0_6 = arith.constant 0 : index
    %c0_7 = arith.constant 0 : index
    %6 = vector.load %arg4[%c0_5, %c0_6, %c0_7] : memref<1x3x32xf32, #tpu.memory_space<vmem>>, vector<1x3x32xf32>
    %7 = vector.shape_cast %6 : vector<1x3x32xf32> to vector<3x32xf32>
    %8 = vector.extract_strided_slice %5 {offsets = [0, 0], sizes = [1, 32], strides = [1, 1]} : vector<3x32xf32> to vector<1x32xf32>
    %9 = vector.extract_strided_slice %7 {offsets = [0, 0], sizes = [1, 32], strides = [1, 1]} : vector<3x32xf32> to vector<1x32xf32>
    %cst = arith.constant dense<0.000000e+00> : vector<16xf32>
    %10 = vector.multi_reduction <add>, %3, %cst [1] : vector<16x32xf32> to vector<16xf32>
    %11 = vector.shape_cast %10 : vector<16xf32> to vector<16x1xf32>
    %cst_8 = arith.constant 3.200000e+01 : f32
    %12 = vector.broadcast %cst_8 : f32 to vector<16x1xf32>
    %13 = arith.divf %11, %12 : vector<16x1xf32>
    %14 = vector.broadcast %13 : vector<16x1xf32> to vector<16x32xf32>
    %15 = arith.subf %3, %14 : vector<16x32xf32>
    %16 = arith.mulf %15, %15 : vector<16x32xf32>
    %cst_9 = arith.constant dense<0.000000e+00> : vector<16xf32>
    %17 = vector.multi_reduction <add>, %16, %cst_9 [1] : vector<16x32xf32> to vector<16xf32>
    %18 = vector.shape_cast %17 : vector<16xf32> to vector<16x1xf32>
    %cst_10 = arith.constant 3.200000e+01 : f32
    %19 = vector.broadcast %cst_10 : f32 to vector<16x1xf32>
    %20 = arith.divf %18, %19 : vector<16x1xf32>
    %21 = vector.broadcast %13 : vector<16x1xf32> to vector<16x32xf32>
    %22 = arith.subf %3, %21 : vector<16x32xf32>
    %cst_11 = arith.constant 9.99999974E-6 : f32
    %23 = vector.broadcast %cst_11 : f32 to vector<16x1xf32>
    %24 = arith.addf %20, %23 : vector<16x1xf32>
    %25 = math.rsqrt %24 : vector<16x1xf32>
    %26 = vector.broadcast %25 : vector<16x1xf32> to vector<16x32xf32>
    %27 = arith.mulf %22, %26 : vector<16x32xf32>
    %28 = vector.broadcast %8 : vector<1x32xf32> to vector<16x32xf32>
    %29 = arith.mulf %27, %28 : vector<16x32xf32>
    %30 = vector.broadcast %9 : vector<1x32xf32> to vector<16x32xf32>
    %31 = arith.addf %29, %30 : vector<16x32xf32>
    %32 = arith.truncf %31 : vector<16x32xf32> to vector<16x32xbf16>
    %cst_12 = arith.constant 0.000000e+00 : f32
    %33 = vector.broadcast %cst_12 : f32 to vector<16x32xf32>
    %c0_13 = arith.constant 0 : index
    %c0_14 = arith.constant 0 : index
    %c0_15 = arith.constant 0 : index
    %c0_16 = arith.constant 0 : index
    %34 = vector.load %arg5[%c0_13, %c0_14, %c0_15, %c0_16] : memref<1x12x32x8xbf16, #tpu.memory_space<vmem>>, vector<1x1x32x8xbf16>
    %35 = vector.shape_cast %34 : vector<1x1x32x8xbf16> to vector<32x8xbf16>
    %cst_17 = arith.constant dense<0.000000e+00> : vector<16x8xf32>
    %36 = tpu.matmul %32, %35, %cst_17 {dimension_numbers = #tpu.dot_dimension_numbers<[1], [0], [0], [1], [0, 0, 1, 1], [], []>} : vector<16x32xbf16>, vector<32x8xbf16>, vector<16x8xf32> -> vector<16x8xf32>
    %c0_18 = arith.constant 0 : index
    %c0_19 = arith.constant 0 : index
    %c0_20 = arith.constant 0 : index
    %c0_21 = arith.constant 0 : index
    %37 = vector.load %arg6[%c0_18, %c0_19, %c0_20, %c0_21] : memref<1x12x1x8xf32, #tpu.memory_space<vmem>>, vector<1x1x1x8xf32>
    %38 = vector.shape_cast %37 : vector<1x1x1x8xf32> to vector<1x8xf32>
    %39 = vector.broadcast %38 : vector<1x8xf32> to vector<16x8xf32>
    %40 = arith.addf %36, %39 : vector<16x8xf32>
    %c0_22 = arith.constant 0 : index
    %c4 = arith.constant 4 : index
    %c0_23 = arith.constant 0 : index
    %c0_24 = arith.constant 0 : index
    %41 = vector.load %arg5[%c0_22, %c4, %c0_23, %c0_24] : memref<1x12x32x8xbf16, #tpu.memory_space<vmem>>, vector<1x1x32x8xbf16>
    %42 = vector.shape_cast %41 : vector<1x1x32x8xbf16> to vector<32x8xbf16>
    %cst_25 = arith.constant dense<0.000000e+00> : vector<16x8xf32>
    %43 = tpu.matmul %32, %42, %cst_25 {dimension_numbers = #tpu.dot_dimension_numbers<[1], [0], [0], [1], [0, 0, 1, 1], [], []>} : vector<16x32xbf16>, vector<32x8xbf16>, vector<16x8xf32> -> vector<16x8xf32>
    %c0_26 = arith.constant 0 : index
    %c4_27 = arith.constant 4 : index
    %c0_28 = arith.constant 0 : index
    %c0_29 = arith.constant 0 : index
    %44 = vector.load %arg6[%c0_26, %c4_27, %c0_28, %c0_29] : memref<1x12x1x8xf32, #tpu.memory_space<vmem>>, vector<1x1x1x8xf32>
    %45 = vector.shape_cast %44 : vector<1x1x1x8xf32> to vector<1x8xf32>
    %46 = vector.broadcast %45 : vector<1x8xf32> to vector<16x8xf32>
    %47 = arith.addf %43, %46 : vector<16x8xf32>
    %c0_30 = arith.constant 0 : index
    %c8 = arith.constant 8 : index
    %c0_31 = arith.constant 0 : index
    %c0_32 = arith.constant 0 : index
    %48 = vector.load %arg5[%c0_30, %c8, %c0_31, %c0_32] : memref<1x12x32x8xbf16, #tpu.memory_space<vmem>>, vector<1x1x32x8xbf16>
    %49 = vector.shape_cast %48 : vector<1x1x32x8xbf16> to vector<32x8xbf16>
    %cst_33 = arith.constant dense<0.000000e+00> : vector<16x8xf32>
    %50 = tpu.matmul %32, %49, %cst_33 {dimension_numbers = #tpu.dot_dimension_numbers<[1], [0], [0], [1], [0, 0, 1, 1], [], []>} : vector<16x32xbf16>, vector<32x8xbf16>, vector<16x8xf32> -> vector<16x8xf32>
    %c0_34 = arith.constant 0 : index
    %c8_35 = arith.constant 8 : index
    %c0_36 = arith.constant 0 : index
    %c0_37 = arith.constant 0 : index
    %51 = vector.load %arg6[%c0_34, %c8_35, %c0_36, %c0_37] : memref<1x12x1x8xf32, #tpu.memory_space<vmem>>, vector<1x1x1x8xf32>
    %52 = vector.shape_cast %51 : vector<1x1x1x8xf32> to vector<1x8xf32>
    %53 = vector.broadcast %52 : vector<1x8xf32> to vector<16x8xf32>
    %54 = arith.addf %50, %53 : vector<16x8xf32>
    %55 = vector.shape_cast %40 : vector<16x8xf32> to vector<2x8x8xf32>
    %56 = vector.shape_cast %47 : vector<16x8xf32> to vector<2x8x8xf32>
    %57 = vector.shape_cast %54 : vector<16x8xf32> to vector<2x8x8xf32>
    "tpu.trace_start"() <{level = 10 : i32, message = "bqd,bkd->bqk"}> : () -> ()
    %cst_38 = arith.constant dense<0.000000e+00> : vector<2x8x8xf32>
    %58 = tpu.matmul %55, %56, %cst_38 {dimension_numbers = #tpu.dot_dimension_numbers<[2], [2], [1], [1], [0, 0, 0, 1, 1, 1], [0], [0]>} : vector<2x8x8xf32>, vector<2x8x8xf32>, vector<2x8x8xf32> -> vector<2x8x8xf32>
    "tpu.trace_stop"() : () -> ()
    %cst_39 = arith.constant dense<0xFF800000> : vector<2x8xf32>
    %59 = vector.multi_reduction <maximumf>, %58, %cst_39 [2] : vector<2x8x8xf32> to vector<2x8xf32>
    %60 = vector.shape_cast %59 : vector<2x8xf32> to vector<2x8x1xf32>
    %61 = vector.broadcast %60 : vector<2x8x1xf32> to vector<2x8x8xf32>
    %62 = arith.subf %58, %61 : vector<2x8x8xf32>
    %63 = math.exp %62 : vector<2x8x8xf32>
    %cst_40 = arith.constant dense<0.000000e+00> : vector<2x8xf32>
    %64 = vector.multi_reduction <add>, %63, %cst_40 [2] : vector<2x8x8xf32> to vector<2x8xf32>
    %65 = vector.shape_cast %64 : vector<2x8xf32> to vector<2x8x1xf32>
    %66 = tpu.reciprocal %65 {approx = true} : vector<2x8x1xf32> -> vector<2x8x1xf32>
    %67 = vector.broadcast %66 : vector<2x8x1xf32> to vector<2x8x8xf32>
    %68 = arith.mulf %63, %67 : vector<2x8x8xf32>
    "tpu.trace_start"() <{level = 10 : i32, message = "bqk,bkd->bqd"}> : () -> ()
    %cst_41 = arith.constant dense<0.000000e+00> : vector<2x8x8xf32>
    %69 = tpu.matmul %68, %57, %cst_41 {dimension_numbers = #tpu.dot_dimension_numbers<[2], [1], [1], [2], [0, 0, 0, 1, 1, 2], [0], [0]>} : vector<2x8x8xf32>, vector<2x8x8xf32>, vector<2x8x8xf32> -> vector<2x8x8xf32>
    "tpu.trace_stop"() : () -> ()
    %70 = vector.shape_cast %69 : vector<2x8x8xf32> to vector<16x8xf32>
    %c0_42 = arith.constant 0 : index
    %c0_43 = arith.constant 0 : index
    %c0_44 = arith.constant 0 : index
    %c0_45 = arith.constant 0 : index
    %71 = vector.load %arg7[%c0_42, %c0_43, %c0_44, %c0_45] : memref<1x4x8x32xbf16, #tpu.memory_space<vmem>>, vector<1x1x8x32xbf16>
    %72 = vector.shape_cast %71 : vector<1x1x8x32xbf16> to vector<8x32xbf16>
    %73 = arith.extf %72 : vector<8x32xbf16> to vector<8x32xf32>
    %cst_46 = arith.constant dense<0.000000e+00> : vector<16x32xf32>
    %74 = tpu.matmul %70, %73, %cst_46 {dimension_numbers = #tpu.dot_dimension_numbers<[1], [0], [0], [1], [0, 0, 1, 1], [], []>} : vector<16x8xf32>, vector<8x32xf32>, vector<16x32xf32> -> vector<16x32xf32>
    %75 = arith.addf %33, %74 : vector<16x32xf32>
    %c0_47 = arith.constant 0 : index
    %c1 = arith.constant 1 : index
    %c0_48 = arith.constant 0 : index
    %c0_49 = arith.constant 0 : index
    %76 = vector.load %arg5[%c0_47, %c1, %c0_48, %c0_49] : memref<1x12x32x8xbf16, #tpu.memory_space<vmem>>, vector<1x1x32x8xbf16>
    %77 = vector.shape_cast %76 : vector<1x1x32x8xbf16> to vector<32x8xbf16>
    %cst_50 = arith.constant dense<0.000000e+00> : vector<16x8xf32>
    %78 = tpu.matmul %32, %77, %cst_50 {dimension_numbers = #tpu.dot_dimension_numbers<[1], [0], [0], [1], [0, 0, 1, 1], [], []>} : vector<16x32xbf16>, vector<32x8xbf16>, vector<16x8xf32> -> vector<16x8xf32>
    %c0_51 = arith.constant 0 : index
    %c1_52 = arith.constant 1 : index
    %c0_53 = arith.constant 0 : index
    %c0_54 = arith.constant 0 : index
    %79 = vector.load %arg6[%c0_51, %c1_52, %c0_53, %c0_54] : memref<1x12x1x8xf32, #tpu.memory_space<vmem>>, vector<1x1x1x8xf32>
    %80 = vector.shape_cast %79 : vector<1x1x1x8xf32> to vector<1x8xf32>
    %81 = vector.broadcast %80 : vector<1x8xf32> to vector<16x8xf32>
    %82 = arith.addf %78, %81 : vector<16x8xf32>
    %c0_55 = arith.constant 0 : index
    %c5 = arith.constant 5 : index
    %c0_56 = arith.constant 0 : index
    %c0_57 = arith.constant 0 : index
    %83 = vector.load %arg5[%c0_55, %c5, %c0_56, %c0_57] : memref<1x12x32x8xbf16, #tpu.memory_space<vmem>>, vector<1x1x32x8xbf16>
    %84 = vector.shape_cast %83 : vector<1x1x32x8xbf16> to vector<32x8xbf16>
    %cst_58 = arith.constant dense<0.000000e+00> : vector<16x8xf32>
    %85 = tpu.matmul %32, %84, %cst_58 {dimension_numbers = #tpu.dot_dimension_numbers<[1], [0], [0], [1], [0, 0, 1, 1], [], []>} : vector<16x32xbf16>, vector<32x8xbf16>, vector<16x8xf32> -> vector<16x8xf32>
    %c0_59 = arith.constant 0 : index
    %c5_60 = arith.constant 5 : index
    %c0_61 = arith.constant 0 : index
    %c0_62 = arith.constant 0 : index
    %86 = vector.load %arg6[%c0_59, %c5_60, %c0_61, %c0_62] : memref<1x12x1x8xf32, #tpu.memory_space<vmem>>, vector<1x1x1x8xf32>
    %87 = vector.shape_cast %86 : vector<1x1x1x8xf32> to vector<1x8xf32>
    %88 = vector.broadcast %87 : vector<1x8xf32> to vector<16x8xf32>
    %89 = arith.addf %85, %88 : vector<16x8xf32>
    %c0_63 = arith.constant 0 : index
    %c9 = arith.constant 9 : index
    %c0_64 = arith.constant 0 : index
    %c0_65 = arith.constant 0 : index
    %90 = vector.load %arg5[%c0_63, %c9, %c0_64, %c0_65] : memref<1x12x32x8xbf16, #tpu.memory_space<vmem>>, vector<1x1x32x8xbf16>
    %91 = vector.shape_cast %90 : vector<1x1x32x8xbf16> to vector<32x8xbf16>
    %cst_66 = arith.constant dense<0.000000e+00> : vector<16x8xf32>
    %92 = tpu.matmul %32, %91, %cst_66 {dimension_numbers = #tpu.dot_dimension_numbers<[1], [0], [0], [1], [0, 0, 1, 1], [], []>} : vector<16x32xbf16>, vector<32x8xbf16>, vector<16x8xf32> -> vector<16x8xf32>
    %c0_67 = arith.constant 0 : index
    %c9_68 = arith.constant 9 : index
    %c0_69 = arith.constant 0 : index
    %c0_70 = arith.constant 0 : index
    %93 = vector.load %arg6[%c0_67, %c9_68, %c0_69, %c0_70] : memref<1x12x1x8xf32, #tpu.memory_space<vmem>>, vector<1x1x1x8xf32>
    %94 = vector.shape_cast %93 : vector<1x1x1x8xf32> to vector<1x8xf32>
    %95 = vector.broadcast %94 : vector<1x8xf32> to vector<16x8xf32>
    %96 = arith.addf %92, %95 : vector<16x8xf32>
    %97 = vector.shape_cast %82 : vector<16x8xf32> to vector<2x8x8xf32>
    %98 = vector.shape_cast %89 : vector<16x8xf32> to vector<2x8x8xf32>
    %99 = vector.shape_cast %96 : vector<16x8xf32> to vector<2x8x8xf32>
    "tpu.trace_start"() <{level = 10 : i32, message = "bqd,bkd->bqk"}> : () -> ()
    %cst_71 = arith.constant dense<0.000000e+00> : vector<2x8x8xf32>
    %100 = tpu.matmul %97, %98, %cst_71 {dimension_numbers = #tpu.dot_dimension_numbers<[2], [2], [1], [1], [0, 0, 0, 1, 1, 1], [0], [0]>} : vector<2x8x8xf32>, vector<2x8x8xf32>, vector<2x8x8xf32> -> vector<2x8x8xf32>
    "tpu.trace_stop"() : () -> ()
    %cst_72 = arith.constant dense<0xFF800000> : vector<2x8xf32>
    %101 = vector.multi_reduction <maximumf>, %100, %cst_72 [2] : vector<2x8x8xf32> to vector<2x8xf32>
    %102 = vector.shape_cast %101 : vector<2x8xf32> to vector<2x8x1xf32>
    %103 = vector.broadcast %102 : vector<2x8x1xf32> to vector<2x8x8xf32>
    %104 = arith.subf %100, %103 : vector<2x8x8xf32>
    %105 = math.exp %104 : vector<2x8x8xf32>
    %cst_73 = arith.constant dense<0.000000e+00> : vector<2x8xf32>
    %106 = vector.multi_reduction <add>, %105, %cst_73 [2] : vector<2x8x8xf32> to vector<2x8xf32>
    %107 = vector.shape_cast %106 : vector<2x8xf32> to vector<2x8x1xf32>
    %108 = tpu.reciprocal %107 {approx = true} : vector<2x8x1xf32> -> vector<2x8x1xf32>
    %109 = vector.broadcast %108 : vector<2x8x1xf32> to vector<2x8x8xf32>
    %110 = arith.mulf %105, %109 : vector<2x8x8xf32>
    "tpu.trace_start"() <{level = 10 : i32, message = "bqk,bkd->bqd"}> : () -> ()
    %cst_74 = arith.constant dense<0.000000e+00> : vector<2x8x8xf32>
    %111 = tpu.matmul %110, %99, %cst_74 {dimension_numbers = #tpu.dot_dimension_numbers<[2], [1], [1], [2], [0, 0, 0, 1, 1, 2], [0], [0]>} : vector<2x8x8xf32>, vector<2x8x8xf32>, vector<2x8x8xf32> -> vector<2x8x8xf32>
    "tpu.trace_stop"() : () -> ()
    %112 = vector.shape_cast %111 : vector<2x8x8xf32> to vector<16x8xf32>
    %c0_75 = arith.constant 0 : index
    %c1_76 = arith.constant 1 : index
    %c0_77 = arith.constant 0 : index
    %c0_78 = arith.constant 0 : index
    %113 = vector.load %arg7[%c0_75, %c1_76, %c0_77, %c0_78] : memref<1x4x8x32xbf16, #tpu.memory_space<vmem>>, vector<1x1x8x32xbf16>
    %114 = vector.shape_cast %113 : vector<1x1x8x32xbf16> to vector<8x32xbf16>
    %115 = arith.extf %114 : vector<8x32xbf16> to vector<8x32xf32>
    %cst_79 = arith.constant dense<0.000000e+00> : vector<16x32xf32>
    %116 = tpu.matmul %112, %115, %cst_79 {dimension_numbers = #tpu.dot_dimension_numbers<[1], [0], [0], [1], [0, 0, 1, 1], [], []>} : vector<16x8xf32>, vector<8x32xf32>, vector<16x32xf32> -> vector<16x32xf32>
    %117 = arith.addf %75, %116 : vector<16x32xf32>
    %c0_80 = arith.constant 0 : index
    %c2 = arith.constant 2 : index
    %c0_81 = arith.constant 0 : index
    %c0_82 = arith.constant 0 : index
    %118 = vector.load %arg5[%c0_80, %c2, %c0_81, %c0_82] : memref<1x12x32x8xbf16, #tpu.memory_space<vmem>>, vector<1x1x32x8xbf16>
    %119 = vector.shape_cast %118 : vector<1x1x32x8xbf16> to vector<32x8xbf16>
    %cst_83 = arith.constant dense<0.000000e+00> : vector<16x8xf32>
    %120 = tpu.matmul %32, %119, %cst_83 {dimension_numbers = #tpu.dot_dimension_numbers<[1], [0], [0], [1], [0, 0, 1, 1], [], []>} : vector<16x32xbf16>, vector<32x8xbf16>, vector<16x8xf32> -> vector<16x8xf32>
    %c0_84 = arith.constant 0 : index
    %c2_85 = arith.constant 2 : index
    %c0_86 = arith.constant 0 : index
    %c0_87 = arith.constant 0 : index
    %121 = vector.load %arg6[%c0_84, %c2_85, %c0_86, %c0_87] : memref<1x12x1x8xf32, #tpu.memory_space<vmem>>, vector<1x1x1x8xf32>
    %122 = vector.shape_cast %121 : vector<1x1x1x8xf32> to vector<1x8xf32>
    %123 = vector.broadcast %122 : vector<1x8xf32> to vector<16x8xf32>
    %124 = arith.addf %120, %123 : vector<16x8xf32>
    %c0_88 = arith.constant 0 : index
    %c6 = arith.constant 6 : index
    %c0_89 = arith.constant 0 : index
    %c0_90 = arith.constant 0 : index
    %125 = vector.load %arg5[%c0_88, %c6, %c0_89, %c0_90] : memref<1x12x32x8xbf16, #tpu.memory_space<vmem>>, vector<1x1x32x8xbf16>
    %126 = vector.shape_cast %125 : vector<1x1x32x8xbf16> to vector<32x8xbf16>
    %cst_91 = arith.constant dense<0.000000e+00> : vector<16x8xf32>
    %127 = tpu.matmul %32, %126, %cst_91 {dimension_numbers = #tpu.dot_dimension_numbers<[1], [0], [0], [1], [0, 0, 1, 1], [], []>} : vector<16x32xbf16>, vector<32x8xbf16>, vector<16x8xf32> -> vector<16x8xf32>
    %c0_92 = arith.constant 0 : index
    %c6_93 = arith.constant 6 : index
    %c0_94 = arith.constant 0 : index
    %c0_95 = arith.constant 0 : index
    %128 = vector.load %arg6[%c0_92, %c6_93, %c0_94, %c0_95] : memref<1x12x1x8xf32, #tpu.memory_space<vmem>>, vector<1x1x1x8xf32>
    %129 = vector.shape_cast %128 : vector<1x1x1x8xf32> to vector<1x8xf32>
    %130 = vector.broadcast %129 : vector<1x8xf32> to vector<16x8xf32>
    %131 = arith.addf %127, %130 : vector<16x8xf32>
    %c0_96 = arith.constant 0 : index
    %c10 = arith.constant 10 : index
    %c0_97 = arith.constant 0 : index
    %c0_98 = arith.constant 0 : index
    %132 = vector.load %arg5[%c0_96, %c10, %c0_97, %c0_98] : memref<1x12x32x8xbf16, #tpu.memory_space<vmem>>, vector<1x1x32x8xbf16>
    %133 = vector.shape_cast %132 : vector<1x1x32x8xbf16> to vector<32x8xbf16>
    %cst_99 = arith.constant dense<0.000000e+00> : vector<16x8xf32>
    %134 = tpu.matmul %32, %133, %cst_99 {dimension_numbers = #tpu.dot_dimension_numbers<[1], [0], [0], [1], [0, 0, 1, 1], [], []>} : vector<16x32xbf16>, vector<32x8xbf16>, vector<16x8xf32> -> vector<16x8xf32>
    %c0_100 = arith.constant 0 : index
    %c10_101 = arith.constant 10 : index
    %c0_102 = arith.constant 0 : index
    %c0_103 = arith.constant 0 : index
    %135 = vector.load %arg6[%c0_100, %c10_101, %c0_102, %c0_103] : memref<1x12x1x8xf32, #tpu.memory_space<vmem>>, vector<1x1x1x8xf32>
    %136 = vector.shape_cast %135 : vector<1x1x1x8xf32> to vector<1x8xf32>
    %137 = vector.broadcast %136 : vector<1x8xf32> to vector<16x8xf32>
    %138 = arith.addf %134, %137 : vector<16x8xf32>
    %139 = vector.shape_cast %124 : vector<16x8xf32> to vector<2x8x8xf32>
    %140 = vector.shape_cast %131 : vector<16x8xf32> to vector<2x8x8xf32>
    %141 = vector.shape_cast %138 : vector<16x8xf32> to vector<2x8x8xf32>
    "tpu.trace_start"() <{level = 10 : i32, message = "bqd,bkd->bqk"}> : () -> ()
    %cst_104 = arith.constant dense<0.000000e+00> : vector<2x8x8xf32>
    %142 = tpu.matmul %139, %140, %cst_104 {dimension_numbers = #tpu.dot_dimension_numbers<[2], [2], [1], [1], [0, 0, 0, 1, 1, 1], [0], [0]>} : vector<2x8x8xf32>, vector<2x8x8xf32>, vector<2x8x8xf32> -> vector<2x8x8xf32>
    "tpu.trace_stop"() : () -> ()
    %cst_105 = arith.constant dense<0xFF800000> : vector<2x8xf32>
    %143 = vector.multi_reduction <maximumf>, %142, %cst_105 [2] : vector<2x8x8xf32> to vector<2x8xf32>
    %144 = vector.shape_cast %143 : vector<2x8xf32> to vector<2x8x1xf32>
    %145 = vector.broadcast %144 : vector<2x8x1xf32> to vector<2x8x8xf32>
    %146 = arith.subf %142, %145 : vector<2x8x8xf32>
    %147 = math.exp %146 : vector<2x8x8xf32>
    %cst_106 = arith.constant dense<0.000000e+00> : vector<2x8xf32>
    %148 = vector.multi_reduction <add>, %147, %cst_106 [2] : vector<2x8x8xf32> to vector<2x8xf32>
    %149 = vector.shape_cast %148 : vector<2x8xf32> to vector<2x8x1xf32>
    %150 = tpu.reciprocal %149 {approx = true} : vector<2x8x1xf32> -> vector<2x8x1xf32>
    %151 = vector.broadcast %150 : vector<2x8x1xf32> to vector<2x8x8xf32>
    %152 = arith.mulf %147, %151 : vector<2x8x8xf32>
    "tpu.trace_start"() <{level = 10 : i32, message = "bqk,bkd->bqd"}> : () -> ()
    %cst_107 = arith.constant dense<0.000000e+00> : vector<2x8x8xf32>
    %153 = tpu.matmul %152, %141, %cst_107 {dimension_numbers = #tpu.dot_dimension_numbers<[2], [1], [1], [2], [0, 0, 0, 1, 1, 2], [0], [0]>} : vector<2x8x8xf32>, vector<2x8x8xf32>, vector<2x8x8xf32> -> vector<2x8x8xf32>
    "tpu.trace_stop"() : () -> ()
    %154 = vector.shape_cast %153 : vector<2x8x8xf32> to vector<16x8xf32>
    %c0_108 = arith.constant 0 : index
    %c2_109 = arith.constant 2 : index
    %c0_110 = arith.constant 0 : index
    %c0_111 = arith.constant 0 : index
    %155 = vector.load %arg7[%c0_108, %c2_109, %c0_110, %c0_111] : memref<1x4x8x32xbf16, #tpu.memory_space<vmem>>, vector<1x1x8x32xbf16>
    %156 = vector.shape_cast %155 : vector<1x1x8x32xbf16> to vector<8x32xbf16>
    %157 = arith.extf %156 : vector<8x32xbf16> to vector<8x32xf32>
    %cst_112 = arith.constant dense<0.000000e+00> : vector<16x32xf32>
    %158 = tpu.matmul %154, %157, %cst_112 {dimension_numbers = #tpu.dot_dimension_numbers<[1], [0], [0], [1], [0, 0, 1, 1], [], []>} : vector<16x8xf32>, vector<8x32xf32>, vector<16x32xf32> -> vector<16x32xf32>
    %159 = arith.addf %117, %158 : vector<16x32xf32>
    %c0_113 = arith.constant 0 : index
    %c3 = arith.constant 3 : index
    %c0_114 = arith.constant 0 : index
    %c0_115 = arith.constant 0 : index
    %160 = vector.load %arg5[%c0_113, %c3, %c0_114, %c0_115] : memref<1x12x32x8xbf16, #tpu.memory_space<vmem>>, vector<1x1x32x8xbf16>
    %161 = vector.shape_cast %160 : vector<1x1x32x8xbf16> to vector<32x8xbf16>
    %cst_116 = arith.constant dense<0.000000e+00> : vector<16x8xf32>
    %162 = tpu.matmul %32, %161, %cst_116 {dimension_numbers = #tpu.dot_dimension_numbers<[1], [0], [0], [1], [0, 0, 1, 1], [], []>} : vector<16x32xbf16>, vector<32x8xbf16>, vector<16x8xf32> -> vector<16x8xf32>
    %c0_117 = arith.constant 0 : index
    %c3_118 = arith.constant 3 : index
    %c0_119 = arith.constant 0 : index
    %c0_120 = arith.constant 0 : index
    %163 = vector.load %arg6[%c0_117, %c3_118, %c0_119, %c0_120] : memref<1x12x1x8xf32, #tpu.memory_space<vmem>>, vector<1x1x1x8xf32>
    %164 = vector.shape_cast %163 : vector<1x1x1x8xf32> to vector<1x8xf32>
    %165 = vector.broadcast %164 : vector<1x8xf32> to vector<16x8xf32>
    %166 = arith.addf %162, %165 : vector<16x8xf32>
    %c0_121 = arith.constant 0 : index
    %c7 = arith.constant 7 : index
    %c0_122 = arith.constant 0 : index
    %c0_123 = arith.constant 0 : index
    %167 = vector.load %arg5[%c0_121, %c7, %c0_122, %c0_123] : memref<1x12x32x8xbf16, #tpu.memory_space<vmem>>, vector<1x1x32x8xbf16>
    %168 = vector.shape_cast %167 : vector<1x1x32x8xbf16> to vector<32x8xbf16>
    %cst_124 = arith.constant dense<0.000000e+00> : vector<16x8xf32>
    %169 = tpu.matmul %32, %168, %cst_124 {dimension_numbers = #tpu.dot_dimension_numbers<[1], [0], [0], [1], [0, 0, 1, 1], [], []>} : vector<16x32xbf16>, vector<32x8xbf16>, vector<16x8xf32> -> vector<16x8xf32>
    %c0_125 = arith.constant 0 : index
    %c7_126 = arith.constant 7 : index
    %c0_127 = arith.constant 0 : index
    %c0_128 = arith.constant 0 : index
    %170 = vector.load %arg6[%c0_125, %c7_126, %c0_127, %c0_128] : memref<1x12x1x8xf32, #tpu.memory_space<vmem>>, vector<1x1x1x8xf32>
    %171 = vector.shape_cast %170 : vector<1x1x1x8xf32> to vector<1x8xf32>
    %172 = vector.broadcast %171 : vector<1x8xf32> to vector<16x8xf32>
    %173 = arith.addf %169, %172 : vector<16x8xf32>
    %c0_129 = arith.constant 0 : index
    %c11 = arith.constant 11 : index
    %c0_130 = arith.constant 0 : index
    %c0_131 = arith.constant 0 : index
    %174 = vector.load %arg5[%c0_129, %c11, %c0_130, %c0_131] : memref<1x12x32x8xbf16, #tpu.memory_space<vmem>>, vector<1x1x32x8xbf16>
    %175 = vector.shape_cast %174 : vector<1x1x32x8xbf16> to vector<32x8xbf16>
    %cst_132 = arith.constant dense<0.000000e+00> : vector<16x8xf32>
    %176 = tpu.matmul %32, %175, %cst_132 {dimension_numbers = #tpu.dot_dimension_numbers<[1], [0], [0], [1], [0, 0, 1, 1], [], []>} : vector<16x32xbf16>, vector<32x8xbf16>, vector<16x8xf32> -> vector<16x8xf32>
    %c0_133 = arith.constant 0 : index
    %c11_134 = arith.constant 11 : index
    %c0_135 = arith.constant 0 : index
    %c0_136 = arith.constant 0 : index
    %177 = vector.load %arg6[%c0_133, %c11_134, %c0_135, %c0_136] : memref<1x12x1x8xf32, #tpu.memory_space<vmem>>, vector<1x1x1x8xf32>
    %178 = vector.shape_cast %177 : vector<1x1x1x8xf32> to vector<1x8xf32>
    %179 = vector.broadcast %178 : vector<1x8xf32> to vector<16x8xf32>
    %180 = arith.addf %176, %179 : vector<16x8xf32>
    %181 = vector.shape_cast %166 : vector<16x8xf32> to vector<2x8x8xf32>
    %182 = vector.shape_cast %173 : vector<16x8xf32> to vector<2x8x8xf32>
    %183 = vector.shape_cast %180 : vector<16x8xf32> to vector<2x8x8xf32>
    "tpu.trace_start"() <{level = 10 : i32, message = "bqd,bkd->bqk"}> : () -> ()
    %cst_137 = arith.constant dense<0.000000e+00> : vector<2x8x8xf32>
    %184 = tpu.matmul %181, %182, %cst_137 {dimension_numbers = #tpu.dot_dimension_numbers<[2], [2], [1], [1], [0, 0, 0, 1, 1, 1], [0], [0]>} : vector<2x8x8xf32>, vector<2x8x8xf32>, vector<2x8x8xf32> -> vector<2x8x8xf32>
    "tpu.trace_stop"() : () -> ()
    %cst_138 = arith.constant dense<0xFF800000> : vector<2x8xf32>
    %185 = vector.multi_reduction <maximumf>, %184, %cst_138 [2] : vector<2x8x8xf32> to vector<2x8xf32>
    %186 = vector.shape_cast %185 : vector<2x8xf32> to vector<2x8x1xf32>
    %187 = vector.broadcast %186 : vector<2x8x1xf32> to vector<2x8x8xf32>
    %188 = arith.subf %184, %187 : vector<2x8x8xf32>
    %189 = math.exp %188 : vector<2x8x8xf32>
    %cst_139 = arith.constant dense<0.000000e+00> : vector<2x8xf32>
    %190 = vector.multi_reduction <add>, %189, %cst_139 [2] : vector<2x8x8xf32> to vector<2x8xf32>
    %191 = vector.shape_cast %190 : vector<2x8xf32> to vector<2x8x1xf32>
    %192 = tpu.reciprocal %191 {approx = true} : vector<2x8x1xf32> -> vector<2x8x1xf32>
    %193 = vector.broadcast %192 : vector<2x8x1xf32> to vector<2x8x8xf32>
    %194 = arith.mulf %189, %193 : vector<2x8x8xf32>
    "tpu.trace_start"() <{level = 10 : i32, message = "bqk,bkd->bqd"}> : () -> ()
    %cst_140 = arith.constant dense<0.000000e+00> : vector<2x8x8xf32>
    %195 = tpu.matmul %194, %183, %cst_140 {dimension_numbers = #tpu.dot_dimension_numbers<[2], [1], [1], [2], [0, 0, 0, 1, 1, 2], [0], [0]>} : vector<2x8x8xf32>, vector<2x8x8xf32>, vector<2x8x8xf32> -> vector<2x8x8xf32>
    "tpu.trace_stop"() : () -> ()
    %196 = vector.shape_cast %195 : vector<2x8x8xf32> to vector<16x8xf32>
    %c0_141 = arith.constant 0 : index
    %c3_142 = arith.constant 3 : index
    %c0_143 = arith.constant 0 : index
    %c0_144 = arith.constant 0 : index
    %197 = vector.load %arg7[%c0_141, %c3_142, %c0_143, %c0_144] : memref<1x4x8x32xbf16, #tpu.memory_space<vmem>>, vector<1x1x8x32xbf16>
    %198 = vector.shape_cast %197 : vector<1x1x8x32xbf16> to vector<8x32xbf16>
    %199 = arith.extf %198 : vector<8x32xbf16> to vector<8x32xf32>
    %cst_145 = arith.constant dense<0.000000e+00> : vector<16x32xf32>
    %200 = tpu.matmul %196, %199, %cst_145 {dimension_numbers = #tpu.dot_dimension_numbers<[1], [0], [0], [1], [0, 0, 1, 1], [], []>} : vector<16x8xf32>, vector<8x32xf32>, vector<16x32xf32> -> vector<16x32xf32>
    %201 = arith.addf %159, %200 : vector<16x32xf32>
    %202 = arith.addf %3, %201 : vector<16x32xf32>
    %c0_146 = arith.constant 0 : index
    %c0_147 = arith.constant 0 : index
    %c0_148 = arith.constant 0 : index
    %203 = vector.load %arg8[%c0_146, %c0_147, %c0_148] : memref<1x1x32xf32, #tpu.memory_space<vmem>>, vector<1x1x32xf32>
    %204 = vector.shape_cast %203 : vector<1x1x32xf32> to vector<1x32xf32>
    %205 = vector.broadcast %204 : vector<1x32xf32> to vector<16x32xf32>
    %206 = arith.addf %202, %205 : vector<16x32xf32>
    %207 = vector.extract_strided_slice %5 {offsets = [1, 0], sizes = [1, 32], strides = [1, 1]} : vector<3x32xf32> to vector<1x32xf32>
    %208 = vector.extract_strided_slice %7 {offsets = [1, 0], sizes = [1, 32], strides = [1, 1]} : vector<3x32xf32> to vector<1x32xf32>
    %cst_149 = arith.constant dense<0.000000e+00> : vector<16xf32>
    %209 = vector.multi_reduction <add>, %206, %cst_149 [1] : vector<16x32xf32> to vector<16xf32>
    %210 = vector.shape_cast %209 : vector<16xf32> to vector<16x1xf32>
    %cst_150 = arith.constant 3.200000e+01 : f32
    %211 = vector.broadcast %cst_150 : f32 to vector<16x1xf32>
    %212 = arith.divf %210, %211 : vector<16x1xf32>
    %213 = vector.broadcast %212 : vector<16x1xf32> to vector<16x32xf32>
    %214 = arith.subf %206, %213 : vector<16x32xf32>
    %215 = arith.mulf %214, %214 : vector<16x32xf32>
    %cst_151 = arith.constant dense<0.000000e+00> : vector<16xf32>
    %216 = vector.multi_reduction <add>, %215, %cst_151 [1] : vector<16x32xf32> to vector<16xf32>
    %217 = vector.shape_cast %216 : vector<16xf32> to vector<16x1xf32>
    %cst_152 = arith.constant 3.200000e+01 : f32
    %218 = vector.broadcast %cst_152 : f32 to vector<16x1xf32>
    %219 = arith.divf %217, %218 : vector<16x1xf32>
    %220 = vector.broadcast %212 : vector<16x1xf32> to vector<16x32xf32>
    %221 = arith.subf %206, %220 : vector<16x32xf32>
    %cst_153 = arith.constant 9.99999974E-6 : f32
    %222 = vector.broadcast %cst_153 : f32 to vector<16x1xf32>
    %223 = arith.addf %219, %222 : vector<16x1xf32>
    %224 = math.rsqrt %223 : vector<16x1xf32>
    %225 = vector.broadcast %224 : vector<16x1xf32> to vector<16x32xf32>
    %226 = arith.mulf %221, %225 : vector<16x32xf32>
    %227 = vector.broadcast %207 : vector<1x32xf32> to vector<16x32xf32>
    %228 = arith.mulf %226, %227 : vector<16x32xf32>
    %229 = vector.broadcast %208 : vector<1x32xf32> to vector<16x32xf32>
    %230 = arith.addf %228, %229 : vector<16x32xf32>
    %231 = arith.truncf %230 : vector<16x32xf32> to vector<16x32xbf16>
    %c0_154 = arith.constant 0 : index
    %c0_155 = arith.constant 0 : index
    %232 = vector.load %arg2[%c0_154, %c0_155] : memref<16x32xbf16, #tpu.memory_space<vmem>>, vector<16x32xbf16>
    %cst_156 = arith.constant 0.000000e+00 : f32
    %233 = vector.broadcast %cst_156 : f32 to vector<16x32xf32>
    %c0_157 = arith.constant 0 : index
    %c0_158 = arith.constant 0 : index
    %c0_159 = arith.constant 0 : index
    %c0_160 = arith.constant 0 : index
    %234 = vector.load %arg9[%c0_157, %c0_158, %c0_159, %c0_160] : memref<1x12x32x8xbf16, #tpu.memory_space<vmem>>, vector<1x1x32x8xbf16>
    %235 = vector.shape_cast %234 : vector<1x1x32x8xbf16> to vector<32x8xbf16>
    %cst_161 = arith.constant dense<0.000000e+00> : vector<16x8xf32>
    %236 = tpu.matmul %231, %235, %cst_161 {dimension_numbers = #tpu.dot_dimension_numbers<[1], [0], [0], [1], [0, 0, 1, 1], [], []>} : vector<16x32xbf16>, vector<32x8xbf16>, vector<16x8xf32> -> vector<16x8xf32>
    %c0_162 = arith.constant 0 : index
    %c0_163 = arith.constant 0 : index
    %c0_164 = arith.constant 0 : index
    %c0_165 = arith.constant 0 : index
    %237 = vector.load %arg10[%c0_162, %c0_163, %c0_164, %c0_165] : memref<1x12x1x8xf32, #tpu.memory_space<vmem>>, vector<1x1x1x8xf32>
    %238 = vector.shape_cast %237 : vector<1x1x1x8xf32> to vector<1x8xf32>
    %239 = vector.broadcast %238 : vector<1x8xf32> to vector<16x8xf32>
    %240 = arith.addf %236, %239 : vector<16x8xf32>
    %c0_166 = arith.constant 0 : index
    %c4_167 = arith.constant 4 : index
    %c0_168 = arith.constant 0 : index
    %c0_169 = arith.constant 0 : index
    %241 = vector.load %arg9[%c0_166, %c4_167, %c0_168, %c0_169] : memref<1x12x32x8xbf16, #tpu.memory_space<vmem>>, vector<1x1x32x8xbf16>
    %242 = vector.shape_cast %241 : vector<1x1x32x8xbf16> to vector<32x8xbf16>
    %cst_170 = arith.constant dense<0.000000e+00> : vector<16x8xf32>
    %243 = tpu.matmul %232, %242, %cst_170 {dimension_numbers = #tpu.dot_dimension_numbers<[1], [0], [0], [1], [0, 0, 1, 1], [], []>} : vector<16x32xbf16>, vector<32x8xbf16>, vector<16x8xf32> -> vector<16x8xf32>
    %c0_171 = arith.constant 0 : index
    %c4_172 = arith.constant 4 : index
    %c0_173 = arith.constant 0 : index
    %c0_174 = arith.constant 0 : index
    %244 = vector.load %arg10[%c0_171, %c4_172, %c0_173, %c0_174] : memref<1x12x1x8xf32, #tpu.memory_space<vmem>>, vector<1x1x1x8xf32>
    %245 = vector.shape_cast %244 : vector<1x1x1x8xf32> to vector<1x8xf32>
    %246 = vector.broadcast %245 : vector<1x8xf32> to vector<16x8xf32>
    %247 = arith.addf %243, %246 : vector<16x8xf32>
    %c0_175 = arith.constant 0 : index
    %c8_176 = arith.constant 8 : index
    %c0_177 = arith.constant 0 : index
    %c0_178 = arith.constant 0 : index
    %248 = vector.load %arg9[%c0_175, %c8_176, %c0_177, %c0_178] : memref<1x12x32x8xbf16, #tpu.memory_space<vmem>>, vector<1x1x32x8xbf16>
    %249 = vector.shape_cast %248 : vector<1x1x32x8xbf16> to vector<32x8xbf16>
    %cst_179 = arith.constant dense<0.000000e+00> : vector<16x8xf32>
    %250 = tpu.matmul %232, %249, %cst_179 {dimension_numbers = #tpu.dot_dimension_numbers<[1], [0], [0], [1], [0, 0, 1, 1], [], []>} : vector<16x32xbf16>, vector<32x8xbf16>, vector<16x8xf32> -> vector<16x8xf32>
    %c0_180 = arith.constant 0 : index
    %c8_181 = arith.constant 8 : index
    %c0_182 = arith.constant 0 : index
    %c0_183 = arith.constant 0 : index
    %251 = vector.load %arg10[%c0_180, %c8_181, %c0_182, %c0_183] : memref<1x12x1x8xf32, #tpu.memory_space<vmem>>, vector<1x1x1x8xf32>
    %252 = vector.shape_cast %251 : vector<1x1x1x8xf32> to vector<1x8xf32>
    %253 = vector.broadcast %252 : vector<1x8xf32> to vector<16x8xf32>
    %254 = arith.addf %250, %253 : vector<16x8xf32>
    %255 = vector.shape_cast %240 : vector<16x8xf32> to vector<2x8x8xf32>
    %256 = vector.shape_cast %247 : vector<16x8xf32> to vector<2x8x8xf32>
    %257 = vector.shape_cast %254 : vector<16x8xf32> to vector<2x8x8xf32>
    "tpu.trace_start"() <{level = 10 : i32, message = "bqd,bkd->bqk"}> : () -> ()
    %cst_184 = arith.constant dense<0.000000e+00> : vector<2x8x8xf32>
    %258 = tpu.matmul %255, %256, %cst_184 {dimension_numbers = #tpu.dot_dimension_numbers<[2], [2], [1], [1], [0, 0, 0, 1, 1, 1], [0], [0]>} : vector<2x8x8xf32>, vector<2x8x8xf32>, vector<2x8x8xf32> -> vector<2x8x8xf32>
    "tpu.trace_stop"() : () -> ()
    %cst_185 = arith.constant dense<0xFF800000> : vector<2x8xf32>
    %259 = vector.multi_reduction <maximumf>, %258, %cst_185 [2] : vector<2x8x8xf32> to vector<2x8xf32>
    %260 = vector.shape_cast %259 : vector<2x8xf32> to vector<2x8x1xf32>
    %261 = vector.broadcast %260 : vector<2x8x1xf32> to vector<2x8x8xf32>
    %262 = arith.subf %258, %261 : vector<2x8x8xf32>
    %263 = math.exp %262 : vector<2x8x8xf32>
    %cst_186 = arith.constant dense<0.000000e+00> : vector<2x8xf32>
    %264 = vector.multi_reduction <add>, %263, %cst_186 [2] : vector<2x8x8xf32> to vector<2x8xf32>
    %265 = vector.shape_cast %264 : vector<2x8xf32> to vector<2x8x1xf32>
    %266 = tpu.reciprocal %265 {approx = true} : vector<2x8x1xf32> -> vector<2x8x1xf32>
    %267 = vector.broadcast %266 : vector<2x8x1xf32> to vector<2x8x8xf32>
    %268 = arith.mulf %263, %267 : vector<2x8x8xf32>
    "tpu.trace_start"() <{level = 10 : i32, message = "bqk,bkd->bqd"}> : () -> ()
    %cst_187 = arith.constant dense<0.000000e+00> : vector<2x8x8xf32>
    %269 = tpu.matmul %268, %257, %cst_187 {dimension_numbers = #tpu.dot_dimension_numbers<[2], [1], [1], [2], [0, 0, 0, 1, 1, 2], [0], [0]>} : vector<2x8x8xf32>, vector<2x8x8xf32>, vector<2x8x8xf32> -> vector<2x8x8xf32>
    "tpu.trace_stop"() : () -> ()
    %270 = vector.shape_cast %269 : vector<2x8x8xf32> to vector<16x8xf32>
    %c0_188 = arith.constant 0 : index
    %c0_189 = arith.constant 0 : index
    %c0_190 = arith.constant 0 : index
    %c0_191 = arith.constant 0 : index
    %271 = vector.load %arg11[%c0_188, %c0_189, %c0_190, %c0_191] : memref<1x4x8x32xbf16, #tpu.memory_space<vmem>>, vector<1x1x8x32xbf16>
    %272 = vector.shape_cast %271 : vector<1x1x8x32xbf16> to vector<8x32xbf16>
    %273 = arith.extf %272 : vector<8x32xbf16> to vector<8x32xf32>
    %cst_192 = arith.constant dense<0.000000e+00> : vector<16x32xf32>
    %274 = tpu.matmul %270, %273, %cst_192 {dimension_numbers = #tpu.dot_dimension_numbers<[1], [0], [0], [1], [0, 0, 1, 1], [], []>} : vector<16x8xf32>, vector<8x32xf32>, vector<16x32xf32> -> vector<16x32xf32>
    %275 = arith.addf %233, %274 : vector<16x32xf32>
    %c0_193 = arith.constant 0 : index
    %c1_194 = arith.constant 1 : index
    %c0_195 = arith.constant 0 : index
    %c0_196 = arith.constant 0 : index
    %276 = vector.load %arg9[%c0_193, %c1_194, %c0_195, %c0_196] : memref<1x12x32x8xbf16, #tpu.memory_space<vmem>>, vector<1x1x32x8xbf16>
    %277 = vector.shape_cast %276 : vector<1x1x32x8xbf16> to vector<32x8xbf16>
    %cst_197 = arith.constant dense<0.000000e+00> : vector<16x8xf32>
    %278 = tpu.matmul %231, %277, %cst_197 {dimension_numbers = #tpu.dot_dimension_numbers<[1], [0], [0], [1], [0, 0, 1, 1], [], []>} : vector<16x32xbf16>, vector<32x8xbf16>, vector<16x8xf32> -> vector<16x8xf32>
    %c0_198 = arith.constant 0 : index
    %c1_199 = arith.constant 1 : index
    %c0_200 = arith.constant 0 : index
    %c0_201 = arith.constant 0 : index
    %279 = vector.load %arg10[%c0_198, %c1_199, %c0_200, %c0_201] : memref<1x12x1x8xf32, #tpu.memory_space<vmem>>, vector<1x1x1x8xf32>
    %280 = vector.shape_cast %279 : vector<1x1x1x8xf32> to vector<1x8xf32>
    %281 = vector.broadcast %280 : vector<1x8xf32> to vector<16x8xf32>
    %282 = arith.addf %278, %281 : vector<16x8xf32>
    %c0_202 = arith.constant 0 : index
    %c5_203 = arith.constant 5 : index
    %c0_204 = arith.constant 0 : index
    %c0_205 = arith.constant 0 : index
    %283 = vector.load %arg9[%c0_202, %c5_203, %c0_204, %c0_205] : memref<1x12x32x8xbf16, #tpu.memory_space<vmem>>, vector<1x1x32x8xbf16>
    %284 = vector.shape_cast %283 : vector<1x1x32x8xbf16> to vector<32x8xbf16>
    %cst_206 = arith.constant dense<0.000000e+00> : vector<16x8xf32>
    %285 = tpu.matmul %232, %284, %cst_206 {dimension_numbers = #tpu.dot_dimension_numbers<[1], [0], [0], [1], [0, 0, 1, 1], [], []>} : vector<16x32xbf16>, vector<32x8xbf16>, vector<16x8xf32> -> vector<16x8xf32>
    %c0_207 = arith.constant 0 : index
    %c5_208 = arith.constant 5 : index
    %c0_209 = arith.constant 0 : index
    %c0_210 = arith.constant 0 : index
    %286 = vector.load %arg10[%c0_207, %c5_208, %c0_209, %c0_210] : memref<1x12x1x8xf32, #tpu.memory_space<vmem>>, vector<1x1x1x8xf32>
    %287 = vector.shape_cast %286 : vector<1x1x1x8xf32> to vector<1x8xf32>
    %288 = vector.broadcast %287 : vector<1x8xf32> to vector<16x8xf32>
    %289 = arith.addf %285, %288 : vector<16x8xf32>
    %c0_211 = arith.constant 0 : index
    %c9_212 = arith.constant 9 : index
    %c0_213 = arith.constant 0 : index
    %c0_214 = arith.constant 0 : index
    %290 = vector.load %arg9[%c0_211, %c9_212, %c0_213, %c0_214] : memref<1x12x32x8xbf16, #tpu.memory_space<vmem>>, vector<1x1x32x8xbf16>
    %291 = vector.shape_cast %290 : vector<1x1x32x8xbf16> to vector<32x8xbf16>
    %cst_215 = arith.constant dense<0.000000e+00> : vector<16x8xf32>
    %292 = tpu.matmul %232, %291, %cst_215 {dimension_numbers = #tpu.dot_dimension_numbers<[1], [0], [0], [1], [0, 0, 1, 1], [], []>} : vector<16x32xbf16>, vector<32x8xbf16>, vector<16x8xf32> -> vector<16x8xf32>
    %c0_216 = arith.constant 0 : index
    %c9_217 = arith.constant 9 : index
    %c0_218 = arith.constant 0 : index
    %c0_219 = arith.constant 0 : index
    %293 = vector.load %arg10[%c0_216, %c9_217, %c0_218, %c0_219] : memref<1x12x1x8xf32, #tpu.memory_space<vmem>>, vector<1x1x1x8xf32>
    %294 = vector.shape_cast %293 : vector<1x1x1x8xf32> to vector<1x8xf32>
    %295 = vector.broadcast %294 : vector<1x8xf32> to vector<16x8xf32>
    %296 = arith.addf %292, %295 : vector<16x8xf32>
    %297 = vector.shape_cast %282 : vector<16x8xf32> to vector<2x8x8xf32>
    %298 = vector.shape_cast %289 : vector<16x8xf32> to vector<2x8x8xf32>
    %299 = vector.shape_cast %296 : vector<16x8xf32> to vector<2x8x8xf32>
    "tpu.trace_start"() <{level = 10 : i32, message = "bqd,bkd->bqk"}> : () -> ()
    %cst_220 = arith.constant dense<0.000000e+00> : vector<2x8x8xf32>
    %300 = tpu.matmul %297, %298, %cst_220 {dimension_numbers = #tpu.dot_dimension_numbers<[2], [2], [1], [1], [0, 0, 0, 1, 1, 1], [0], [0]>} : vector<2x8x8xf32>, vector<2x8x8xf32>, vector<2x8x8xf32> -> vector<2x8x8xf32>
    "tpu.trace_stop"() : () -> ()
    %cst_221 = arith.constant dense<0xFF800000> : vector<2x8xf32>
    %301 = vector.multi_reduction <maximumf>, %300, %cst_221 [2] : vector<2x8x8xf32> to vector<2x8xf32>
    %302 = vector.shape_cast %301 : vector<2x8xf32> to vector<2x8x1xf32>
    %303 = vector.broadcast %302 : vector<2x8x1xf32> to vector<2x8x8xf32>
    %304 = arith.subf %300, %303 : vector<2x8x8xf32>
    %305 = math.exp %304 : vector<2x8x8xf32>
    %cst_222 = arith.constant dense<0.000000e+00> : vector<2x8xf32>
    %306 = vector.multi_reduction <add>, %305, %cst_222 [2] : vector<2x8x8xf32> to vector<2x8xf32>
    %307 = vector.shape_cast %306 : vector<2x8xf32> to vector<2x8x1xf32>
    %308 = tpu.reciprocal %307 {approx = true} : vector<2x8x1xf32> -> vector<2x8x1xf32>
    %309 = vector.broadcast %308 : vector<2x8x1xf32> to vector<2x8x8xf32>
    %310 = arith.mulf %305, %309 : vector<2x8x8xf32>
    "tpu.trace_start"() <{level = 10 : i32, message = "bqk,bkd->bqd"}> : () -> ()
    %cst_223 = arith.constant dense<0.000000e+00> : vector<2x8x8xf32>
    %311 = tpu.matmul %310, %299, %cst_223 {dimension_numbers = #tpu.dot_dimension_numbers<[2], [1], [1], [2], [0, 0, 0, 1, 1, 2], [0], [0]>} : vector<2x8x8xf32>, vector<2x8x8xf32>, vector<2x8x8xf32> -> vector<2x8x8xf32>
    "tpu.trace_stop"() : () -> ()
    %312 = vector.shape_cast %311 : vector<2x8x8xf32> to vector<16x8xf32>
    %c0_224 = arith.constant 0 : index
    %c1_225 = arith.constant 1 : index
    %c0_226 = arith.constant 0 : index
    %c0_227 = arith.constant 0 : index
    %313 = vector.load %arg11[%c0_224, %c1_225, %c0_226, %c0_227] : memref<1x4x8x32xbf16, #tpu.memory_space<vmem>>, vector<1x1x8x32xbf16>
    %314 = vector.shape_cast %313 : vector<1x1x8x32xbf16> to vector<8x32xbf16>
    %315 = arith.extf %314 : vector<8x32xbf16> to vector<8x32xf32>
    %cst_228 = arith.constant dense<0.000000e+00> : vector<16x32xf32>
    %316 = tpu.matmul %312, %315, %cst_228 {dimension_numbers = #tpu.dot_dimension_numbers<[1], [0], [0], [1], [0, 0, 1, 1], [], []>} : vector<16x8xf32>, vector<8x32xf32>, vector<16x32xf32> -> vector<16x32xf32>
    %317 = arith.addf %275, %316 : vector<16x32xf32>
    %c0_229 = arith.constant 0 : index
    %c2_230 = arith.constant 2 : index
    %c0_231 = arith.constant 0 : index
    %c0_232 = arith.constant 0 : index
    %318 = vector.load %arg9[%c0_229, %c2_230, %c0_231, %c0_232] : memref<1x12x32x8xbf16, #tpu.memory_space<vmem>>, vector<1x1x32x8xbf16>
    %319 = vector.shape_cast %318 : vector<1x1x32x8xbf16> to vector<32x8xbf16>
    %cst_233 = arith.constant dense<0.000000e+00> : vector<16x8xf32>
    %320 = tpu.matmul %231, %319, %cst_233 {dimension_numbers = #tpu.dot_dimension_numbers<[1], [0], [0], [1], [0, 0, 1, 1], [], []>} : vector<16x32xbf16>, vector<32x8xbf16>, vector<16x8xf32> -> vector<16x8xf32>
    %c0_234 = arith.constant 0 : index
    %c2_235 = arith.constant 2 : index
    %c0_236 = arith.constant 0 : index
    %c0_237 = arith.constant 0 : index
    %321 = vector.load %arg10[%c0_234, %c2_235, %c0_236, %c0_237] : memref<1x12x1x8xf32, #tpu.memory_space<vmem>>, vector<1x1x1x8xf32>
    %322 = vector.shape_cast %321 : vector<1x1x1x8xf32> to vector<1x8xf32>
    %323 = vector.broadcast %322 : vector<1x8xf32> to vector<16x8xf32>
    %324 = arith.addf %320, %323 : vector<16x8xf32>
    %c0_238 = arith.constant 0 : index
    %c6_239 = arith.constant 6 : index
    %c0_240 = arith.constant 0 : index
    %c0_241 = arith.constant 0 : index
    %325 = vector.load %arg9[%c0_238, %c6_239, %c0_240, %c0_241] : memref<1x12x32x8xbf16, #tpu.memory_space<vmem>>, vector<1x1x32x8xbf16>
    %326 = vector.shape_cast %325 : vector<1x1x32x8xbf16> to vector<32x8xbf16>
    %cst_242 = arith.constant dense<0.000000e+00> : vector<16x8xf32>
    %327 = tpu.matmul %232, %326, %cst_242 {dimension_numbers = #tpu.dot_dimension_numbers<[1], [0], [0], [1], [0, 0, 1, 1], [], []>} : vector<16x32xbf16>, vector<32x8xbf16>, vector<16x8xf32> -> vector<16x8xf32>
    %c0_243 = arith.constant 0 : index
    %c6_244 = arith.constant 6 : index
    %c0_245 = arith.constant 0 : index
    %c0_246 = arith.constant 0 : index
    %328 = vector.load %arg10[%c0_243, %c6_244, %c0_245, %c0_246] : memref<1x12x1x8xf32, #tpu.memory_space<vmem>>, vector<1x1x1x8xf32>
    %329 = vector.shape_cast %328 : vector<1x1x1x8xf32> to vector<1x8xf32>
    %330 = vector.broadcast %329 : vector<1x8xf32> to vector<16x8xf32>
    %331 = arith.addf %327, %330 : vector<16x8xf32>
    %c0_247 = arith.constant 0 : index
    %c10_248 = arith.constant 10 : index
    %c0_249 = arith.constant 0 : index
    %c0_250 = arith.constant 0 : index
    %332 = vector.load %arg9[%c0_247, %c10_248, %c0_249, %c0_250] : memref<1x12x32x8xbf16, #tpu.memory_space<vmem>>, vector<1x1x32x8xbf16>
    %333 = vector.shape_cast %332 : vector<1x1x32x8xbf16> to vector<32x8xbf16>
    %cst_251 = arith.constant dense<0.000000e+00> : vector<16x8xf32>
    %334 = tpu.matmul %232, %333, %cst_251 {dimension_numbers = #tpu.dot_dimension_numbers<[1], [0], [0], [1], [0, 0, 1, 1], [], []>} : vector<16x32xbf16>, vector<32x8xbf16>, vector<16x8xf32> -> vector<16x8xf32>
    %c0_252 = arith.constant 0 : index
    %c10_253 = arith.constant 10 : index
    %c0_254 = arith.constant 0 : index
    %c0_255 = arith.constant 0 : index
    %335 = vector.load %arg10[%c0_252, %c10_253, %c0_254, %c0_255] : memref<1x12x1x8xf32, #tpu.memory_space<vmem>>, vector<1x1x1x8xf32>
    %336 = vector.shape_cast %335 : vector<1x1x1x8xf32> to vector<1x8xf32>
    %337 = vector.broadcast %336 : vector<1x8xf32> to vector<16x8xf32>
    %338 = arith.addf %334, %337 : vector<16x8xf32>
    %339 = vector.shape_cast %324 : vector<16x8xf32> to vector<2x8x8xf32>
    %340 = vector.shape_cast %331 : vector<16x8xf32> to vector<2x8x8xf32>
    %341 = vector.shape_cast %338 : vector<16x8xf32> to vector<2x8x8xf32>
    "tpu.trace_start"() <{level = 10 : i32, message = "bqd,bkd->bqk"}> : () -> ()
    %cst_256 = arith.constant dense<0.000000e+00> : vector<2x8x8xf32>
    %342 = tpu.matmul %339, %340, %cst_256 {dimension_numbers = #tpu.dot_dimension_numbers<[2], [2], [1], [1], [0, 0, 0, 1, 1, 1], [0], [0]>} : vector<2x8x8xf32>, vector<2x8x8xf32>, vector<2x8x8xf32> -> vector<2x8x8xf32>
    "tpu.trace_stop"() : () -> ()
    %cst_257 = arith.constant dense<0xFF800000> : vector<2x8xf32>
    %343 = vector.multi_reduction <maximumf>, %342, %cst_257 [2] : vector<2x8x8xf32> to vector<2x8xf32>
    %344 = vector.shape_cast %343 : vector<2x8xf32> to vector<2x8x1xf32>
    %345 = vector.broadcast %344 : vector<2x8x1xf32> to vector<2x8x8xf32>
    %346 = arith.subf %342, %345 : vector<2x8x8xf32>
    %347 = math.exp %346 : vector<2x8x8xf32>
    %cst_258 = arith.constant dense<0.000000e+00> : vector<2x8xf32>
    %348 = vector.multi_reduction <add>, %347, %cst_258 [2] : vector<2x8x8xf32> to vector<2x8xf32>
    %349 = vector.shape_cast %348 : vector<2x8xf32> to vector<2x8x1xf32>
    %350 = tpu.reciprocal %349 {approx = true} : vector<2x8x1xf32> -> vector<2x8x1xf32>
    %351 = vector.broadcast %350 : vector<2x8x1xf32> to vector<2x8x8xf32>
    %352 = arith.mulf %347, %351 : vector<2x8x8xf32>
    "tpu.trace_start"() <{level = 10 : i32, message = "bqk,bkd->bqd"}> : () -> ()
    %cst_259 = arith.constant dense<0.000000e+00> : vector<2x8x8xf32>
    %353 = tpu.matmul %352, %341, %cst_259 {dimension_numbers = #tpu.dot_dimension_numbers<[2], [1], [1], [2], [0, 0, 0, 1, 1, 2], [0], [0]>} : vector<2x8x8xf32>, vector<2x8x8xf32>, vector<2x8x8xf32> -> vector<2x8x8xf32>
    "tpu.trace_stop"() : () -> ()
    %354 = vector.shape_cast %353 : vector<2x8x8xf32> to vector<16x8xf32>
    %c0_260 = arith.constant 0 : index
    %c2_261 = arith.constant 2 : index
    %c0_262 = arith.constant 0 : index
    %c0_263 = arith.constant 0 : index
    %355 = vector.load %arg11[%c0_260, %c2_261, %c0_262, %c0_263] : memref<1x4x8x32xbf16, #tpu.memory_space<vmem>>, vector<1x1x8x32xbf16>
    %356 = vector.shape_cast %355 : vector<1x1x8x32xbf16> to vector<8x32xbf16>
    %357 = arith.extf %356 : vector<8x32xbf16> to vector<8x32xf32>
    %cst_264 = arith.constant dense<0.000000e+00> : vector<16x32xf32>
    %358 = tpu.matmul %354, %357, %cst_264 {dimension_numbers = #tpu.dot_dimension_numbers<[1], [0], [0], [1], [0, 0, 1, 1], [], []>} : vector<16x8xf32>, vector<8x32xf32>, vector<16x32xf32> -> vector<16x32xf32>
    %359 = arith.addf %317, %358 : vector<16x32xf32>
    %c0_265 = arith.constant 0 : index
    %c3_266 = arith.constant 3 : index
    %c0_267 = arith.constant 0 : index
    %c0_268 = arith.constant 0 : index
    %360 = vector.load %arg9[%c0_265, %c3_266, %c0_267, %c0_268] : memref<1x12x32x8xbf16, #tpu.memory_space<vmem>>, vector<1x1x32x8xbf16>
    %361 = vector.shape_cast %360 : vector<1x1x32x8xbf16> to vector<32x8xbf16>
    %cst_269 = arith.constant dense<0.000000e+00> : vector<16x8xf32>
    %362 = tpu.matmul %231, %361, %cst_269 {dimension_numbers = #tpu.dot_dimension_numbers<[1], [0], [0], [1], [0, 0, 1, 1], [], []>} : vector<16x32xbf16>, vector<32x8xbf16>, vector<16x8xf32> -> vector<16x8xf32>
    %c0_270 = arith.constant 0 : index
    %c3_271 = arith.constant 3 : index
    %c0_272 = arith.constant 0 : index
    %c0_273 = arith.constant 0 : index
    %363 = vector.load %arg10[%c0_270, %c3_271, %c0_272, %c0_273] : memref<1x12x1x8xf32, #tpu.memory_space<vmem>>, vector<1x1x1x8xf32>
    %364 = vector.shape_cast %363 : vector<1x1x1x8xf32> to vector<1x8xf32>
    %365 = vector.broadcast %364 : vector<1x8xf32> to vector<16x8xf32>
    %366 = arith.addf %362, %365 : vector<16x8xf32>
    %c0_274 = arith.constant 0 : index
    %c7_275 = arith.constant 7 : index
    %c0_276 = arith.constant 0 : index
    %c0_277 = arith.constant 0 : index
    %367 = vector.load %arg9[%c0_274, %c7_275, %c0_276, %c0_277] : memref<1x12x32x8xbf16, #tpu.memory_space<vmem>>, vector<1x1x32x8xbf16>
    %368 = vector.shape_cast %367 : vector<1x1x32x8xbf16> to vector<32x8xbf16>
    %cst_278 = arith.constant dense<0.000000e+00> : vector<16x8xf32>
    %369 = tpu.matmul %232, %368, %cst_278 {dimension_numbers = #tpu.dot_dimension_numbers<[1], [0], [0], [1], [0, 0, 1, 1], [], []>} : vector<16x32xbf16>, vector<32x8xbf16>, vector<16x8xf32> -> vector<16x8xf32>
    %c0_279 = arith.constant 0 : index
    %c7_280 = arith.constant 7 : index
    %c0_281 = arith.constant 0 : index
    %c0_282 = arith.constant 0 : index
    %370 = vector.load %arg10[%c0_279, %c7_280, %c0_281, %c0_282] : memref<1x12x1x8xf32, #tpu.memory_space<vmem>>, vector<1x1x1x8xf32>
    %371 = vector.shape_cast %370 : vector<1x1x1x8xf32> to vector<1x8xf32>
    %372 = vector.broadcast %371 : vector<1x8xf32> to vector<16x8xf32>
    %373 = arith.addf %369, %372 : vector<16x8xf32>
    %c0_283 = arith.constant 0 : index
    %c11_284 = arith.constant 11 : index
    %c0_285 = arith.constant 0 : index
    %c0_286 = arith.constant 0 : index
    %374 = vector.load %arg9[%c0_283, %c11_284, %c0_285, %c0_286] : memref<1x12x32x8xbf16, #tpu.memory_space<vmem>>, vector<1x1x32x8xbf16>
    %375 = vector.shape_cast %374 : vector<1x1x32x8xbf16> to vector<32x8xbf16>
    %cst_287 = arith.constant dense<0.000000e+00> : vector<16x8xf32>
    %376 = tpu.matmul %232, %375, %cst_287 {dimension_numbers = #tpu.dot_dimension_numbers<[1], [0], [0], [1], [0, 0, 1, 1], [], []>} : vector<16x32xbf16>, vector<32x8xbf16>, vector<16x8xf32> -> vector<16x8xf32>
    %c0_288 = arith.constant 0 : index
    %c11_289 = arith.constant 11 : index
    %c0_290 = arith.constant 0 : index
    %c0_291 = arith.constant 0 : index
    %377 = vector.load %arg10[%c0_288, %c11_289, %c0_290, %c0_291] : memref<1x12x1x8xf32, #tpu.memory_space<vmem>>, vector<1x1x1x8xf32>
    %378 = vector.shape_cast %377 : vector<1x1x1x8xf32> to vector<1x8xf32>
    %379 = vector.broadcast %378 : vector<1x8xf32> to vector<16x8xf32>
    %380 = arith.addf %376, %379 : vector<16x8xf32>
    %381 = vector.shape_cast %366 : vector<16x8xf32> to vector<2x8x8xf32>
    %382 = vector.shape_cast %373 : vector<16x8xf32> to vector<2x8x8xf32>
    %383 = vector.shape_cast %380 : vector<16x8xf32> to vector<2x8x8xf32>
    "tpu.trace_start"() <{level = 10 : i32, message = "bqd,bkd->bqk"}> : () -> ()
    %cst_292 = arith.constant dense<0.000000e+00> : vector<2x8x8xf32>
    %384 = tpu.matmul %381, %382, %cst_292 {dimension_numbers = #tpu.dot_dimension_numbers<[2], [2], [1], [1], [0, 0, 0, 1, 1, 1], [0], [0]>} : vector<2x8x8xf32>, vector<2x8x8xf32>, vector<2x8x8xf32> -> vector<2x8x8xf32>
    "tpu.trace_stop"() : () -> ()
    %cst_293 = arith.constant dense<0xFF800000> : vector<2x8xf32>
    %385 = vector.multi_reduction <maximumf>, %384, %cst_293 [2] : vector<2x8x8xf32> to vector<2x8xf32>
    %386 = vector.shape_cast %385 : vector<2x8xf32> to vector<2x8x1xf32>
    %387 = vector.broadcast %386 : vector<2x8x1xf32> to vector<2x8x8xf32>
    %388 = arith.subf %384, %387 : vector<2x8x8xf32>
    %389 = math.exp %388 : vector<2x8x8xf32>
    %cst_294 = arith.constant dense<0.000000e+00> : vector<2x8xf32>
    %390 = vector.multi_reduction <add>, %389, %cst_294 [2] : vector<2x8x8xf32> to vector<2x8xf32>
    %391 = vector.shape_cast %390 : vector<2x8xf32> to vector<2x8x1xf32>
    %392 = tpu.reciprocal %391 {approx = true} : vector<2x8x1xf32> -> vector<2x8x1xf32>
    %393 = vector.broadcast %392 : vector<2x8x1xf32> to vector<2x8x8xf32>
    %394 = arith.mulf %389, %393 : vector<2x8x8xf32>
    "tpu.trace_start"() <{level = 10 : i32, message = "bqk,bkd->bqd"}> : () -> ()
    %cst_295 = arith.constant dense<0.000000e+00> : vector<2x8x8xf32>
    %395 = tpu.matmul %394, %383, %cst_295 {dimension_numbers = #tpu.dot_dimension_numbers<[2], [1], [1], [2], [0, 0, 0, 1, 1, 2], [0], [0]>} : vector<2x8x8xf32>, vector<2x8x8xf32>, vector<2x8x8xf32> -> vector<2x8x8xf32>
    "tpu.trace_stop"() : () -> ()
    %396 = vector.shape_cast %395 : vector<2x8x8xf32> to vector<16x8xf32>
    %c0_296 = arith.constant 0 : index
    %c3_297 = arith.constant 3 : index
    %c0_298 = arith.constant 0 : index
    %c0_299 = arith.constant 0 : index
    %397 = vector.load %arg11[%c0_296, %c3_297, %c0_298, %c0_299] : memref<1x4x8x32xbf16, #tpu.memory_space<vmem>>, vector<1x1x8x32xbf16>
    %398 = vector.shape_cast %397 : vector<1x1x8x32xbf16> to vector<8x32xbf16>
    %399 = arith.extf %398 : vector<8x32xbf16> to vector<8x32xf32>
    %cst_300 = arith.constant dense<0.000000e+00> : vector<16x32xf32>
    %400 = tpu.matmul %396, %399, %cst_300 {dimension_numbers = #tpu.dot_dimension_numbers<[1], [0], [0], [1], [0, 0, 1, 1], [], []>} : vector<16x8xf32>, vector<8x32xf32>, vector<16x32xf32> -> vector<16x32xf32>
    %401 = arith.addf %359, %400 : vector<16x32xf32>
    %402 = arith.addf %206, %401 : vector<16x32xf32>
    %c0_301 = arith.constant 0 : index
    %c0_302 = arith.constant 0 : index
    %c0_303 = arith.constant 0 : index
    %403 = vector.load %arg12[%c0_301, %c0_302, %c0_303] : memref<1x1x32xf32, #tpu.memory_space<vmem>>, vector<1x1x32xf32>
    %404 = vector.shape_cast %403 : vector<1x1x32xf32> to vector<1x32xf32>
    %405 = vector.broadcast %404 : vector<1x32xf32> to vector<16x32xf32>
    %406 = arith.addf %402, %405 : vector<16x32xf32>
    %407 = vector.extract_strided_slice %5 {offsets = [2, 0], sizes = [1, 32], strides = [1, 1]} : vector<3x32xf32> to vector<1x32xf32>
    %408 = vector.extract_strided_slice %7 {offsets = [2, 0], sizes = [1, 32], strides = [1, 1]} : vector<3x32xf32> to vector<1x32xf32>
    %cst_304 = arith.constant dense<0.000000e+00> : vector<16xf32>
    %409 = vector.multi_reduction <add>, %406, %cst_304 [1] : vector<16x32xf32> to vector<16xf32>
    %410 = vector.shape_cast %409 : vector<16xf32> to vector<16x1xf32>
    %cst_305 = arith.constant 3.200000e+01 : f32
    %411 = vector.broadcast %cst_305 : f32 to vector<16x1xf32>
    %412 = arith.divf %410, %411 : vector<16x1xf32>
    %413 = vector.broadcast %412 : vector<16x1xf32> to vector<16x32xf32>
    %414 = arith.subf %406, %413 : vector<16x32xf32>
    %415 = arith.mulf %414, %414 : vector<16x32xf32>
    %cst_306 = arith.constant dense<0.000000e+00> : vector<16xf32>
    %416 = vector.multi_reduction <add>, %415, %cst_306 [1] : vector<16x32xf32> to vector<16xf32>
    %417 = vector.shape_cast %416 : vector<16xf32> to vector<16x1xf32>
    %cst_307 = arith.constant 3.200000e+01 : f32
    %418 = vector.broadcast %cst_307 : f32 to vector<16x1xf32>
    %419 = arith.divf %417, %418 : vector<16x1xf32>
    %420 = vector.broadcast %412 : vector<16x1xf32> to vector<16x32xf32>
    %421 = arith.subf %406, %420 : vector<16x32xf32>
    %cst_308 = arith.constant 9.99999974E-6 : f32
    %422 = vector.broadcast %cst_308 : f32 to vector<16x1xf32>
    %423 = arith.addf %419, %422 : vector<16x1xf32>
    %424 = math.rsqrt %423 : vector<16x1xf32>
    %425 = vector.broadcast %424 : vector<16x1xf32> to vector<16x32xf32>
    %426 = arith.mulf %421, %425 : vector<16x32xf32>
    %427 = vector.broadcast %407 : vector<1x32xf32> to vector<16x32xf32>
    %428 = arith.mulf %426, %427 : vector<16x32xf32>
    %429 = vector.broadcast %408 : vector<1x32xf32> to vector<16x32xf32>
    %430 = arith.addf %428, %429 : vector<16x32xf32>
    %431 = arith.truncf %430 : vector<16x32xf32> to vector<16x32xbf16>
    %c0_309 = arith.constant 0 : index
    %c0_310 = arith.constant 0 : index
    %c0_311 = arith.constant 0 : index
    %432 = vector.load %arg13[%c0_309, %c0_310, %c0_311] : memref<1x32x2048xbf16, #tpu.memory_space<vmem>>, vector<1x32x2048xbf16>
    %433 = vector.shape_cast %432 : vector<1x32x2048xbf16> to vector<32x2048xbf16>
    %cst_312 = arith.constant dense<0.000000e+00> : vector<16x2048xf32>
    %434 = tpu.matmul %431, %433, %cst_312 {dimension_numbers = #tpu.dot_dimension_numbers<[1], [0], [0], [1], [0, 0, 1, 1], [], []>} : vector<16x32xbf16>, vector<32x2048xbf16>, vector<16x2048xf32> -> vector<16x2048xf32>
    %c0_313 = arith.constant 0 : index
    %c0_314 = arith.constant 0 : index
    %c0_315 = arith.constant 0 : index
    %435 = vector.load %arg14[%c0_313, %c0_314, %c0_315] : memref<1x1x2048xf32, #tpu.memory_space<vmem>>, vector<1x1x2048xf32>
    %436 = vector.shape_cast %435 : vector<1x1x2048xf32> to vector<1x2048xf32>
    %437 = vector.broadcast %436 : vector<1x2048xf32> to vector<16x2048xf32>
    %438 = arith.addf %434, %437 : vector<16x2048xf32>
    %cst_316 = arith.constant 0.000000e+00 : f32
    %439 = vector.broadcast %cst_316 : f32 to vector<16x2048xf32>
    %440 = arith.maximumf %438, %439 : vector<16x2048xf32>
    %441 = arith.truncf %440 : vector<16x2048xf32> to vector<16x2048xbf16>
    %c0_317 = arith.constant 0 : index
    %c0_318 = arith.constant 0 : index
    %c0_319 = arith.constant 0 : index
    %442 = vector.load %arg15[%c0_317, %c0_318, %c0_319] : memref<1x2048x32xbf16, #tpu.memory_space<vmem>>, vector<1x2048x32xbf16>
    %443 = vector.shape_cast %442 : vector<1x2048x32xbf16> to vector<2048x32xbf16>
    %cst_320 = arith.constant dense<0.000000e+00> : vector<16x32xf32>
    %444 = tpu.matmul %441, %443, %cst_320 {dimension_numbers = #tpu.dot_dimension_numbers<[1], [0], [0], [1], [0, 0, 1, 1], [], []>} : vector<16x2048xbf16>, vector<2048x32xbf16>, vector<16x32xf32> -> vector<16x32xf32>
    %445 = arith.addf %406, %444 : vector<16x32xf32>
    %c0_321 = arith.constant 0 : index
    %c0_322 = arith.constant 0 : index
    %c0_323 = arith.constant 0 : index
    %446 = vector.load %arg16[%c0_321, %c0_322, %c0_323] : memref<1x1x32xf32, #tpu.memory_space<vmem>>, vector<1x1x32xf32>
    %447 = vector.shape_cast %446 : vector<1x1x32xf32> to vector<1x32xf32>
    %448 = vector.broadcast %447 : vector<1x32xf32> to vector<16x32xf32>
    %449 = arith.addf %445, %448 : vector<16x32xf32>
    %c0_324 = arith.constant 0 : index
    %c0_325 = arith.constant 0 : index
    %450 = vector.load %arg20[%c0_324, %c0_325] : memref<16x32xf32, #tpu.memory_space<vmem>>, vector<16x32xf32>
    tpu.vector_store %arg20[%c0_324, %c0_325], %449 {strides = array<i32>} : memref<16x32xf32, #tpu.memory_space<vmem>>, vector<16x32xf32>,
    %c1_i32 = arith.constant 1 : i32
    %451 = arith.cmpi eq, %arg0, %c1_i32 : i32
    %452 = arith.extui %451 : i1 to i32
    %c0_i32_326 = arith.constant 0 : i32
    %453 = arith.cmpi ne, %452, %c0_i32_326 : i32
    scf.if %453 {
      %c0_327 = arith.constant 0 : index
      %c0_328 = arith.constant 0 : index
      %454 = vector.load %arg17[%c0_327, %c0_328] : memref<1x32xf32, #tpu.memory_space<vmem>>, vector<1x32xf32>
      %c0_329 = arith.constant 0 : index
      %c0_330 = arith.constant 0 : index
      %455 = vector.load %arg18[%c0_329, %c0_330] : memref<1x32xf32, #tpu.memory_space<vmem>>, vector<1x32xf32>
      %cst_331 = arith.constant dense<0.000000e+00> : vector<16xf32>
      %456 = vector.multi_reduction <add>, %449, %cst_331 [1] : vector<16x32xf32> to vector<16xf32>
      %457 = vector.shape_cast %456 : vector<16xf32> to vector<16x1xf32>
      %cst_332 = arith.constant 3.200000e+01 : f32
      %458 = vector.broadcast %cst_332 : f32 to vector<16x1xf32>
      %459 = arith.divf %457, %458 : vector<16x1xf32>
      %460 = vector.broadcast %459 : vector<16x1xf32> to vector<16x32xf32>
      %461 = arith.subf %449, %460 : vector<16x32xf32>
      %462 = arith.mulf %461, %461 : vector<16x32xf32>
      %cst_333 = arith.constant dense<0.000000e+00> : vector<16xf32>
      %463 = vector.multi_reduction <add>, %462, %cst_333 [1] : vector<16x32xf32> to vector<16xf32>
      %464 = vector.shape_cast %463 : vector<16xf32> to vector<16x1xf32>
      %cst_334 = arith.constant 3.200000e+01 : f32
      %465 = vector.broadcast %cst_334 : f32 to vector<16x1xf32>
      %466 = arith.divf %464, %465 : vector<16x1xf32>
      %467 = vector.broadcast %459 : vector<16x1xf32> to vector<16x32xf32>
      %468 = arith.subf %449, %467 : vector<16x32xf32>
      %cst_335 = arith.constant 9.99999974E-6 : f32
      %469 = vector.broadcast %cst_335 : f32 to vector<16x1xf32>
      %470 = arith.addf %466, %469 : vector<16x1xf32>
      %471 = math.rsqrt %470 : vector<16x1xf32>
      %472 = vector.broadcast %471 : vector<16x1xf32> to vector<16x32xf32>
      %473 = arith.mulf %468, %472 : vector<16x32xf32>
      %474 = vector.broadcast %454 : vector<1x32xf32> to vector<16x32xf32>
      %475 = arith.mulf %473, %474 : vector<16x32xf32>
      %476 = vector.broadcast %455 : vector<1x32xf32> to vector<16x32xf32>
      %477 = arith.addf %475, %476 : vector<16x32xf32>
      %c0_336 = arith.constant 0 : index
      %c0_337 = arith.constant 0 : index
      %478 = vector.load %arg19[%c0_336, %c0_337] : memref<16x32xf32, #tpu.memory_space<vmem>>, vector<16x32xf32>
      tpu.vector_store %arg19[%c0_336, %c0_337], %477 {strides = array<i32>} : memref<16x32xf32, #tpu.memory_space<vmem>>, vector<16x32xf32>,
    } else {
    }
    return
  }
  func.func @transform_0(%arg0: i32) -> (i32, i32) {
    %c0_i32 = arith.constant 0 : i32
    %c0_i32_0 = arith.constant 0 : i32
    %c0_i32_1 = arith.constant 0 : i32
    return %c0_i32, %c0_i32_0 : i32, i32
  }
  func.func @transform_1(%arg0: i32) -> (i32, i32) {
    %c0_i32 = arith.constant 0 : i32
    %c0_i32_0 = arith.constant 0 : i32
    %c0_i32_1 = arith.constant 0 : i32
    return %c0_i32, %c0_i32_0 : i32, i32
  }
  func.func @transform_2(%arg0: i32) -> (i32, i32, i32) {
    %c0_i32 = arith.constant 0 : i32
    %c0_i32_0 = arith.constant 0 : i32
    %c0_i32_1 = arith.constant 0 : i32
    return %arg0, %c0_i32, %c0_i32_0 : i32, i32, i32
  }
  func.func @transform_3(%arg0: i32) -> (i32, i32, i32) {
    %c0_i32 = arith.constant 0 : i32
    %c0_i32_0 = arith.constant 0 : i32
    %c0_i32_1 = arith.constant 0 : i32
    return %arg0, %c0_i32, %c0_i32_0 : i32, i32, i32
  }
  func.func @transform_4(%arg0: i32) -> (i32, i32, i32, i32) {
    %c0_i32 = arith.constant 0 : i32
    %c0_i32_0 = arith.constant 0 : i32
    %c0_i32_1 = arith.constant 0 : i32
    %c0_i32_2 = arith.constant 0 : i32
    return %arg0, %c0_i32, %c0_i32_0, %c0_i32_1 : i32, i32, i32, i32
  }
  func.func @transform_5(%arg0: i32) -> (i32, i32, i32, i32) {
    %c0_i32 = arith.constant 0 : i32
    %c0_i32_0 = arith.constant 0 : i32
    %c0_i32_1 = arith.constant 0 : i32
    %c0_i32_2 = arith.constant 0 : i32
    return %arg0, %c0_i32, %c0_i32_0, %c0_i32_1 : i32, i32, i32, i32
  }
  func.func @transform_6(%arg0: i32) -> (i32, i32, i32, i32) {
    %c0_i32 = arith.constant 0 : i32
    %c0_i32_0 = arith.constant 0 : i32
    %c0_i32_1 = arith.constant 0 : i32
    %c0_i32_2 = arith.constant 0 : i32
    return %arg0, %c0_i32, %c0_i32_0, %c0_i32_1 : i32, i32, i32, i32
  }
  func.func @transform_7(%arg0: i32) -> (i32, i32, i32) {
    %c0_i32 = arith.constant 0 : i32
    %c0_i32_0 = arith.constant 0 : i32
    %c0_i32_1 = arith.constant 0 : i32
    return %arg0, %c0_i32, %c0_i32_0 : i32, i32, i32
  }
  func.func @transform_8(%arg0: i32) -> (i32, i32, i32, i32) {
    %c0_i32 = arith.constant 0 : i32
    %c0_i32_0 = arith.constant 0 : i32
    %c0_i32_1 = arith.constant 0 : i32
    %c0_i32_2 = arith.constant 0 : i32
    return %arg0, %c0_i32, %c0_i32_0, %c0_i32_1 : i32, i32, i32, i32
  }
  func.func @transform_9(%arg0: i32) -> (i32, i32, i32, i32) {
    %c0_i32 = arith.constant 0 : i32
    %c0_i32_0 = arith.constant 0 : i32
    %c0_i32_1 = arith.constant 0 : i32
    %c0_i32_2 = arith.constant 0 : i32
    return %arg0, %c0_i32, %c0_i32_0, %c0_i32_1 : i32, i32, i32, i32
  }
  func.func @transform_10(%arg0: i32) -> (i32, i32, i32, i32) {
    %c0_i32 = arith.constant 0 : i32
    %c0_i32_0 = arith.constant 0 : i32
    %c0_i32_1 = arith.constant 0 : i32
    %c0_i32_2 = arith.constant 0 : i32
    return %arg0, %c0_i32, %c0_i32_0, %c0_i32_1 : i32, i32, i32, i32
  }
  func.func @transform_11(%arg0: i32) -> (i32, i32, i32) {
    %c0_i32 = arith.constant 0 : i32
    %c0_i32_0 = arith.constant 0 : i32
    %c0_i32_1 = arith.constant 0 : i32
    return %arg0, %c0_i32, %c0_i32_0 : i32, i32, i32
  }
  func.func @transform_12(%arg0: i32) -> (i32, i32, i32) {
    %c0_i32 = arith.constant 0 : i32
    %c0_i32_0 = arith.constant 0 : i32
    %c0_i32_1 = arith.constant 0 : i32
    return %arg0, %c0_i32, %c0_i32_0 : i32, i32, i32
  }
  func.func @transform_13(%arg0: i32) -> (i32, i32, i32) {
    %c0_i32 = arith.constant 0 : i32
    %c0_i32_0 = arith.constant 0 : i32
    %c0_i32_1 = arith.constant 0 : i32
    return %arg0, %c0_i32, %c0_i32_0 : i32, i32, i32
  }
  func.func @transform_14(%arg0: i32) -> (i32, i32, i32) {
    %c0_i32 = arith.constant 0 : i32
    %c0_i32_0 = arith.constant 0 : i32
    %c0_i32_1 = arith.constant 0 : i32
    return %arg0, %c0_i32, %c0_i32_0 : i32, i32, i32
  }
  func.func @transform_15(%arg0: i32) -> (i32, i32, i32) {
    %c0_i32 = arith.constant 0 : i32
    %c0_i32_0 = arith.constant 0 : i32
    %c0_i32_1 = arith.constant 0 : i32
    return %arg0, %c0_i32, %c0_i32_0 : i32, i32, i32
  }
  func.func @transform_16(%arg0: i32) -> (i32, i32) {
    %c0_i32 = arith.constant 0 : i32
    %c0_i32_0 = arith.constant 0 : i32
    %c0_i32_1 = arith.constant 0 : i32
    return %c0_i32, %c0_i32_0 : i32, i32
  }
  func.func @transform_17(%arg0: i32) -> (i32, i32) {
    %c0_i32 = arith.constant 0 : i32
    %c0_i32_0 = arith.constant 0 : i32
    %c0_i32_1 = arith.constant 0 : i32
    return %c0_i32, %c0_i32_0 : i32, i32
  }
  func.func @transform_18(%arg0: i32) -> (i32, i32) {
    %c0_i32 = arith.constant 0 : i32
    %c0_i32_0 = arith.constant 0 : i32
    %c0_i32_1 = arith.constant 0 : i32
    return %c0_i32, %c0_i32_0 : i32, i32
  }
}

</mosaic_0001>

<llo_original>
// kernel: tpu_custom_call.1
$region0: #{tpu_custom_call.1}
  #allocation0 [shape = 'u32[]', space=smem, size = 0x4, offset = 0x4, fixed_abs, tag = 'smem constant byte address 0x4 - core index']
  #allocation1 [shape = 'u32[72,128]{1,0:T(1,128)}', space=vmem, size = 0x9000, scoped, tag = 'internal scratch']
  #allocation2 [shape = 'f32[16,32]{1,0:T(8,128)}', space=vmem, size = 0x2000, scoped, tag = 'scratch operand']
  %s0 = inlined_call_operand.vmem [shape: f32[16,32], index: 0, kind: input, shape index: {}]
  %s1 = inlined_call_operand.vmem [shape: bf16[16,32], index: 1, kind: input, shape index: {}]
  %s2 = inlined_call_operand.vmem [shape: f32[2,3,32], index: 2, kind: input, shape index: {}]
  %s3 = inlined_call_operand.vmem [shape: f32[2,3,32], index: 3, kind: input, shape index: {}]
  %s4 = inlined_call_operand.vmem [shape: bf16[2,12,32,8], index: 4, kind: input, shape index: {}]
  %s5 = inlined_call_operand.vmem [shape: f32[2,12,1,8], index: 5, kind: input, shape index: {}]
  %s6 = inlined_call_operand.vmem [shape: bf16[2,4,8,32], index: 6, kind: input, shape index: {}]
  %s7 = inlined_call_operand.vmem [shape: f32[2,1,32], index: 7, kind: input, shape index: {}]
  %s8 = inlined_call_operand.vmem [shape: bf16[2,12,32,8], index: 8, kind: input, shape index: {}]
  %s9 = inlined_call_operand.vmem [shape: f32[2,12,1,8], index: 9, kind: input, shape index: {}]
  %s10 = inlined_call_operand.vmem [shape: bf16[2,4,8,32], index: 10, kind: input, shape index: {}]
  %s11 = inlined_call_operand.vmem [shape: f32[2,1,32], index: 11, kind: input, shape index: {}]
  %s12 = inlined_call_operand.vmem [shape: bf16[2,32,2048], index: 12, kind: input, shape index: {}]
  %s13 = inlined_call_operand.vmem [shape: f32[2,1,2048], index: 13, kind: input, shape index: {}]
  %s14 = inlined_call_operand.vmem [shape: bf16[2,2048,32], index: 14, kind: input, shape index: {}]
  %s15 = inlined_call_operand.vmem [shape: f32[2,1,32], index: 15, kind: input, shape index: {}]
  %s16 = inlined_call_operand.vmem [shape: f32[1,32], index: 16, kind: input, shape index: {}]
  %s17 = inlined_call_operand.vmem [shape: f32[1,32], index: 17, kind: input, shape index: {}]
  %s18 = inlined_call_operand.hbm [shape: f32[16,32], index: 18, kind: output, shape index: {}]
  %s19 = sld [smem:[#allocation0]]
  $region113: #{tpu_custom_call.1} parent=0
    _
  %s21 = ssub.s32 1, %s19
  %s22 = scalar_select 0, %s21, %s19
  $region1: #{tpu_custom_call.1} parent=0
    #allocation3 [shape = 'u8[8192]{0}', space=vmem, size = 0x2000, scoped, tag = 'output window, operand 0, single buffered']
    #allocation4 [shape = 's32[2]{0}', space=sflag, size = 0x8, scoped, tag = 'scoped memory for tpu_custom_call.1']
    %23 = vsyncpa [#allocation4], 0
    loop: start=0, step=1, limit=4
    $region2: #{tpu_custom_call.1} parent=1 // loop_pre_header
      _
    $region3: #{tpu_custom_call.1} parent=1 // loop_header
      %s25 = sphi 0, %s29
      %p26 = scmp.ge.s32.totalorder %s25, 4
      %s33 = sphi 0, %s33
      %s35 = sphi 0, %s33
      %s36 = sphi 0, %s35
      %s50 = sphi 0, %s36
      %s54 = sphi 0, %s54
      %s56 = sphi 0, %s54
      %s57 = sphi 0, %s56
      %s71 = sphi 0, %s57
      %s77 = sphi 0, %s79
      %s80 = sphi 0, %s77
      %s81 = sphi 0, %s80
      %s97 = sphi 0, %s81
      %s103 = sphi 0, %s105
      %s106 = sphi 0, %s103
      %s107 = sphi 0, %s106
      %s123 = sphi 0, %s107
      %s129 = sphi 0, %s131
      %s132 = sphi 0, %s129
      %s133 = sphi 0, %s132
      %s149 = sphi 0, %s133
      %s155 = sphi 0, %s157
      %s158 = sphi 0, %s155
      %s159 = sphi 0, %s158
      %s175 = sphi 0, %s159
      %s181 = sphi 0, %s183
      %s184 = sphi 0, %s181
      %s185 = sphi 0, %s184
      %s201 = sphi 0, %s185
      %s207 = sphi 0, %s209
      %s210 = sphi 0, %s207
      %s211 = sphi 0, %s210
      %s227 = sphi 0, %s211
      %s233 = sphi 0, %s235
      %s236 = sphi 0, %s233
      %s237 = sphi 0, %s236
      %s253 = sphi 0, %s237
      %s259 = sphi 0, %s261
      %s262 = sphi 0, %s259
      %s263 = sphi 0, %s262
      %s279 = sphi 0, %s263
      %s285 = sphi 0, %s287
      %s288 = sphi 0, %s285
      %s289 = sphi 0, %s288
      %s305 = sphi 0, %s289
      %s311 = sphi 0, %s313
      %s314 = sphi 0, %s311
      %s315 = sphi 0, %s314
      %s331 = sphi 0, %s315
      %s337 = sphi 0, %s339
      %s340 = sphi 0, %s337
      %s341 = sphi 0, %s340
      %s357 = sphi 0, %s341
      %s363 = sphi 0, %s365
      %s366 = sphi 0, %s363
      %s367 = sphi 0, %s366
      %s383 = sphi 0, %s367
      %s389 = sphi 0, %s391
      %s392 = sphi 0, %s389
      %s393 = sphi 0, %s392
      %s409 = sphi 0, %s393
      %s415 = sphi 0, %s417
      %s418 = sphi 0, %s415
      %s419 = sphi 0, %s418
      %s435 = sphi 0, %s419
      %s439 = sphi 0, %s439
      %s441 = sphi 0, %s439
      %s442 = sphi 0, %s441
      %s456 = sphi 0, %s442
      %s460 = sphi 0, %s460
      %s462 = sphi 0, %s460
      %s463 = sphi 0, %s462
      %s477 = sphi 0, %s463
      %s481 = sphi 0, %s481
      %s483 = sphi 0, %s481
      %s484 = sphi 0, %s483
      %s498 = sphi 0, %s484
    $region4: #{tpu_custom_call.1} parent=1 // loop_header_branch
      %28 = sbr.rel (%p26) target = $region8
    $region5: #{tpu_custom_call.1} parent=1 // loop_body
      %s30 = ssub.s32 %s25, 1
      %s31 = ssub.s32 %s25, 2
      %s32 = sadd.s32 %s25, 1
      %s34 = sadd.s32 %s33, 1
      %p37 = scmp.eq.s32.totalorder %s25, 1
      %p38 = scmp.ne.s32.totalorder %s33, %s35
      %p39 = scmp.eq.s32.totalorder %s25, 0
      %p40 = por %p38, %p39
      %p41 = scmp.ne.s32.totalorder %s33, %s35
      %p42 = scmp.eq.s32.totalorder %s30, 1
      %p43 = por %p41, %p42
      %p44 = scmp.ne.s32.totalorder %s35, %s36
      %p45 = scmp.eq.s32.totalorder %s30, 0
      %p46 = por %p44, %p45
      %p47 = scmp.ne.s32.totalorder %s35, %s36
      %p48 = scmp.eq.s32.totalorder %s31, 1
      %p49 = por %p47, %p48
      %p51 = scmp.ne.s32.totalorder %s36, %s50
      %p52 = scmp.eq.s32.totalorder %s31, 0
      %p53 = por %p51, %p52
      %s55 = sadd.s32 %s54, 1
      %p58 = scmp.eq.s32.totalorder %s25, 1
      %p59 = scmp.ne.s32.totalorder %s54, %s56
      %p60 = scmp.eq.s32.totalorder %s25, 0
      %p61 = por %p59, %p60
      %p62 = scmp.ne.s32.totalorder %s54, %s56
      %p63 = scmp.eq.s32.totalorder %s30, 1
      %p64 = por %p62, %p63
      %p65 = scmp.ne.s32.totalorder %s56, %s57
      %p66 = scmp.eq.s32.totalorder %s30, 0
      %p67 = por %p65, %p66
      %p68 = scmp.ne.s32.totalorder %s56, %s57
      %p69 = scmp.eq.s32.totalorder %s31, 1
      %p70 = por %p68, %p69
      %p72 = scmp.ne.s32.totalorder %s57, %s71
      %p73 = scmp.eq.s32.totalorder %s31, 0
      %p74 = por %p72, %p73
      %s75 = ssub.s32 %s25, %s32
      %p76 = scmp.eq.s32.totalorder %s75, 0
      %s78 = sadd.s32 %s77, 1
      %s79 = scalar_select %p76, %s77, %s78
      %p82 = pneg %p76
      %p83 = scmp.eq.s32.totalorder %s25, 1
      %p84 = por %p82, %p83
      %p85 = scmp.ne.s32.totalorder %s77, %s80
      %p86 = scmp.eq.s32.totalorder %s25, 0
      %p87 = por %p85, %p86
      %p88 = scmp.ne.s32.totalorder %s77, %s80
      %p89 = scmp.eq.s32.totalorder %s30, 1
      %p90 = por %p88, %p89
      %p91 = scmp.ne.s32.totalorder %s80, %s81
      %p92 = scmp.eq.s32.totalorder %s30, 0
      %p93 = por %p91, %p92
      %p94 = scmp.ne.s32.totalorder %s80, %s81
      %p95 = scmp.eq.s32.totalorder %s31, 1
      %p96 = por %p94, %p95
      %p98 = scmp.ne.s32.totalorder %s81, %s97
      %p99 = scmp.eq.s32.totalorder %s31, 0
      %p100 = por %p98, %p99
      %s101 = ssub.s32 %s25, %s32
      %p102 = scmp.eq.s32.totalorder %s101, 0
      %s104 = sadd.s32 %s103, 1
      %s105 = scalar_select %p102, %s103, %s104
      %p108 = pneg %p102
      %p109 = scmp.eq.s32.totalorder %s25, 1
      %p110 = por %p108, %p109
      %p111 = scmp.ne.s32.totalorder %s103, %s106
      %p112 = scmp.eq.s32.totalorder %s25, 0
      %p113 = por %p111, %p112
      %p114 = scmp.ne.s32.totalorder %s103, %s106
      %p115 = scmp.eq.s32.totalorder %s30, 1
      %p116 = por %p114, %p115
      %p117 = scmp.ne.s32.totalorder %s106, %s107
      %p118 = scmp.eq.s32.totalorder %s30, 0
      %p119 = por %p117, %p118
      %p120 = scmp.ne.s32.totalorder %s106, %s107
      %p121 = scmp.eq.s32.totalorder %s31, 1
      %p122 = por %p120, %p121
      %p124 = scmp.ne.s32.totalorder %s107, %s123
      %p125 = scmp.eq.s32.totalorder %s31, 0
      %p126 = por %p124, %p125
      %s127 = ssub.s32 %s25, %s32
      %p128 = scmp.eq.s32.totalorder %s127, 0
      %s130 = sadd.s32 %s129, 1
      %s131 = scalar_select %p128, %s129, %s130
      %p134 = pneg %p128
      %p135 = scmp.eq.s32.totalorder %s25, 1
      %p136 = por %p134, %p135
      %p137 = scmp.ne.s32.totalorder %s129, %s132
      %p138 = scmp.eq.s32.totalorder %s25, 0
      %p139 = por %p137, %p138
      %p140 = scmp.ne.s32.totalorder %s129, %s132
      %p141 = scmp.eq.s32.totalorder %s30, 1
      %p142 = por %p140, %p141
      %p143 = scmp.ne.s32.totalorder %s132, %s133
      %p144 = scmp.eq.s32.totalorder %s30, 0
      %p145 = por %p143, %p144
      %p146 = scmp.ne.s32.totalorder %s132, %s133
      %p147 = scmp.eq.s32.totalorder %s31, 1
      %p148 = por %p146, %p147
      %p150 = scmp.ne.s32.totalorder %s133, %s149
      %p151 = scmp.eq.s32.totalorder %s31, 0
      %p152 = por %p150, %p151
      %s153 = ssub.s32 %s25, %s32
      %p154 = scmp.eq.s32.totalorder %s153, 0
      %s156 = sadd.s32 %s155, 1
      %s157 = scalar_select %p154, %s155, %s156
      %p160 = pneg %p154
      %p161 = scmp.eq.s32.totalorder %s25, 1
      %p162 = por %p160, %p161
      %p163 = scmp.ne.s32.totalorder %s155, %s158
      %p164 = scmp.eq.s32.totalorder %s25, 0
      %p165 = por %p163, %p164
      %p166 = scmp.ne.s32.totalorder %s155, %s158
      %p167 = scmp.eq.s32.totalorder %s30, 1
      %p168 = por %p166, %p167
      %p169 = scmp.ne.s32.totalorder %s158, %s159
      %p170 = scmp.eq.s32.totalorder %s30, 0
      %p171 = por %p169, %p170
      %p172 = scmp.ne.s32.totalorder %s158, %s159
      %p173 = scmp.eq.s32.totalorder %s31, 1
      %p174 = por %p172, %p173
      %p176 = scmp.ne.s32.totalorder %s159, %s175
      %p177 = scmp.eq.s32.totalorder %s31, 0
      %p178 = por %p176, %p177
      %s179 = ssub.s32 %s25, %s32
      %p180 = scmp.eq.s32.totalorder %s179, 0
      %s182 = sadd.s32 %s181, 1
      %s183 = scalar_select %p180, %s181, %s182
      %p186 = pneg %p180
      %p187 = scmp.eq.s32.totalorder %s25, 1
      %p188 = por %p186, %p187
      %p189 = scmp.ne.s32.totalorder %s181, %s184
      %p190 = scmp.eq.s32.totalorder %s25, 0
      %p191 = por %p189, %p190
      %p192 = scmp.ne.s32.totalorder %s181, %s184
      %p193 = scmp.eq.s32.totalorder %s30, 1
      %p194 = por %p192, %p193
      %p195 = scmp.ne.s32.totalorder %s184, %s185
      %p196 = scmp.eq.s32.totalorder %s30, 0
      %p197 = por %p195, %p196
      %p198 = scmp.ne.s32.totalorder %s184, %s185
      %p199 = scmp.eq.s32.totalorder %s31, 1
      %p200 = por %p198, %p199
      %p202 = scmp.ne.s32.totalorder %s185, %s201
      %p203 = scmp.eq.s32.totalorder %s31, 0
      %p204 = por %p202, %p203
      %s205 = ssub.s32 %s25, %s32
      %p206 = scmp.eq.s32.totalorder %s205, 0
      %s208 = sadd.s32 %s207, 1
      %s209 = scalar_select %p206, %s207, %s208
      %p212 = pneg %p206
      %p213 = scmp.eq.s32.totalorder %s25, 1
      %p214 = por %p212, %p213
      %p215 = scmp.ne.s32.totalorder %s207, %s210
      %p216 = scmp.eq.s32.totalorder %s25, 0
      %p217 = por %p215, %p216
      %p218 = scmp.ne.s32.totalorder %s207, %s210
      %p219 = scmp.eq.s32.totalorder %s30, 1
      %p220 = por %p218, %p219
      %p221 = scmp.ne.s32.totalorder %s210, %s211
      %p222 = scmp.eq.s32.totalorder %s30, 0
      %p223 = por %p221, %p222
      %p224 = scmp.ne.s32.totalorder %s210, %s211
      %p225 = scmp.eq.s32.totalorder %s31, 1
      %p226 = por %p224, %p225
      %p228 = scmp.ne.s32.totalorder %s211, %s227
      %p229 = scmp.eq.s32.totalorder %s31, 0
      %p230 = por %p228, %p229
      %s231 = ssub.s32 %s25, %s32
      %p232 = scmp.eq.s32.totalorder %s231, 0
      %s234 = sadd.s32 %s233, 1
      %s235 = scalar_select %p232, %s233, %s234
      %p238 = pneg %p232
      %p239 = scmp.eq.s32.totalorder %s25, 1
      %p240 = por %p238, %p239
      %p241 = scmp.ne.s32.totalorder %s233, %s236
      %p242 = scmp.eq.s32.totalorder %s25, 0
      %p243 = por %p241, %p242
      %p244 = scmp.ne.s32.totalorder %s233, %s236
      %p245 = scmp.eq.s32.totalorder %s30, 1
      %p246 = por %p244, %p245
      %p247 = scmp.ne.s32.totalorder %s236, %s237
      %p248 = scmp.eq.s32.totalorder %s30, 0
      %p249 = por %p247, %p248
      %p250 = scmp.ne.s32.totalorder %s236, %s237
      %p251 = scmp.eq.s32.totalorder %s31, 1
      %p252 = por %p250, %p251
      %p254 = scmp.ne.s32.totalorder %s237, %s253
      %p255 = scmp.eq.s32.totalorder %s31, 0
      %p256 = por %p254, %p255
      %s257 = ssub.s32 %s25, %s32
      %p258 = scmp.eq.s32.totalorder %s257, 0
      %s260 = sadd.s32 %s259, 1
      %s261 = scalar_select %p258, %s259, %s260
      %p264 = pneg %p258
      %p265 = scmp.eq.s32.totalorder %s25, 1
      %p266 = por %p264, %p265
      %p267 = scmp.ne.s32.totalorder %s259, %s262
      %p268 = scmp.eq.s32.totalorder %s25, 0
      %p269 = por %p267, %p268
      %p270 = scmp.ne.s32.totalorder %s259, %s262
      %p271 = scmp.eq.s32.totalorder %s30, 1
      %p272 = por %p270, %p271
      %p273 = scmp.ne.s32.totalorder %s262, %s263
      %p274 = scmp.eq.s32.totalorder %s30, 0
      %p275 = por %p273, %p274
      %p276 = scmp.ne.s32.totalorder %s262, %s263
      %p277 = scmp.eq.s32.totalorder %s31, 1
      %p278 = por %p276, %p277
      %p280 = scmp.ne.s32.totalorder %s263, %s279
      %p281 = scmp.eq.s32.totalorder %s31, 0
      %p282 = por %p280, %p281
      %s283 = ssub.s32 %s25, %s32
      %p284 = scmp.eq.s32.totalorder %s283, 0
      %s286 = sadd.s32 %s285, 1
      %s287 = scalar_select %p284, %s285, %s286
      %p290 = pneg %p284
      %p291 = scmp.eq.s32.totalorder %s25, 1
      %p292 = por %p290, %p291
      %p293 = scmp.ne.s32.totalorder %s285, %s288
      %p294 = scmp.eq.s32.totalorder %s25, 0
      %p295 = por %p293, %p294
      %p296 = scmp.ne.s32.totalorder %s285, %s288
      %p297 = scmp.eq.s32.totalorder %s30, 1
      %p298 = por %p296, %p297
      %p299 = scmp.ne.s32.totalorder %s288, %s289
      %p300 = scmp.eq.s32.totalorder %s30, 0
      %p301 = por %p299, %p300
      %p302 = scmp.ne.s32.totalorder %s288, %s289
      %p303 = scmp.eq.s32.totalorder %s31, 1
      %p304 = por %p302, %p303
      %p306 = scmp.ne.s32.totalorder %s289, %s305
      %p307 = scmp.eq.s32.totalorder %s31, 0
      %p308 = por %p306, %p307
      %s309 = ssub.s32 %s25, %s32
      %p310 = scmp.eq.s32.totalorder %s309, 0
      %s312 = sadd.s32 %s311, 1
      %s313 = scalar_select %p310, %s311, %s312
      %p316 = pneg %p310
      %p317 = scmp.eq.s32.totalorder %s25, 1
      %p318 = por %p316, %p317
      %p319 = scmp.ne.s32.totalorder %s311, %s314
      %p320 = scmp.eq.s32.totalorder %s25, 0
      %p321 = por %p319, %p320
      %p322 = scmp.ne.s32.totalorder %s311, %s314
      %p323 = scmp.eq.s32.totalorder %s30, 1
      %p324 = por %p322, %p323
      %p325 = scmp.ne.s32.totalorder %s314, %s315
      %p326 = scmp.eq.s32.totalorder %s30, 0
      %p327 = por %p325, %p326
      %p328 = scmp.ne.s32.totalorder %s314, %s315
      %p329 = scmp.eq.s32.totalorder %s31, 1
      %p330 = por %p328, %p329
      %p332 = scmp.ne.s32.totalorder %s315, %s331
      %p333 = scmp.eq.s32.totalorder %s31, 0
      %p334 = por %p332, %p333
      %s335 = ssub.s32 %s25, %s32
      %p336 = scmp.eq.s32.totalorder %s335, 0
      %s338 = sadd.s32 %s337, 1
      %s339 = scalar_select %p336, %s337, %s338
      %p342 = pneg %p336
      %p343 = scmp.eq.s32.totalorder %s25, 1
      %p344 = por %p342, %p343
      %p345 = scmp.ne.s32.totalorder %s337, %s340
      %p346 = scmp.eq.s32.totalorder %s25, 0
      %p347 = por %p345, %p346
      %p348 = scmp.ne.s32.totalorder %s337, %s340
      %p349 = scmp.eq.s32.totalorder %s30, 1
      %p350 = por %p348, %p349
      %p351 = scmp.ne.s32.totalorder %s340, %s341
      %p352 = scmp.eq.s32.totalorder %s30, 0
      %p353 = por %p351, %p352
      %p354 = scmp.ne.s32.totalorder %s340, %s341
      %p355 = scmp.eq.s32.totalorder %s31, 1
      %p356 = por %p354, %p355
      %p358 = scmp.ne.s32.totalorder %s341, %s357
      %p359 = scmp.eq.s32.totalorder %s31, 0
      %p360 = por %p358, %p359
      %s361 = ssub.s32 %s25, %s32
      %p362 = scmp.eq.s32.totalorder %s361, 0
      %s364 = sadd.s32 %s363, 1
      %s365 = scalar_select %p362, %s363, %s364
      %p368 = pneg %p362
      %p369 = scmp.eq.s32.totalorder %s25, 1
      %p370 = por %p368, %p369
      %p371 = scmp.ne.s32.totalorder %s363, %s366
      %p372 = scmp.eq.s32.totalorder %s25, 0
      %p373 = por %p371, %p372
      %p374 = scmp.ne.s32.totalorder %s363, %s366
      %p375 = scmp.eq.s32.totalorder %s30, 1
      %p376 = por %p374, %p375
      %p377 = scmp.ne.s32.totalorder %s366, %s367
      %p378 = scmp.eq.s32.totalorder %s30, 0
      %p379 = por %p377, %p378
      %p380 = scmp.ne.s32.totalorder %s366, %s367
      %p381 = scmp.eq.s32.totalorder %s31, 1
      %p382 = por %p380, %p381
      %p384 = scmp.ne.s32.totalorder %s367, %s383
      %p385 = scmp.eq.s32.totalorder %s31, 0
      %p386 = por %p384, %p385
      %s387 = ssub.s32 %s25, %s32
      %p388 = scmp.eq.s32.totalorder %s387, 0
      %s390 = sadd.s32 %s389, 1
      %s391 = scalar_select %p388, %s389, %s390
      %p394 = pneg %p388
      %p395 = scmp.eq.s32.totalorder %s25, 1
      %p396 = por %p394, %p395
      %p397 = scmp.ne.s32.totalorder %s389, %s392
      %p398 = scmp.eq.s32.totalorder %s25, 0
      %p399 = por %p397, %p398
      %p400 = scmp.ne.s32.totalorder %s389, %s392
      %p401 = scmp.eq.s32.totalorder %s30, 1
      %p402 = por %p400, %p401
      %p403 = scmp.ne.s32.totalorder %s392, %s393
      %p404 = scmp.eq.s32.totalorder %s30, 0
      %p405 = por %p403, %p404
      %p406 = scmp.ne.s32.totalorder %s392, %s393
      %p407 = scmp.eq.s32.totalorder %s31, 1
      %p408 = por %p406, %p407
      %p410 = scmp.ne.s32.totalorder %s393, %s409
      %p411 = scmp.eq.s32.totalorder %s31, 0
      %p412 = por %p410, %p411
      %s413 = ssub.s32 %s25, %s32
      %p414 = scmp.eq.s32.totalorder %s413, 0
      %s416 = sadd.s32 %s415, 1
      %s417 = scalar_select %p414, %s415, %s416
      %p420 = pneg %p414
      %p421 = scmp.eq.s32.totalorder %s25, 1
      %p422 = por %p420, %p421
      %p423 = scmp.ne.s32.totalorder %s415, %s418
      %p424 = scmp.eq.s32.totalorder %s25, 0
      %p425 = por %p423, %p424
      %p426 = scmp.ne.s32.totalorder %s415, %s418
      %p427 = scmp.eq.s32.totalorder %s30, 1
      %p428 = por %p426, %p427
      %p429 = scmp.ne.s32.totalorder %s418, %s419
      %p430 = scmp.eq.s32.totalorder %s30, 0
      %p431 = por %p429, %p430
      %p432 = scmp.ne.s32.totalorder %s418, %s419
      %p433 = scmp.eq.s32.totalorder %s31, 1
      %p434 = por %p432, %p433
      %p436 = scmp.ne.s32.totalorder %s419, %s435
      %p437 = scmp.eq.s32.totalorder %s31, 0
      %p438 = por %p436, %p437
      %s440 = sadd.s32 %s439, 1
      %p443 = scmp.eq.s32.totalorder %s25, 1
      %p444 = scmp.ne.s32.totalorder %s439, %s441
      %p445 = scmp.eq.s32.totalorder %s25, 0
      %p446 = por %p444, %p445
      %p447 = scmp.ne.s32.totalorder %s439, %s441
      %p448 = scmp.eq.s32.totalorder %s30, 1
      %p449 = por %p447, %p448
      %p450 = scmp.ne.s32.totalorder %s441, %s442
      %p451 = scmp.eq.s32.totalorder %s30, 0
      %p452 = por %p450, %p451
      %p453 = scmp.ne.s32.totalorder %s441, %s442
      %p454 = scmp.eq.s32.totalorder %s31, 1
      %p455 = por %p453, %p454
      %p457 = scmp.ne.s32.totalorder %s442, %s456
      %p458 = scmp.eq.s32.totalorder %s31, 0
      %p459 = por %p457, %p458
      %s461 = sadd.s32 %s460, 1
      %p464 = scmp.eq.s32.totalorder %s25, 1
      %p465 = scmp.ne.s32.totalorder %s460, %s462
      %p466 = scmp.eq.s32.totalorder %s25, 0
      %p467 = por %p465, %p466
      %p468 = scmp.ne.s32.totalorder %s460, %s462
      %p469 = scmp.eq.s32.totalorder %s30, 1
      %p470 = por %p468, %p469
      %p471 = scmp.ne.s32.totalorder %s462, %s463
      %p472 = scmp.eq.s32.totalorder %s30, 0
      %p473 = por %p471, %p472
      %p474 = scmp.ne.s32.totalorder %s462, %s463
      %p475 = scmp.eq.s32.totalorder %s31, 1
      %p476 = por %p474, %p475
      %p478 = scmp.ne.s32.totalorder %s463, %s477
      %p479 = scmp.eq.s32.totalorder %s31, 0
      %p480 = por %p478, %p479
      %s482 = sadd.s32 %s481, 1
      %p485 = scmp.eq.s32.totalorder %s25, 1
      %p486 = scmp.ne.s32.totalorder %s481, %s483
      %p487 = scmp.eq.s32.totalorder %s25, 0
      %p488 = por %p486, %p487
      %p489 = scmp.ne.s32.totalorder %s481, %s483
      %p490 = scmp.eq.s32.totalorder %s30, 1
      %p491 = por %p489, %p490
      %p492 = scmp.ne.s32.totalorder %s483, %s484
      %p493 = scmp.eq.s32.totalorder %s30, 0
      %p494 = por %p492, %p493
      %p495 = scmp.ne.s32.totalorder %s483, %s484
      %p496 = scmp.eq.s32.totalorder %s31, 1
      %p497 = por %p495, %p496
      %p499 = scmp.ne.s32.totalorder %s484, %s498
      %p500 = scmp.eq.s32.totalorder %s31, 0
      %p501 = por %p499, %p500
      %p502 = scmp.le.s32.totalorder 1, %s25
      %p503 = scmp.lt.s32.totalorder %s25, 3
      %p504 = pnand %p502, %p503
      %p505 = pneg %p504
      // Predicated region
      $region9: #{tpu_custom_call.1} parent=5 // pred_check
        _
      $region10: #{tpu_custom_call.1} parent=5 // pred_check_branch
        %507 = sbr.rel (%p504) target = $region12
      $region11: #{tpu_custom_call.1} parent=5 // pred_region
        %s508 = ssub.s32 %s25, 1
        // Predicated region
        $region13: #{tpu_custom_call.1} parent=11 // pred_check
          %p509 = pneg %p46
        $region14: #{tpu_custom_call.1} parent=11 // pred_check_branch
          %511 = sbr.rel (%p509) target = $region16
        $region15: #{tpu_custom_call.1} parent=11 // pred_region
          _
        $region16: #{tpu_custom_call.1} parent=11 // pred_fallthru
          _
        // Predicated region
        $region17: #{tpu_custom_call.1} parent=11 // pred_check
          %p512 = pneg %p67
        $region18: #{tpu_custom_call.1} parent=11 // pred_check_branch
          %514 = sbr.rel (%p512) target = $region20
        $region19: #{tpu_custom_call.1} parent=11 // pred_region
          _
        $region20: #{tpu_custom_call.1} parent=11 // pred_fallthru
          _
        // Predicated region
        $region21: #{tpu_custom_call.1} parent=11 // pred_check
          %p515 = pneg %p452
        $region22: #{tpu_custom_call.1} parent=11 // pred_check_branch
          %517 = sbr.rel (%p515) target = $region24
        $region23: #{tpu_custom_call.1} parent=11 // pred_region
          _
        $region24: #{tpu_custom_call.1} parent=11 // pred_fallthru
          _
        // Predicated region
        $region25: #{tpu_custom_call.1} parent=11 // pred_check
          %p518 = pneg %p473
        $region26: #{tpu_custom_call.1} parent=11 // pred_check_branch
          %520 = sbr.rel (%p518) target = $region28
        $region27: #{tpu_custom_call.1} parent=11 // pred_region
          _
        $region28: #{tpu_custom_call.1} parent=11 // pred_fallthru
          _
      $region12: #{tpu_custom_call.1} parent=5 // pred_fallthru
        _
      %p521 = scmp.lt.s32.totalorder %s25, 2
      // Predicated region
      $region29: #{tpu_custom_call.1} parent=5 // pred_check
        %p522 = pneg %p521
      $region30: #{tpu_custom_call.1} parent=5 // pred_check_branch
        %524 = sbr.rel (%p522) target = $region32
      $region31: #{tpu_custom_call.1} parent=5 // pred_region
        // Predicated region
        $region33: #{tpu_custom_call.1} parent=31 // pred_check
          %p525 = pneg %p87
        $region34: #{tpu_custom_call.1} parent=31 // pred_check_branch
          %527 = sbr.rel (%p525) target = $region36
        $region35: #{tpu_custom_call.1} parent=31 // pred_region
          %p528 = scmp.lt.s32.totalorder %s25, 1
          %s529 = scalar_select %p528, %s25, 1
          %s530 = smul.addr %s529, 4
          %s531 = scalar_lea.vmem %s2, %s530
        $region36: #{tpu_custom_call.1} parent=31 // pred_fallthru
          _
        // Predicated region
        $region37: #{tpu_custom_call.1} parent=31 // pred_check
          %p532 = pneg %p113
        $region38: #{tpu_custom_call.1} parent=31 // pred_check_branch
          %534 = sbr.rel (%p532) target = $region40
        $region39: #{tpu_custom_call.1} parent=31 // pred_region
          %p535 = scmp.lt.s32.totalorder %s25, 1
          %s536 = scalar_select %p535, %s25, 1
          %s537 = smul.addr %s536, 4
          %s538 = scalar_lea.vmem %s3, %s537
        $region40: #{tpu_custom_call.1} parent=31 // pred_fallthru
          _
        // Predicated region
        $region41: #{tpu_custom_call.1} parent=31 // pred_check
          %p539 = pneg %p139
        $region42: #{tpu_custom_call.1} parent=31 // pred_check_branch
          %541 = sbr.rel (%p539) target = $region44
        $region43: #{tpu_custom_call.1} parent=31 // pred_region
          %p542 = scmp.lt.s32.totalorder %s25, 1
          %s543 = scalar_select %p542, %s25, 1
          %s544 = smul.addr %s543, 48
          %s545 = smul.addr %s544, 4
          %s546 = scalar_lea.vmem %s4, %s545
        $region44: #{tpu_custom_call.1} parent=31 // pred_fallthru
          _
        // Predicated region
        $region45: #{tpu_custom_call.1} parent=31 // pred_check
          %p547 = pneg %p165
        $region46: #{tpu_custom_call.1} parent=31 // pred_check_branch
          %549 = sbr.rel (%p547) target = $region48
        $region47: #{tpu_custom_call.1} parent=31 // pred_region
          %p550 = scmp.lt.s32.totalorder %s25, 1
          %s551 = scalar_select %p550, %s25, 1
          %s552 = smul.addr %s551, 12
          %s553 = scalar_lea.vmem %s5, %s552
        $region48: #{tpu_custom_call.1} parent=31 // pred_fallthru
          _
        // Predicated region
        $region49: #{tpu_custom_call.1} parent=31 // pred_check
          %p554 = pneg %p191
        $region50: #{tpu_custom_call.1} parent=31 // pred_check_branch
          %556 = sbr.rel (%p554) target = $region52
        $region51: #{tpu_custom_call.1} parent=31 // pred_region
          %p557 = scmp.lt.s32.totalorder %s25, 1
          %s558 = scalar_select %p557, %s25, 1
          %s559 = smul.addr %s558, 4
          %s560 = smul.addr %s559, 4
          %s561 = scalar_lea.vmem %s6, %s560
        $region52: #{tpu_custom_call.1} parent=31 // pred_fallthru
          _
        // Predicated region
        $region53: #{tpu_custom_call.1} parent=31 // pred_check
          %p562 = pneg %p217
        $region54: #{tpu_custom_call.1} parent=31 // pred_check_branch
          %564 = sbr.rel (%p562) target = $region56
        $region55: #{tpu_custom_call.1} parent=31 // pred_region
          %p565 = scmp.lt.s32.totalorder %s25, 1
          %s566 = scalar_select %p565, %s25, 1
          %s567 = scalar_lea.vmem %s7, %s566
        $region56: #{tpu_custom_call.1} parent=31 // pred_fallthru
          _
        // Predicated region
        $region57: #{tpu_custom_call.1} parent=31 // pred_check
          %p568 = pneg %p243
        $region58: #{tpu_custom_call.1} parent=31 // pred_check_branch
          %570 = sbr.rel (%p568) target = $region60
        $region59: #{tpu_custom_call.1} parent=31 // pred_region
          %p571 = scmp.lt.s32.totalorder %s25, 1
          %s572 = scalar_select %p571, %s25, 1
          %s573 = smul.addr %s572, 48
          %s574 = smul.addr %s573, 4
          %s575 = scalar_lea.vmem %s8, %s574
        $region60: #{tpu_custom_call.1} parent=31 // pred_fallthru
          _
        // Predicated region
        $region61: #{tpu_custom_call.1} parent=31 // pred_check
          %p576 = pneg %p269
        $region62: #{tpu_custom_call.1} parent=31 // pred_check_branch
          %578 = sbr.rel (%p576) target = $region64
        $region63: #{tpu_custom_call.1} parent=31 // pred_region
          %p579 = scmp.lt.s32.totalorder %s25, 1
          %s580 = scalar_select %p579, %s25, 1
          %s581 = smul.addr %s580, 12
          %s582 = scalar_lea.vmem %s9, %s581
        $region64: #{tpu_custom_call.1} parent=31 // pred_fallthru
          _
        // Predicated region
        $region65: #{tpu_custom_call.1} parent=31 // pred_check
          %p583 = pneg %p295
        $region66: #{tpu_custom_call.1} parent=31 // pred_check_branch
          %585 = sbr.rel (%p583) target = $region68
        $region67: #{tpu_custom_call.1} parent=31 // pred_region
          %p586 = scmp.lt.s32.totalorder %s25, 1
          %s587 = scalar_select %p586, %s25, 1
          %s588 = smul.addr %s587, 4
          %s589 = smul.addr %s588, 4
          %s590 = scalar_lea.vmem %s10, %s589
        $region68: #{tpu_custom_call.1} parent=31 // pred_fallthru
          _
        // Predicated region
        $region69: #{tpu_custom_call.1} parent=31 // pred_check
          %p591 = pneg %p321
        $region70: #{tpu_custom_call.1} parent=31 // pred_check_branch
          %593 = sbr.rel (%p591) target = $region72
        $region71: #{tpu_custom_call.1} parent=31 // pred_region
          %p594 = scmp.lt.s32.totalorder %s25, 1
          %s595 = scalar_select %p594, %s25, 1
          %s596 = scalar_lea.vmem %s11, %s595
        $region72: #{tpu_custom_call.1} parent=31 // pred_fallthru
          _
        // Predicated region
        $region73: #{tpu_custom_call.1} parent=31 // pred_check
          %p597 = pneg %p347
        $region74: #{tpu_custom_call.1} parent=31 // pred_check_branch
          %599 = sbr.rel (%p597) target = $region76
        $region75: #{tpu_custom_call.1} parent=31 // pred_region
          %p600 = scmp.lt.s32.totalorder %s25, 1
          %s601 = scalar_select %p600, %s25, 1
          %s602 = smul.addr %s601, 64
          %s603 = smul.addr %s602, 4
          %s604 = scalar_lea.vmem %s12, %s603
        $region76: #{tpu_custom_call.1} parent=31 // pred_fallthru
          _
        // Predicated region
        $region77: #{tpu_custom_call.1} parent=31 // pred_check
          %p605 = pneg %p373
        $region78: #{tpu_custom_call.1} parent=31 // pred_check_branch
          %607 = sbr.rel (%p605) target = $region80
        $region79: #{tpu_custom_call.1} parent=31 // pred_region
          %p608 = scmp.lt.s32.totalorder %s25, 1
          %s609 = scalar_select %p608, %s25, 1
          %s610 = smul.addr %s609, 16
          %s611 = scalar_lea.vmem %s13, %s610
        $region80: #{tpu_custom_call.1} parent=31 // pred_fallthru
          _
        // Predicated region
        $region81: #{tpu_custom_call.1} parent=31 // pred_check
          %p612 = pneg %p399
        $region82: #{tpu_custom_call.1} parent=31 // pred_check_branch
          %614 = sbr.rel (%p612) target = $region84
        $region83: #{tpu_custom_call.1} parent=31 // pred_region
          %p615 = scmp.lt.s32.totalorder %s25, 1
          %s616 = scalar_select %p615, %s25, 1
          %s617 = smul.addr %s616, 256
          %s618 = smul.addr %s617, 4
          %s619 = scalar_lea.vmem %s14, %s618
        $region84: #{tpu_custom_call.1} parent=31 // pred_fallthru
          _
        // Predicated region
        $region85: #{tpu_custom_call.1} parent=31 // pred_check
          %p620 = pneg %p425
        $region86: #{tpu_custom_call.1} parent=31 // pred_check_branch
          %622 = sbr.rel (%p620) target = $region88
        $region87: #{tpu_custom_call.1} parent=31 // pred_region
          %p623 = scmp.lt.s32.totalorder %s25, 1
          %s624 = scalar_select %p623, %s25, 1
          %s625 = scalar_lea.vmem %s15, %s624
        $region88: #{tpu_custom_call.1} parent=31 // pred_fallthru
          _
      $region32: #{tpu_custom_call.1} parent=5 // pred_fallthru
        _
      %p626 = scmp.le.s32.totalorder 1, %s25
      %p627 = scmp.lt.s32.totalorder %s25, 3
      %p628 = pnand %p626, %p627
      %p629 = pneg %p628
      // Predicated region
      $region89: #{tpu_custom_call.1} parent=5 // pred_check
        _
      $region90: #{tpu_custom_call.1} parent=5 // pred_check_branch
        %631 = sbr.rel (%p628) target = $region92
      $region91: #{tpu_custom_call.1} parent=5 // pred_region
        %s632 = ssub.s32 %s25, 1
        %p633 = pneg %p46
        %p634 = pneg %p43
        %p635 = pneg %p67
        %p636 = pneg %p64
        %p637 = scmp.lt.s32.totalorder %s30, 1
        %s638 = scalar_select %p637, %s30, 1
        %s639 = smul.addr %s638, 4
        %s640 = scalar_lea.vmem %s2, %s639
        %p641 = pneg %p93
        %p642 = pneg %p90
        %p643 = scmp.lt.s32.totalorder %s30, 1
        %s644 = scalar_select %p643, %s30, 1
        %s645 = smul.addr %s644, 4
        %s646 = scalar_lea.vmem %s3, %s645
        %p647 = pneg %p119
        %p648 = pneg %p116
        %p649 = scmp.lt.s32.totalorder %s30, 1
        %s650 = scalar_select %p649, %s30, 1
        %s651 = smul.addr %s650, 48
        %s652 = smul.addr %s651, 4
        %s653 = scalar_lea.vmem %s4, %s652
        %p654 = pneg %p145
        %p655 = pneg %p142
        %p656 = scmp.lt.s32.totalorder %s30, 1
        %s657 = scalar_select %p656, %s30, 1
        %s658 = smul.addr %s657, 12
        %s659 = scalar_lea.vmem %s5, %s658
        %p660 = pneg %p171
        %p661 = pneg %p168
        %p662 = scmp.lt.s32.totalorder %s30, 1
        %s663 = scalar_select %p662, %s30, 1
        %s664 = smul.addr %s663, 4
        %s665 = smul.addr %s664, 4
        %s666 = scalar_lea.vmem %s6, %s665
        %p667 = pneg %p197
        %p668 = pneg %p194
        %p669 = scmp.lt.s32.totalorder %s30, 1
        %s670 = scalar_select %p669, %s30, 1
        %s671 = scalar_lea.vmem %s7, %s670
        %p672 = pneg %p223
        %p673 = pneg %p220
        %p674 = scmp.lt.s32.totalorder %s30, 1
        %s675 = scalar_select %p674, %s30, 1
        %s676 = smul.addr %s675, 48
        %s677 = smul.addr %s676, 4
        %s678 = scalar_lea.vmem %s8, %s677
        %p679 = pneg %p249
        %p680 = pneg %p246
        %p681 = scmp.lt.s32.totalorder %s30, 1
        %s682 = scalar_select %p681, %s30, 1
        %s683 = smul.addr %s682, 12
        %s684 = scalar_lea.vmem %s9, %s683
        %p685 = pneg %p275
        %p686 = pneg %p272
        %p687 = scmp.lt.s32.totalorder %s30, 1
        %s688 = scalar_select %p687, %s30, 1
        %s689 = smul.addr %s688, 4
        %s690 = smul.addr %s689, 4
        %s691 = scalar_lea.vmem %s10, %s690
        %p692 = pneg %p301
        %p693 = pneg %p298
        %p694 = scmp.lt.s32.totalorder %s30, 1
        %s695 = scalar_select %p694, %s30, 1
        %s696 = scalar_lea.vmem %s11, %s695
        %p697 = pneg %p327
        %p698 = pneg %p324
        %p699 = scmp.lt.s32.totalorder %s30, 1
        %s700 = scalar_select %p699, %s30, 1
        %s701 = smul.addr %s700, 64
        %s702 = smul.addr %s701, 4
        %s703 = scalar_lea.vmem %s12, %s702
        %p704 = pneg %p353
        %p705 = pneg %p350
        %p706 = scmp.lt.s32.totalorder %s30, 1
        %s707 = scalar_select %p706, %s30, 1
        %s708 = smul.addr %s707, 16
        %s709 = scalar_lea.vmem %s13, %s708
        %p710 = pneg %p379
        %p711 = pneg %p376
        %p712 = scmp.lt.s32.totalorder %s30, 1
        %s713 = scalar_select %p712, %s30, 1
        %s714 = smul.addr %s713, 256
        %s715 = smul.addr %s714, 4
        %s716 = scalar_lea.vmem %s14, %s715
        %p717 = pneg %p405
        %p718 = pneg %p402
        %p719 = scmp.lt.s32.totalorder %s30, 1
        %s720 = scalar_select %p719, %s30, 1
        %s721 = scalar_lea.vmem %s15, %s720
        %p722 = pneg %p431
        %p723 = pneg %p428
        %p724 = pneg %p452
        %p725 = pneg %p449
        %p726 = pneg %p473
        %p727 = pneg %p470
        %p728 = pneg %p494
        %p729 = pneg %p491
        %p730 = scmp.lt.s32.totalorder %s30, 1
        %s731 = scalar_select %p730, %s30, 1
        %s732 = smul.addr %s731, 4
        %s733 = scalar_lea.vmem %s2, %s732
        %p734 = scmp.lt.s32.totalorder %s30, 1
        %s735 = scalar_select %p734, %s30, 1
        %s736 = smul.addr %s735, 4
        %s737 = scalar_lea.vmem %s3, %s736
        %p738 = scmp.lt.s32.totalorder %s30, 1
        %s739 = scalar_select %p738, %s30, 1
        %s740 = smul.addr %s739, 48
        %s741 = smul.addr %s740, 4
        %s742 = scalar_lea.vmem %s4, %s741
        %p743 = scmp.lt.s32.totalorder %s30, 1
        %s744 = scalar_select %p743, %s30, 1
        %s745 = smul.addr %s744, 12
        %s746 = scalar_lea.vmem %s5, %s745
        %p747 = scmp.lt.s32.totalorder %s30, 1
        %s748 = scalar_select %p747, %s30, 1
        %s749 = smul.addr %s748, 4
        %s750 = smul.addr %s749, 4
        %s751 = scalar_lea.vmem %s6, %s750
        %p752 = scmp.lt.s32.totalorder %s30, 1
        %s753 = scalar_select %p752, %s30, 1
        %s754 = scalar_lea.vmem %s7, %s753
        %p755 = scmp.lt.s32.totalorder %s30, 1
        %s756 = scalar_select %p755, %s30, 1
        %s757 = smul.addr %s756, 48
        %s758 = smul.addr %s757, 4
        %s759 = scalar_lea.vmem %s8, %s758
        %p760 = scmp.lt.s32.totalorder %s30, 1
        %s761 = scalar_select %p760, %s30, 1
        %s762 = smul.addr %s761, 12
        %s763 = scalar_lea.vmem %s9, %s762
        %p764 = scmp.lt.s32.totalorder %s30, 1
        %s765 = scalar_select %p764, %s30, 1
        %s766 = smul.addr %s765, 4
        %s767 = smul.addr %s766, 4
        %s768 = scalar_lea.vmem %s10, %s767
        %p769 = scmp.lt.s32.totalorder %s30, 1
        %s770 = scalar_select %p769, %s30, 1
        %s771 = scalar_lea.vmem %s11, %s770
        %p772 = scmp.lt.s32.totalorder %s30, 1
        %s773 = scalar_select %p772, %s30, 1
        %s774 = smul.addr %s773, 64
        %s775 = smul.addr %s774, 4
        %s776 = scalar_lea.vmem %s12, %s775
        %p777 = scmp.lt.s32.totalorder %s30, 1
        %s778 = scalar_select %p777, %s30, 1
        %s779 = smul.addr %s778, 16
        %s780 = scalar_lea.vmem %s13, %s779
        %p781 = scmp.lt.s32.totalorder %s30, 1
        %s782 = scalar_select %p781, %s30, 1
        %s783 = smul.addr %s782, 256
        %s784 = smul.addr %s783, 4
        %s785 = scalar_lea.vmem %s14, %s784
        %p786 = scmp.lt.s32.totalorder %s30, 1
        %s787 = scalar_select %p786, %s30, 1
        %s788 = scalar_lea.vmem %s15, %s787
        %p790 = scmp.eq.s32.totalorder %s30, 0
        // Predicated region
        $region93: #{tpu_custom_call.1} parent=91 // pred_check
          %p791 = pneg %p790
        $region94: #{tpu_custom_call.1} parent=91 // pred_check_branch
          %793 = sbr.rel (%p791) target = $region96
        $region95: #{tpu_custom_call.1} parent=91 // pred_region
          %v794 = vld [vmem:[%s0] sm:$0xff]
          %v795 = vld [vmem:[%s0 + $0x8] sm:$0xff]
          %vm796 = vcmask 261120
          %797 = vst.msk [vmem:[#allocation2] sm:$0xff] %vm796, %v794
          %798 = vst.msk [vmem:[#allocation2 + $0x8] sm:$0xff] %vm796, %v795
        $region96: #{tpu_custom_call.1} parent=91 // pred_fallthru
          _
        %v799 = vld [vmem:[#allocation2] sm:$0xff]
        %v800 = vld [vmem:[#allocation2 + $0x8] sm:$0xff]
        %v801 = vld [vmem:[%s733] sm:$0x7]
        %v802 = vld [vmem:[%s737] sm:$0x7]
        %vm803 = vcmask 261120
        %v804 = vsel %vm803, %v799, 0.0
        %805 = vadd.xlane.f32.xlu0 %v804
        %v806 = vpop.xlane.xlu0 %805
        %v807 = vsel %vm803, %v800, 0.0
        %808 = vadd.xlane.f32.xlu0 %v807
        %v809 = vpop.xlane.xlu0 %808
        %v810 = vrcp.pop 32.0
        %v811 = vmul.f32 32.0, %v810
        %v812 = vsub.f32 1.0, %v811
        %v813 = vmul.f32 %v810, %v812
        %v814 = vadd.f32 %v810, %v813
        %vm815 = vweird.f32 %v810
        %v816 = vsel %vm815, %v810, %v814
        %v817 = vmul.f32 %v806, %v816
        %v818 = vmul.f32 %v809, %v816
        %v819 = vsub.f32 %v799, %v817
        %v820 = vsub.f32 %v800, %v818
        %v821 = vmul.f32 %v819, %v819
        %v822 = vmul.f32 %v820, %v820
        %v823 = vsel %vm803, %v821, 0.0
        %824 = vadd.xlane.f32.xlu0 %v823
        %v825 = vpop.xlane.xlu0 %824
        %v826 = vsel %vm803, %v822, 0.0
        %827 = vadd.xlane.f32.xlu0 %v826
        %v828 = vpop.xlane.xlu0 %827
        %v829 = vmul.f32 %v825, %v816
        %v830 = vmul.f32 %v828, %v816
        %v831 = vadd.f32 %v829, 1e-05
        %v832 = vadd.f32 %v830, 1e-05
        %v833 = vrsqrt.pop %v831
        %v834 = vmul.f32 %v833, %v831
        %v835 = vmul.f32 %v834, %v833
        %v836 = vmul.f32 0.5, %v835
        %v837 = vsub.f32 1.5, %v836
        %v838 = vmul.f32 %v833, %v837
        %vm839 = vweird.f32 %v831
        %vm840 = vweird.f32 %v833
        %vm841 = vmor %vm839, %vm840
        %v842 = vsel %vm841, %v833, %v838
        %v843 = vrsqrt.pop %v832
        %v844 = vmul.f32 %v843, %v832
        %v845 = vmul.f32 %v844, %v843
        %v846 = vmul.f32 0.5, %v845
        %v847 = vsub.f32 1.5, %v846
        %v848 = vmul.f32 %v843, %v847
        %vm849 = vweird.f32 %v832
        %vm850 = vweird.f32 %v843
        %vm851 = vmor %vm849, %vm850
        %v852 = vsel %vm851, %v843, %v848
        %v853 = vmul.f32 %v819, %v842
        %v854 = vmul.f32 %v820, %v852
        %v855 = vperm.slane %v801, 0
        %v856 = vmul.f32 %v853, %v855
        %v857 = vmul.f32 %v854, %v855
        %v858 = vperm.slane %v802, 0
        %v859 = vadd.f32 %v856, %v858
        %v860 = vadd.f32 %v857, %v858
        %v861 = vpack.c.bf16 %v860, %v859
        %v862 = vld [vmem:[%s742] sm:$0xf]
        %v863 = vld [vmem:[%s742 + $0x4] sm:$0xf]
        %v864 = vld [vmem:[%s742 + $0x8] sm:$0xf]
        %v865 = vld [vmem:[%s742 + $0xc] sm:$0xf]
        %v866 = vld [vmem:[%s746] sm:$0x1]
        %v868 = vperm.slane %v866, 0
        %v874 = vunpack.c.l.b16 %v862
        %v875 = vunpack.c.l.b16 %v863
        %v876 = vunpack.c.l.b16 %v864
        %v877 = vunpack.c.l.b16 %v865
        %v878 = vpack.c.b16 %v875, %v874
        %v879 = vpack.c.b16 %v877, %v876
        %v883 = vsel %vm803, %v861, 0
        %885 = vmatpush.bf16.msra.mxu0 0
        %886 = vmatpush.bf16.msra.mxu0 0
        %887 = vmatpush.bf16.msra.mxu0 0
        %888 = vmatpush.bf16.msra.mxu0 0
        %889 = vmatpush.bf16.msra.mxu0 0
        %890 = vmatpush.bf16.msra.mxu0 0
        %891 = vmatpush.bf16.msra.mxu0 %v879
        %892 = vmatpush.bf16.msra.mxu0 %v878
        %893 = vmatmul.bf16.gmra.mxu0 %v883
        %v894 = vpop.f32.mrf.mxu0
        %v895 = vadd.f32 %v868, %v894
        %v896 = vpop.f32.mrf.mxu0
        %v897 = vadd.f32 %v868, %v896
        %898 = vdwg.mxu0
        %s899 = scalar_lea.vmem %s742, 64
        %v900 = vld [vmem:[%s899] sm:$0xf]
        %v901 = vld [vmem:[%s899 + $0x4] sm:$0xf]
        %v902 = vld [vmem:[%s899 + $0x8] sm:$0xf]
        %v903 = vld [vmem:[%s899 + $0xc] sm:$0xf]
        %s904 = scalar_lea.vmem %s746, 4
        %v905 = vld [vmem:[%s904] sm:$0x1]
        %v907 = vperm.slane %v905, 0
        %v913 = vunpack.c.l.b16 %v900
        %v914 = vunpack.c.l.b16 %v901
        %v915 = vunpack.c.l.b16 %v902
        %v916 = vunpack.c.l.b16 %v903
        %v917 = vpack.c.b16 %v914, %v913
        %v918 = vpack.c.b16 %v916, %v915
        %921 = vmatpush.bf16.msra.mxu0 0
        %922 = vmatpush.bf16.msra.mxu0 0
        %923 = vmatpush.bf16.msra.mxu0 0
        %924 = vmatpush.bf16.msra.mxu0 0
        %925 = vmatpush.bf16.msra.mxu0 0
        %926 = vmatpush.bf16.msra.mxu0 0
        %927 = vmatpush.bf16.msra.mxu0 %v918
        %928 = vmatpush.bf16.msra.mxu0 %v917
        %929 = vmatmul.bf16.gmra.mxu0 %v883
        %v930 = vpop.f32.mrf.mxu0
        %v931 = vadd.f32 %v907, %v930
        %v932 = vpop.f32.mrf.mxu0
        %v933 = vadd.f32 %v907, %v932
        %934 = vdwg.mxu0
        %s935 = scalar_lea.vmem %s742, 128
        %v936 = vld [vmem:[%s935] sm:$0xf]
        %v937 = vld [vmem:[%s935 + $0x4] sm:$0xf]
        %v938 = vld [vmem:[%s935 + $0x8] sm:$0xf]
        %v939 = vld [vmem:[%s935 + $0xc] sm:$0xf]
        %s940 = scalar_lea.vmem %s746, 8
        %v941 = vld [vmem:[%s940] sm:$0x1]
        %v943 = vperm.slane %v941, 0
        %v949 = vunpack.c.l.b16 %v936
        %v950 = vunpack.c.l.b16 %v937
        %v951 = vunpack.c.l.b16 %v938
        %v952 = vunpack.c.l.b16 %v939
        %v953 = vpack.c.b16 %v950, %v949
        %v954 = vpack.c.b16 %v952, %v951
        %957 = vmatpush.bf16.msra.mxu0 0
        %958 = vmatpush.bf16.msra.mxu0 0
        %959 = vmatpush.bf16.msra.mxu0 0
        %960 = vmatpush.bf16.msra.mxu0 0
        %961 = vmatpush.bf16.msra.mxu0 0
        %962 = vmatpush.bf16.msra.mxu0 0
        %963 = vmatpush.bf16.msra.mxu0 %v954
        %964 = vmatpush.bf16.msra.mxu0 %v953
        %965 = vmatmul.bf16.gmra.mxu0 %v883
        %v966 = vpop.f32.mrf.mxu0
        %v967 = vadd.f32 %v943, %v966
        %v968 = vpop.f32.mrf.mxu0
        %v969 = vadd.f32 %v943, %v968
        %970 = vdwg.mxu0
        %vm971 = vcmask 64512
        %v973 = vsel %vm971, %v895, 0
        %v976 = vsel %vm971, %v931, 0
        %978 = vmatpush.xpose.msra.mxu0 0.0
        %979 = vmatpush.xpose.msra.mxu0 0.0
        %980 = vmatpush.xpose.msra.mxu0 0.0
        %981 = vmatpush.xpose.msra.mxu0 0.0
        %982 = vmatpush.xpose.msra.mxu0 0.0
        %983 = vmatpush.xpose.msra.mxu0 0.0
        %984 = vmatpush.xpose.msra.mxu0 0.0
        %985 = vmatpush.xpose.msra.mxu0 0.0
        %986 = vmatpush.xpose.msra.mxu0 0.0
        %987 = vmatpush.xpose.msra.mxu0 0.0
        %988 = vmatpush.xpose.msra.mxu0 0.0
        %989 = vmatpush.xpose.msra.mxu0 0.0
        %990 = vmatpush.xpose.msra.mxu0 0.0
        %991 = vmatpush.xpose.msra.mxu0 0.0
        %992 = vmatpush.xpose.msra.mxu0 0.0
        %993 = vmatpush.xpose.msra.mxu0 %v976
        %994 = vmatmul.f32.gmra.mxu0 %v973
        %v995 = vpop.f32.mrf.mxu0
        %v996 = vadd.f32 0.0, %v995
        %997 = vdwg.mxu0
        %v999 = vsel %vm971, %v897, 0
        %v1002 = vsel %vm971, %v933, 0
        %1004 = vmatpush.xpose.msra.mxu0 0.0
        %1005 = vmatpush.xpose.msra.mxu0 0.0
        %1006 = vmatpush.xpose.msra.mxu0 0.0
        %1007 = vmatpush.xpose.msra.mxu0 0.0
        %1008 = vmatpush.xpose.msra.mxu0 0.0
        %1009 = vmatpush.xpose.msra.mxu0 0.0
        %1010 = vmatpush.xpose.msra.mxu0 0.0
        %1011 = vmatpush.xpose.msra.mxu0 0.0
        %1012 = vmatpush.xpose.msra.mxu0 0.0
        %1013 = vmatpush.xpose.msra.mxu0 0.0
        %1014 = vmatpush.xpose.msra.mxu0 0.0
        %1015 = vmatpush.xpose.msra.mxu0 0.0
        %1016 = vmatpush.xpose.msra.mxu0 0.0
        %1017 = vmatpush.xpose.msra.mxu0 0.0
        %1018 = vmatpush.xpose.msra.mxu0 0.0
        %1019 = vmatpush.xpose.msra.mxu0 %v1002
        %1020 = vmatmul.f32.gmra.mxu0 %v999
        %v1021 = vpop.f32.mrf.mxu0
        %v1022 = vadd.f32 0.0, %v1021
        %1023 = vdwg.mxu0
        %v1024 = vsel %vm971, %v996, -inf
        %1025 = vmax.xlane.f32.xlu0 %v1024
        %v1026 = vpop.xlane.xlu0 %1025
        %v1027 = vsel %vm971, %v1022, -inf
        %1028 = vmax.xlane.f32.xlu0 %v1027
        %v1029 = vpop.xlane.xlu0 %1028
        %v1030 = vsub.f32 %v996, %v1026
        %v1031 = vsub.f32 %v1022, %v1029
        %v1032 = vmul.f32 %v1030, 1.442695
        %v1033 = vpow.pop %v1032
        %v1034 = vmul.f32 %v1031, 1.442695
        %v1035 = vpow.pop %v1034
        %v1036 = vsel %vm971, %v1033, 0.0
        %1037 = vadd.xlane.f32.xlu0 %v1036
        %v1038 = vpop.xlane.xlu0 %1037
        %v1039 = vsel %vm971, %v1035, 0.0
        %1040 = vadd.xlane.f32.xlu0 %v1039
        %v1041 = vpop.xlane.xlu0 %1040
        %v1042 = vrcp.pop %v1038
        %v1043 = vrcp.pop %v1041
        %v1044 = vmul.f32 %v1033, %v1042
        %v1045 = vmul.f32 %v1035, %v1043
        %v1047 = vsel %vm971, %v1044, 0
        %1049 = vmatpush.msra.mxu0 0.0
        %1050 = vmatpush.msra.mxu0 0.0
        %1051 = vmatpush.msra.mxu0 0.0
        %1052 = vmatpush.msra.mxu0 0.0
        %1053 = vmatpush.msra.mxu0 0.0
        %1054 = vmatpush.msra.mxu0 0.0
        %1055 = vmatpush.msra.mxu0 0.0
        %1056 = vmatpush.msra.mxu0 0.0
        %1057 = vmatpush.msra.mxu0 0.0
        %1058 = vmatpush.msra.mxu0 0.0
        %1059 = vmatpush.msra.mxu0 0.0
        %1060 = vmatpush.msra.mxu0 0.0
        %1061 = vmatpush.msra.mxu0 0.0
        %1062 = vmatpush.msra.mxu0 0.0
        %1063 = vmatpush.msra.mxu0 0.0
        %1064 = vmatpush.msra.mxu0 %v967
        %1065 = vmatmul.f32.gmra.mxu0 %v1047
        %v1066 = vpop.f32.mrf.mxu0
        %v1067 = vadd.f32 0.0, %v1066
        %1068 = vdwg.mxu0
        %v1070 = vsel %vm971, %v1045, 0
        %1072 = vmatpush.msra.mxu0 0.0
        %1073 = vmatpush.msra.mxu0 0.0
        %1074 = vmatpush.msra.mxu0 0.0
        %1075 = vmatpush.msra.mxu0 0.0
        %1076 = vmatpush.msra.mxu0 0.0
        %1077 = vmatpush.msra.mxu0 0.0
        %1078 = vmatpush.msra.mxu0 0.0
        %1079 = vmatpush.msra.mxu0 0.0
        %1080 = vmatpush.msra.mxu0 0.0
        %1081 = vmatpush.msra.mxu0 0.0
        %1082 = vmatpush.msra.mxu0 0.0
        %1083 = vmatpush.msra.mxu0 0.0
        %1084 = vmatpush.msra.mxu0 0.0
        %1085 = vmatpush.msra.mxu0 0.0
        %1086 = vmatpush.msra.mxu0 0.0
        %1087 = vmatpush.msra.mxu0 %v969
        %1088 = vmatmul.f32.gmra.mxu0 %v1070
        %v1089 = vpop.f32.mrf.mxu0
        %v1090 = vadd.f32 0.0, %v1089
        %1091 = vdwg.mxu0
        %v1092 = vld [vmem:[%s751] sm:$0xf]
        %v1093 = vunpack.c.l.bf16 %v1092
        %s1094 = scalar_lea.vmem %s742, 16
        %v1095 = vld [vmem:[%s1094] sm:$0xf]
        %v1096 = vld [vmem:[%s1094 + $0x4] sm:$0xf]
        %v1097 = vld [vmem:[%s1094 + $0x8] sm:$0xf]
        %v1098 = vld [vmem:[%s1094 + $0xc] sm:$0xf]
        %s1099 = scalar_lea.vmem %s746, 1
        %v1100 = vld [vmem:[%s1099] sm:$0x1]
        %v1102 = vperm.slane %v1100, 0
        %v1108 = vunpack.c.l.b16 %v1095
        %v1109 = vunpack.c.l.b16 %v1096
        %v1110 = vunpack.c.l.b16 %v1097
        %v1111 = vunpack.c.l.b16 %v1098
        %v1112 = vpack.c.b16 %v1109, %v1108
        %v1113 = vpack.c.b16 %v1111, %v1110
        %1116 = vmatpush.bf16.msra.mxu0 0
        %1117 = vmatpush.bf16.msra.mxu0 0
        %1118 = vmatpush.bf16.msra.mxu0 0
        %1119 = vmatpush.bf16.msra.mxu0 0
        %1120 = vmatpush.bf16.msra.mxu0 0
        %1121 = vmatpush.bf16.msra.mxu0 0
        %1122 = vmatpush.bf16.msra.mxu0 %v1113
        %1123 = vmatpush.bf16.msra.mxu0 %v1112
        %1124 = vmatmul.bf16.gmra.mxu0 %v883
        %v1125 = vpop.f32.mrf.mxu0
        %v1126 = vadd.f32 %v1102, %v1125
        %v1127 = vpop.f32.mrf.mxu0
        %v1128 = vadd.f32 %v1102, %v1127
        %1129 = vdwg.mxu0
        %s1130 = scalar_lea.vmem %s742, 80
        %v1131 = vld [vmem:[%s1130] sm:$0xf]
        %v1132 = vld [vmem:[%s1130 + $0x4] sm:$0xf]
        %v1133 = vld [vmem:[%s1130 + $0x8] sm:$0xf]
        %v1134 = vld [vmem:[%s1130 + $0xc] sm:$0xf]
        %s1135 = scalar_lea.vmem %s746, 5
        %v1136 = vld [vmem:[%s1135] sm:$0x1]
        %v1138 = vperm.slane %v1136, 0
        %v1144 = vunpack.c.l.b16 %v1131
        %v1145 = vunpack.c.l.b16 %v1132
        %v1146 = vunpack.c.l.b16 %v1133
        %v1147 = vunpack.c.l.b16 %v1134
        %v1148 = vpack.c.b16 %v1145, %v1144
        %v1149 = vpack.c.b16 %v1147, %v1146
        %1152 = vmatpush.bf16.msra.mxu0 0
        %1153 = vmatpush.bf16.msra.mxu0 0
        %1154 = vmatpush.bf16.msra.mxu0 0
        %1155 = vmatpush.bf16.msra.mxu0 0
        %1156 = vmatpush.bf16.msra.mxu0 0
        %1157 = vmatpush.bf16.msra.mxu0 0
        %1158 = vmatpush.bf16.msra.mxu0 %v1149
        %1159 = vmatpush.bf16.msra.mxu0 %v1148
        %1160 = vmatmul.bf16.gmra.mxu0 %v883
        %v1161 = vpop.f32.mrf.mxu0
        %v1162 = vadd.f32 %v1138, %v1161
        %v1163 = vpop.f32.mrf.mxu0
        %v1164 = vadd.f32 %v1138, %v1163
        %1165 = vdwg.mxu0
        %s1166 = scalar_lea.vmem %s742, 144
        %v1167 = vld [vmem:[%s1166] sm:$0xf]
        %v1168 = vld [vmem:[%s1166 + $0x4] sm:$0xf]
        %v1169 = vld [vmem:[%s1166 + $0x8] sm:$0xf]
        %v1170 = vld [vmem:[%s1166 + $0xc] sm:$0xf]
        %s1171 = scalar_lea.vmem %s746, 9
        %v1172 = vld [vmem:[%s1171] sm:$0x1]
        %v1174 = vperm.slane %v1172, 0
        %v1180 = vunpack.c.l.b16 %v1167
        %v1181 = vunpack.c.l.b16 %v1168
        %v1182 = vunpack.c.l.b16 %v1169
        %v1183 = vunpack.c.l.b16 %v1170
        %v1184 = vpack.c.b16 %v1181, %v1180
        %v1185 = vpack.c.b16 %v1183, %v1182
        %1188 = vmatpush.bf16.msra.mxu0 0
        %1189 = vmatpush.bf16.msra.mxu0 0
        %1190 = vmatpush.bf16.msra.mxu0 0
        %1191 = vmatpush.bf16.msra.mxu0 0
        %1192 = vmatpush.bf16.msra.mxu0 0
        %1193 = vmatpush.bf16.msra.mxu0 0
        %1194 = vmatpush.bf16.msra.mxu0 %v1185
        %1195 = vmatpush.bf16.msra.mxu0 %v1184
        %1196 = vmatmul.bf16.gmra.mxu0 %v883
        %v1197 = vpop.f32.mrf.mxu0
        %v1198 = vadd.f32 %v1174, %v1197
        %v1199 = vpop.f32.mrf.mxu0
        %v1200 = vadd.f32 %v1174, %v1199
        %1201 = vdwg.mxu0
        %v1203 = vsel %vm971, %v1126, 0
        %v1206 = vsel %vm971, %v1162, 0
        %1208 = vmatpush.xpose.msra.mxu0 0.0
        %1209 = vmatpush.xpose.msra.mxu0 0.0
        %1210 = vmatpush.xpose.msra.mxu0 0.0
        %1211 = vmatpush.xpose.msra.mxu0 0.0
        %1212 = vmatpush.xpose.msra.mxu0 0.0
        %1213 = vmatpush.xpose.msra.mxu0 0.0
        %1214 = vmatpush.xpose.msra.mxu0 0.0
        %1215 = vmatpush.xpose.msra.mxu0 0.0
        %1216 = vmatpush.xpose.msra.mxu0 0.0
        %1217 = vmatpush.xpose.msra.mxu0 0.0
        %1218 = vmatpush.xpose.msra.mxu0 0.0
        %1219 = vmatpush.xpose.msra.mxu0 0.0
        %1220 = vmatpush.xpose.msra.mxu0 0.0
        %1221 = vmatpush.xpose.msra.mxu0 0.0
        %1222 = vmatpush.xpose.msra.mxu0 0.0
        %1223 = vmatpush.xpose.msra.mxu0 %v1206
        %1224 = vmatmul.f32.gmra.mxu0 %v1203
        %v1225 = vpop.f32.mrf.mxu0
        %v1226 = vadd.f32 0.0, %v1225
        %1227 = vdwg.mxu0
        %v1229 = vsel %vm971, %v1128, 0
        %v1232 = vsel %vm971, %v1164, 0
        %1234 = vmatpush.xpose.msra.mxu0 0.0
        %1235 = vmatpush.xpose.msra.mxu0 0.0
        %1236 = vmatpush.xpose.msra.mxu0 0.0
        %1237 = vmatpush.xpose.msra.mxu0 0.0
        %1238 = vmatpush.xpose.msra.mxu0 0.0
        %1239 = vmatpush.xpose.msra.mxu0 0.0
        %1240 = vmatpush.xpose.msra.mxu0 0.0
        %1241 = vmatpush.xpose.msra.mxu0 0.0
        %1242 = vmatpush.xpose.msra.mxu0 0.0
        %1243 = vmatpush.xpose.msra.mxu0 0.0
        %1244 = vmatpush.xpose.msra.mxu0 0.0
        %1245 = vmatpush.xpose.msra.mxu0 0.0
        %1246 = vmatpush.xpose.msra.mxu0 0.0
        %1247 = vmatpush.xpose.msra.mxu0 0.0
        %1248 = vmatpush.xpose.msra.mxu0 0.0
        %1249 = vmatpush.xpose.msra.mxu0 %v1232
        %1250 = vmatmul.f32.gmra.mxu0 %v1229
        %v1251 = vpop.f32.mrf.mxu0
        %v1252 = vadd.f32 0.0, %v1251
        %1253 = vdwg.mxu0
        %v1254 = vsel %vm971, %v1226, -inf
        %1255 = vmax.xlane.f32.xlu0 %v1254
        %v1256 = vpop.xlane.xlu0 %1255
        %v1257 = vsel %vm971, %v1252, -inf
        %1258 = vmax.xlane.f32.xlu0 %v1257
        %v1259 = vpop.xlane.xlu0 %1258
        %v1260 = vsub.f32 %v1226, %v1256
        %v1261 = vsub.f32 %v1252, %v1259
        %v1262 = vmul.f32 %v1260, 1.442695
        %v1263 = vpow.pop %v1262
        %v1264 = vmul.f32 %v1261, 1.442695
        %v1265 = vpow.pop %v1264
        %v1266 = vsel %vm971, %v1263, 0.0
        %1267 = vadd.xlane.f32.xlu0 %v1266
        %v1268 = vpop.xlane.xlu0 %1267
        %v1269 = vsel %vm971, %v1265, 0.0
        %1270 = vadd.xlane.f32.xlu0 %v1269
        %v1271 = vpop.xlane.xlu0 %1270
        %v1272 = vrcp.pop %v1268
        %v1273 = vrcp.pop %v1271
        %v1274 = vmul.f32 %v1263, %v1272
        %v1275 = vmul.f32 %v1265, %v1273
        %v1277 = vsel %vm971, %v1274, 0
        %1279 = vmatpush.msra.mxu0 0.0
        %1280 = vmatpush.msra.mxu0 0.0
        %1281 = vmatpush.msra.mxu0 0.0
        %1282 = vmatpush.msra.mxu0 0.0
        %1283 = vmatpush.msra.mxu0 0.0
        %1284 = vmatpush.msra.mxu0 0.0
        %1285 = vmatpush.msra.mxu0 0.0
        %1286 = vmatpush.msra.mxu0 0.0
        %1287 = vmatpush.msra.mxu0 0.0
        %1288 = vmatpush.msra.mxu0 0.0
        %1289 = vmatpush.msra.mxu0 0.0
        %1290 = vmatpush.msra.mxu0 0.0
        %1291 = vmatpush.msra.mxu0 0.0
        %1292 = vmatpush.msra.mxu0 0.0
        %1293 = vmatpush.msra.mxu0 0.0
        %1294 = vmatpush.msra.mxu0 %v1198
        %1295 = vmatmul.f32.gmra.mxu0 %v1277
        %v1296 = vpop.f32.mrf.mxu0
        %v1297 = vadd.f32 0.0, %v1296
        %1298 = vdwg.mxu0
        %v1300 = vsel %vm971, %v1275, 0
        %1302 = vmatpush.msra.mxu0 0.0
        %1303 = vmatpush.msra.mxu0 0.0
        %1304 = vmatpush.msra.mxu0 0.0
        %1305 = vmatpush.msra.mxu0 0.0
        %1306 = vmatpush.msra.mxu0 0.0
        %1307 = vmatpush.msra.mxu0 0.0
        %1308 = vmatpush.msra.mxu0 0.0
        %1309 = vmatpush.msra.mxu0 0.0
        %1310 = vmatpush.msra.mxu0 0.0
        %1311 = vmatpush.msra.mxu0 0.0
        %1312 = vmatpush.msra.mxu0 0.0
        %1313 = vmatpush.msra.mxu0 0.0
        %1314 = vmatpush.msra.mxu0 0.0
        %1315 = vmatpush.msra.mxu0 0.0
        %1316 = vmatpush.msra.mxu0 0.0
        %1317 = vmatpush.msra.mxu0 %v1200
        %1318 = vmatmul.f32.gmra.mxu0 %v1300
        %v1319 = vpop.f32.mrf.mxu0
        %v1320 = vadd.f32 0.0, %v1319
        %1321 = vdwg.mxu0
        %s1322 = scalar_lea.vmem %s751, 4
        %v1323 = vld [vmem:[%s1322] sm:$0xf]
        %v1324 = vunpack.c.l.bf16 %v1323
        %v1326 = vsel %vm971, %v1297, 0
        %v1329 = vsel %vm971, %v1320, 0
        %1331 = vmatpush.msra.mxu0 0.0
        %1332 = vmatpush.msra.mxu0 0.0
        %1333 = vmatpush.msra.mxu0 0.0
        %1334 = vmatpush.msra.mxu0 0.0
        %1335 = vmatpush.msra.mxu0 0.0
        %1336 = vmatpush.msra.mxu0 0.0
        %1337 = vmatpush.msra.mxu0 0.0
        %1338 = vmatpush.msra.mxu0 0.0
        %1339 = vmatpush.msra.mxu0 0.0
        %1340 = vmatpush.msra.mxu0 0.0
        %1341 = vmatpush.msra.mxu0 0.0
        %1342 = vmatpush.msra.mxu0 0.0
        %1343 = vmatpush.msra.mxu0 0.0
        %1344 = vmatpush.msra.mxu0 0.0
        %1345 = vmatpush.msra.mxu0 0.0
        %1346 = vmatpush.msra.mxu0 %v1324
        %1347 = vmatmul.f32.gmra.mxu0 %v1326
        %v1348 = vpop.f32.mrf.mxu0
        %v1349 = vadd.f32 0.0, %v1348
        %1350 = vmatmul.f32.gmra.mxu0 %v1329
        %v1351 = vpop.f32.mrf.mxu0
        %v1352 = vadd.f32 0.0, %v1351
        %1353 = vdwg.mxu0
        %v1355 = vsel %vm971, %v1067, 0
        %v1358 = vsel %vm971, %v1090, 0
        %1360 = vmatpush.msra.mxu0 0.0
        %1361 = vmatpush.msra.mxu0 0.0
        %1362 = vmatpush.msra.mxu0 0.0
        %1363 = vmatpush.msra.mxu0 0.0
        %1364 = vmatpush.msra.mxu0 0.0
        %1365 = vmatpush.msra.mxu0 0.0
        %1366 = vmatpush.msra.mxu0 0.0
        %1367 = vmatpush.msra.mxu0 0.0
        %1368 = vmatpush.msra.mxu0 0.0
        %1369 = vmatpush.msra.mxu0 0.0
        %1370 = vmatpush.msra.mxu0 0.0
        %1371 = vmatpush.msra.mxu0 0.0
        %1372 = vmatpush.msra.mxu0 0.0
        %1373 = vmatpush.msra.mxu0 0.0
        %1374 = vmatpush.msra.mxu0 0.0
        %1375 = vmatpush.msra.mxu0 %v1093
        %1376 = vmatmul.f32.gmra.mxu0 %v1355
        %v1377 = vpop.f32.mrf.mxu0
        %v1378 = vadd.f32 %v1349, %v1377
        %1379 = vmatmul.f32.gmra.mxu0 %v1358
        %v1380 = vpop.f32.mrf.mxu0
        %v1381 = vadd.f32 %v1352, %v1380
        %1382 = vdwg.mxu0
        %s1383 = scalar_lea.vmem %s742, 32
        %v1384 = vld [vmem:[%s1383] sm:$0xf]
        %v1385 = vld [vmem:[%s1383 + $0x4] sm:$0xf]
        %v1386 = vld [vmem:[%s1383 + $0x8] sm:$0xf]
        %v1387 = vld [vmem:[%s1383 + $0xc] sm:$0xf]
        %s1388 = scalar_lea.vmem %s746, 2
        %v1389 = vld [vmem:[%s1388] sm:$0x1]
        %v1391 = vperm.slane %v1389, 0
        %v1397 = vunpack.c.l.b16 %v1384
        %v1398 = vunpack.c.l.b16 %v1385
        %v1399 = vunpack.c.l.b16 %v1386
        %v1400 = vunpack.c.l.b16 %v1387
        %v1401 = vpack.c.b16 %v1398, %v1397
        %v1402 = vpack.c.b16 %v1400, %v1399
        %1405 = vmatpush.bf16.msra.mxu0 0
        %1406 = vmatpush.bf16.msra.mxu0 0
        %1407 = vmatpush.bf16.msra.mxu0 0
        %1408 = vmatpush.bf16.msra.mxu0 0
        %1409 = vmatpush.bf16.msra.mxu0 0
        %1410 = vmatpush.bf16.msra.mxu0 0
        %1411 = vmatpush.bf16.msra.mxu0 %v1402
        %1412 = vmatpush.bf16.msra.mxu0 %v1401
        %1413 = vmatmul.bf16.gmra.mxu0 %v883
        %v1414 = vpop.f32.mrf.mxu0
        %v1415 = vadd.f32 %v1391, %v1414
        %v1416 = vpop.f32.mrf.mxu0
        %v1417 = vadd.f32 %v1391, %v1416
        %1418 = vdwg.mxu0
        %s1419 = scalar_lea.vmem %s742, 96
        %v1420 = vld [vmem:[%s1419] sm:$0xf]
        %v1421 = vld [vmem:[%s1419 + $0x4] sm:$0xf]
        %v1422 = vld [vmem:[%s1419 + $0x8] sm:$0xf]
        %v1423 = vld [vmem:[%s1419 + $0xc] sm:$0xf]
        %s1424 = scalar_lea.vmem %s746, 6
        %v1425 = vld [vmem:[%s1424] sm:$0x1]
        %v1427 = vperm.slane %v1425, 0
        %v1433 = vunpack.c.l.b16 %v1420
        %v1434 = vunpack.c.l.b16 %v1421
        %v1435 = vunpack.c.l.b16 %v1422
        %v1436 = vunpack.c.l.b16 %v1423
        %v1437 = vpack.c.b16 %v1434, %v1433
        %v1438 = vpack.c.b16 %v1436, %v1435
        %1441 = vmatpush.bf16.msra.mxu0 0
        %1442 = vmatpush.bf16.msra.mxu0 0
        %1443 = vmatpush.bf16.msra.mxu0 0
        %1444 = vmatpush.bf16.msra.mxu0 0
        %1445 = vmatpush.bf16.msra.mxu0 0
        %1446 = vmatpush.bf16.msra.mxu0 0
        %1447 = vmatpush.bf16.msra.mxu0 %v1438
        %1448 = vmatpush.bf16.msra.mxu0 %v1437
        %1449 = vmatmul.bf16.gmra.mxu0 %v883
        %v1450 = vpop.f32.mrf.mxu0
        %v1451 = vadd.f32 %v1427, %v1450
        %v1452 = vpop.f32.mrf.mxu0
        %v1453 = vadd.f32 %v1427, %v1452
        %1454 = vdwg.mxu0
        %s1455 = scalar_lea.vmem %s742, 160
        %v1456 = vld [vmem:[%s1455] sm:$0xf]
        %v1457 = vld [vmem:[%s1455 + $0x4] sm:$0xf]
        %v1458 = vld [vmem:[%s1455 + $0x8] sm:$0xf]
        %v1459 = vld [vmem:[%s1455 + $0xc] sm:$0xf]
        %s1460 = scalar_lea.vmem %s746, 10
        %v1461 = vld [vmem:[%s1460] sm:$0x1]
        %v1463 = vperm.slane %v1461, 0
        %v1469 = vunpack.c.l.b16 %v1456
        %v1470 = vunpack.c.l.b16 %v1457
        %v1471 = vunpack.c.l.b16 %v1458
        %v1472 = vunpack.c.l.b16 %v1459
        %v1473 = vpack.c.b16 %v1470, %v1469
        %v1474 = vpack.c.b16 %v1472, %v1471
        %1477 = vmatpush.bf16.msra.mxu0 0
        %1478 = vmatpush.bf16.msra.mxu0 0
        %1479 = vmatpush.bf16.msra.mxu0 0
        %1480 = vmatpush.bf16.msra.mxu0 0
        %1481 = vmatpush.bf16.msra.mxu0 0
        %1482 = vmatpush.bf16.msra.mxu0 0
        %1483 = vmatpush.bf16.msra.mxu0 %v1474
        %1484 = vmatpush.bf16.msra.mxu0 %v1473
        %1485 = vmatmul.bf16.gmra.mxu0 %v883
        %v1486 = vpop.f32.mrf.mxu0
        %v1487 = vadd.f32 %v1463, %v1486
        %v1488 = vpop.f32.mrf.mxu0
        %v1489 = vadd.f32 %v1463, %v1488
        %1490 = vdwg.mxu0
        %v1492 = vsel %vm971, %v1415, 0
        %v1495 = vsel %vm971, %v1451, 0
        %1497 = vmatpush.xpose.msra.mxu0 0.0
        %1498 = vmatpush.xpose.msra.mxu0 0.0
        %1499 = vmatpush.xpose.msra.mxu0 0.0
        %1500 = vmatpush.xpose.msra.mxu0 0.0
        %1501 = vmatpush.xpose.msra.mxu0 0.0
        %1502 = vmatpush.xpose.msra.mxu0 0.0
        %1503 = vmatpush.xpose.msra.mxu0 0.0
        %1504 = vmatpush.xpose.msra.mxu0 0.0
        %1505 = vmatpush.xpose.msra.mxu0 0.0
        %1506 = vmatpush.xpose.msra.mxu0 0.0
        %1507 = vmatpush.xpose.msra.mxu0 0.0
        %1508 = vmatpush.xpose.msra.mxu0 0.0
        %1509 = vmatpush.xpose.msra.mxu0 0.0
        %1510 = vmatpush.xpose.msra.mxu0 0.0
        %1511 = vmatpush.xpose.msra.mxu0 0.0
        %1512 = vmatpush.xpose.msra.mxu0 %v1495
        %1513 = vmatmul.f32.gmra.mxu0 %v1492
        %v1514 = vpop.f32.mrf.mxu0
        %v1515 = vadd.f32 0.0, %v1514
        %1516 = vdwg.mxu0
        %v1518 = vsel %vm971, %v1417, 0
        %v1521 = vsel %vm971, %v1453, 0
        %1523 = vmatpush.xpose.msra.mxu0 0.0
        %1524 = vmatpush.xpose.msra.mxu0 0.0
        %1525 = vmatpush.xpose.msra.mxu0 0.0
        %1526 = vmatpush.xpose.msra.mxu0 0.0
        %1527 = vmatpush.xpose.msra.mxu0 0.0
        %1528 = vmatpush.xpose.msra.mxu0 0.0
        %1529 = vmatpush.xpose.msra.mxu0 0.0
        %1530 = vmatpush.xpose.msra.mxu0 0.0
        %1531 = vmatpush.xpose.msra.mxu0 0.0
        %1532 = vmatpush.xpose.msra.mxu0 0.0
        %1533 = vmatpush.xpose.msra.mxu0 0.0
        %1534 = vmatpush.xpose.msra.mxu0 0.0
        %1535 = vmatpush.xpose.msra.mxu0 0.0
        %1536 = vmatpush.xpose.msra.mxu0 0.0
        %1537 = vmatpush.xpose.msra.mxu0 0.0
        %1538 = vmatpush.xpose.msra.mxu0 %v1521
        %1539 = vmatmul.f32.gmra.mxu0 %v1518
        %v1540 = vpop.f32.mrf.mxu0
        %v1541 = vadd.f32 0.0, %v1540
        %1542 = vdwg.mxu0
        %v1543 = vsel %vm971, %v1515, -inf
        %1544 = vmax.xlane.f32.xlu0 %v1543
        %v1545 = vpop.xlane.xlu0 %1544
        %v1546 = vsel %vm971, %v1541, -inf
        %1547 = vmax.xlane.f32.xlu0 %v1546
        %v1548 = vpop.xlane.xlu0 %1547
        %v1549 = vsub.f32 %v1515, %v1545
        %v1550 = vsub.f32 %v1541, %v1548
        %v1551 = vmul.f32 %v1549, 1.442695
        %v1552 = vpow.pop %v1551
        %v1553 = vmul.f32 %v1550, 1.442695
        %v1554 = vpow.pop %v1553
        %v1555 = vsel %vm971, %v1552, 0.0
        %1556 = vadd.xlane.f32.xlu0 %v1555
        %v1557 = vpop.xlane.xlu0 %1556
        %v1558 = vsel %vm971, %v1554, 0.0
        %1559 = vadd.xlane.f32.xlu0 %v1558
        %v1560 = vpop.xlane.xlu0 %1559
        %v1561 = vrcp.pop %v1557
        %v1562 = vrcp.pop %v1560
        %v1563 = vmul.f32 %v1552, %v1561
        %v1564 = vmul.f32 %v1554, %v1562
        %v1566 = vsel %vm971, %v1563, 0
        %1568 = vmatpush.msra.mxu0 0.0
        %1569 = vmatpush.msra.mxu0 0.0
        %1570 = vmatpush.msra.mxu0 0.0
        %1571 = vmatpush.msra.mxu0 0.0
        %1572 = vmatpush.msra.mxu0 0.0
        %1573 = vmatpush.msra.mxu0 0.0
        %1574 = vmatpush.msra.mxu0 0.0
        %1575 = vmatpush.msra.mxu0 0.0
        %1576 = vmatpush.msra.mxu0 0.0
        %1577 = vmatpush.msra.mxu0 0.0
        %1578 = vmatpush.msra.mxu0 0.0
        %1579 = vmatpush.msra.mxu0 0.0
        %1580 = vmatpush.msra.mxu0 0.0
        %1581 = vmatpush.msra.mxu0 0.0
        %1582 = vmatpush.msra.mxu0 0.0
        %1583 = vmatpush.msra.mxu0 %v1487
        %1584 = vmatmul.f32.gmra.mxu0 %v1566
        %v1585 = vpop.f32.mrf.mxu0
        %v1586 = vadd.f32 0.0, %v1585
        %1587 = vdwg.mxu0
        %v1589 = vsel %vm971, %v1564, 0
        %1591 = vmatpush.msra.mxu0 0.0
        %1592 = vmatpush.msra.mxu0 0.0
        %1593 = vmatpush.msra.mxu0 0.0
        %1594 = vmatpush.msra.mxu0 0.0
        %1595 = vmatpush.msra.mxu0 0.0
        %1596 = vmatpush.msra.mxu0 0.0
        %1597 = vmatpush.msra.mxu0 0.0
        %1598 = vmatpush.msra.mxu0 0.0
        %1599 = vmatpush.msra.mxu0 0.0
        %1600 = vmatpush.msra.mxu0 0.0
        %1601 = vmatpush.msra.mxu0 0.0
        %1602 = vmatpush.msra.mxu0 0.0
        %1603 = vmatpush.msra.mxu0 0.0
        %1604 = vmatpush.msra.mxu0 0.0
        %1605 = vmatpush.msra.mxu0 0.0
        %1606 = vmatpush.msra.mxu0 %v1489
        %1607 = vmatmul.f32.gmra.mxu0 %v1589
        %v1608 = vpop.f32.mrf.mxu0
        %v1609 = vadd.f32 0.0, %v1608
        %1610 = vdwg.mxu0
        %s1611 = scalar_lea.vmem %s751, 8
        %v1612 = vld [vmem:[%s1611] sm:$0xf]
        %v1613 = vunpack.c.l.bf16 %v1612
        %v1615 = vsel %vm971, %v1586, 0
        %v1618 = vsel %vm971, %v1609, 0
        %1620 = vmatpush.msra.mxu0 0.0
        %1621 = vmatpush.msra.mxu0 0.0
        %1622 = vmatpush.msra.mxu0 0.0
        %1623 = vmatpush.msra.mxu0 0.0
        %1624 = vmatpush.msra.mxu0 0.0
        %1625 = vmatpush.msra.mxu0 0.0
        %1626 = vmatpush.msra.mxu0 0.0
        %1627 = vmatpush.msra.mxu0 0.0
        %1628 = vmatpush.msra.mxu0 0.0
        %1629 = vmatpush.msra.mxu0 0.0
        %1630 = vmatpush.msra.mxu0 0.0
        %1631 = vmatpush.msra.mxu0 0.0
        %1632 = vmatpush.msra.mxu0 0.0
        %1633 = vmatpush.msra.mxu0 0.0
        %1634 = vmatpush.msra.mxu0 0.0
        %1635 = vmatpush.msra.mxu0 %v1613
        %1636 = vmatmul.f32.gmra.mxu0 %v1615
        %v1637 = vpop.f32.mrf.mxu0
        %v1638 = vadd.f32 0.0, %v1637
        %1639 = vmatmul.f32.gmra.mxu0 %v1618
        %v1640 = vpop.f32.mrf.mxu0
        %v1641 = vadd.f32 0.0, %v1640
        %1642 = vdwg.mxu0
        %v1643 = vadd.f32 %v1378, %v1638
        %v1644 = vadd.f32 %v1381, %v1641
        %s1645 = scalar_lea.vmem %s742, 48
        %v1646 = vld [vmem:[%s1645] sm:$0xf]
        %v1647 = vld [vmem:[%s1645 + $0x4] sm:$0xf]
        %v1648 = vld [vmem:[%s1645 + $0x8] sm:$0xf]
        %v1649 = vld [vmem:[%s1645 + $0xc] sm:$0xf]
        %s1650 = scalar_lea.vmem %s746, 3
        %v1651 = vld [vmem:[%s1650] sm:$0x1]
        %v1653 = vperm.slane %v1651, 0
        %v1659 = vunpack.c.l.b16 %v1646
        %v1660 = vunpack.c.l.b16 %v1647
        %v1661 = vunpack.c.l.b16 %v1648
        %v1662 = vunpack.c.l.b16 %v1649
        %v1663 = vpack.c.b16 %v1660, %v1659
        %v1664 = vpack.c.b16 %v1662, %v1661
        %1667 = vmatpush.bf16.msra.mxu0 0
        %1668 = vmatpush.bf16.msra.mxu0 0
        %1669 = vmatpush.bf16.msra.mxu0 0
        %1670 = vmatpush.bf16.msra.mxu0 0
        %1671 = vmatpush.bf16.msra.mxu0 0
        %1672 = vmatpush.bf16.msra.mxu0 0
        %1673 = vmatpush.bf16.msra.mxu0 %v1664
        %1674 = vmatpush.bf16.msra.mxu0 %v1663
        %1675 = vmatmul.bf16.gmra.mxu0 %v883
        %v1676 = vpop.f32.mrf.mxu0
        %v1677 = vadd.f32 %v1653, %v1676
        %v1678 = vpop.f32.mrf.mxu0
        %v1679 = vadd.f32 %v1653, %v1678
        %1680 = vdwg.mxu0
        %s1681 = scalar_lea.vmem %s742, 112
        %v1682 = vld [vmem:[%s1681] sm:$0xf]
        %v1683 = vld [vmem:[%s1681 + $0x4] sm:$0xf]
        %v1684 = vld [vmem:[%s1681 + $0x8] sm:$0xf]
        %v1685 = vld [vmem:[%s1681 + $0xc] sm:$0xf]
        %s1686 = scalar_lea.vmem %s746, 7
        %v1687 = vld [vmem:[%s1686] sm:$0x1]
        %v1689 = vperm.slane %v1687, 0
        %v1695 = vunpack.c.l.b16 %v1682
        %v1696 = vunpack.c.l.b16 %v1683
        %v1697 = vunpack.c.l.b16 %v1684
        %v1698 = vunpack.c.l.b16 %v1685
        %v1699 = vpack.c.b16 %v1696, %v1695
        %v1700 = vpack.c.b16 %v1698, %v1697
        %1703 = vmatpush.bf16.msra.mxu0 0
        %1704 = vmatpush.bf16.msra.mxu0 0
        %1705 = vmatpush.bf16.msra.mxu0 0
        %1706 = vmatpush.bf16.msra.mxu0 0
        %1707 = vmatpush.bf16.msra.mxu0 0
        %1708 = vmatpush.bf16.msra.mxu0 0
        %1709 = vmatpush.bf16.msra.mxu0 %v1700
        %1710 = vmatpush.bf16.msra.mxu0 %v1699
        %1711 = vmatmul.bf16.gmra.mxu0 %v883
        %v1712 = vpop.f32.mrf.mxu0
        %v1713 = vadd.f32 %v1689, %v1712
        %v1714 = vpop.f32.mrf.mxu0
        %v1715 = vadd.f32 %v1689, %v1714
        %1716 = vdwg.mxu0
        %s1717 = scalar_lea.vmem %s742, 176
        %v1718 = vld [vmem:[%s1717] sm:$0xf]
        %v1719 = vld [vmem:[%s1717 + $0x4] sm:$0xf]
        %v1720 = vld [vmem:[%s1717 + $0x8] sm:$0xf]
        %v1721 = vld [vmem:[%s1717 + $0xc] sm:$0xf]
        %s1722 = scalar_lea.vmem %s746, 11
        %v1723 = vld [vmem:[%s1722] sm:$0x1]
        %v1725 = vperm.slane %v1723, 0
        %v1731 = vunpack.c.l.b16 %v1718
        %v1732 = vunpack.c.l.b16 %v1719
        %v1733 = vunpack.c.l.b16 %v1720
        %v1734 = vunpack.c.l.b16 %v1721
        %v1735 = vpack.c.b16 %v1732, %v1731
        %v1736 = vpack.c.b16 %v1734, %v1733
        %1739 = vmatpush.bf16.msra.mxu0 0
        %1740 = vmatpush.bf16.msra.mxu0 0
        %1741 = vmatpush.bf16.msra.mxu0 0
        %1742 = vmatpush.bf16.msra.mxu0 0
        %1743 = vmatpush.bf16.msra.mxu0 0
        %1744 = vmatpush.bf16.msra.mxu0 0
        %1745 = vmatpush.bf16.msra.mxu0 %v1736
        %1746 = vmatpush.bf16.msra.mxu0 %v1735
        %1747 = vmatmul.bf16.gmra.mxu0 %v883
        %v1748 = vpop.f32.mrf.mxu0
        %v1749 = vadd.f32 %v1725, %v1748
        %v1750 = vpop.f32.mrf.mxu0
        %v1751 = vadd.f32 %v1725, %v1750
        %1752 = vdwg.mxu0
        %v1754 = vsel %vm971, %v1677, 0
        %v1757 = vsel %vm971, %v1713, 0
        %1759 = vmatpush.xpose.msra.mxu0 0.0
        %1760 = vmatpush.xpose.msra.mxu0 0.0
        %1761 = vmatpush.xpose.msra.mxu0 0.0
        %1762 = vmatpush.xpose.msra.mxu0 0.0
        %1763 = vmatpush.xpose.msra.mxu0 0.0
        %1764 = vmatpush.xpose.msra.mxu0 0.0
        %1765 = vmatpush.xpose.msra.mxu0 0.0
        %1766 = vmatpush.xpose.msra.mxu0 0.0
        %1767 = vmatpush.xpose.msra.mxu0 0.0
        %1768 = vmatpush.xpose.msra.mxu0 0.0
        %1769 = vmatpush.xpose.msra.mxu0 0.0
        %1770 = vmatpush.xpose.msra.mxu0 0.0
        %1771 = vmatpush.xpose.msra.mxu0 0.0
        %1772 = vmatpush.xpose.msra.mxu0 0.0
        %1773 = vmatpush.xpose.msra.mxu0 0.0
        %1774 = vmatpush.xpose.msra.mxu0 %v1757
        %1775 = vmatmul.f32.gmra.mxu0 %v1754
        %v1776 = vpop.f32.mrf.mxu0
        %v1777 = vadd.f32 0.0, %v1776
        %1778 = vdwg.mxu0
        %v1780 = vsel %vm971, %v1679, 0
        %v1783 = vsel %vm971, %v1715, 0
        %1785 = vmatpush.xpose.msra.mxu0 0.0
        %1786 = vmatpush.xpose.msra.mxu0 0.0
        %1787 = vmatpush.xpose.msra.mxu0 0.0
        %1788 = vmatpush.xpose.msra.mxu0 0.0
        %1789 = vmatpush.xpose.msra.mxu0 0.0
        %1790 = vmatpush.xpose.msra.mxu0 0.0
        %1791 = vmatpush.xpose.msra.mxu0 0.0
        %1792 = vmatpush.xpose.msra.mxu0 0.0
        %1793 = vmatpush.xpose.msra.mxu0 0.0
        %1794 = vmatpush.xpose.msra.mxu0 0.0
        %1795 = vmatpush.xpose.msra.mxu0 0.0
        %1796 = vmatpush.xpose.msra.mxu0 0.0
        %1797 = vmatpush.xpose.msra.mxu0 0.0
        %1798 = vmatpush.xpose.msra.mxu0 0.0
        %1799 = vmatpush.xpose.msra.mxu0 0.0
        %1800 = vmatpush.xpose.msra.mxu0 %v1783
        %1801 = vmatmul.f32.gmra.mxu0 %v1780
        %v1802 = vpop.f32.mrf.mxu0
        %v1803 = vadd.f32 0.0, %v1802
        %1804 = vdwg.mxu0
        %v1805 = vsel %vm971, %v1777, -inf
        %1806 = vmax.xlane.f32.xlu0 %v1805
        %v1807 = vpop.xlane.xlu0 %1806
        %v1808 = vsel %vm971, %v1803, -inf
        %1809 = vmax.xlane.f32.xlu0 %v1808
        %v1810 = vpop.xlane.xlu0 %1809
        %v1811 = vsub.f32 %v1777, %v1807
        %v1812 = vsub.f32 %v1803, %v1810
        %v1813 = vmul.f32 %v1811, 1.442695
        %v1814 = vpow.pop %v1813
        %v1815 = vmul.f32 %v1812, 1.442695
        %v1816 = vpow.pop %v1815
        %v1817 = vsel %vm971, %v1814, 0.0
        %1818 = vadd.xlane.f32.xlu0 %v1817
        %v1819 = vpop.xlane.xlu0 %1818
        %v1820 = vsel %vm971, %v1816, 0.0
        %1821 = vadd.xlane.f32.xlu0 %v1820
        %v1822 = vpop.xlane.xlu0 %1821
        %v1823 = vrcp.pop %v1819
        %v1824 = vrcp.pop %v1822
        %v1825 = vmul.f32 %v1814, %v1823
        %v1826 = vmul.f32 %v1816, %v1824
        %v1828 = vsel %vm971, %v1825, 0
        %1830 = vmatpush.msra.mxu0 0.0
        %1831 = vmatpush.msra.mxu0 0.0
        %1832 = vmatpush.msra.mxu0 0.0
        %1833 = vmatpush.msra.mxu0 0.0
        %1834 = vmatpush.msra.mxu0 0.0
        %1835 = vmatpush.msra.mxu0 0.0
        %1836 = vmatpush.msra.mxu0 0.0
        %1837 = vmatpush.msra.mxu0 0.0
        %1838 = vmatpush.msra.mxu0 0.0
        %1839 = vmatpush.msra.mxu0 0.0
        %1840 = vmatpush.msra.mxu0 0.0
        %1841 = vmatpush.msra.mxu0 0.0
        %1842 = vmatpush.msra.mxu0 0.0
        %1843 = vmatpush.msra.mxu0 0.0
        %1844 = vmatpush.msra.mxu0 0.0
        %1845 = vmatpush.msra.mxu0 %v1749
        %1846 = vmatmul.f32.gmra.mxu0 %v1828
        %v1847 = vpop.f32.mrf.mxu0
        %v1848 = vadd.f32 0.0, %v1847
        %1849 = vdwg.mxu0
        %v1851 = vsel %vm971, %v1826, 0
        %1853 = vmatpush.msra.mxu0 0.0
        %1854 = vmatpush.msra.mxu0 0.0
        %1855 = vmatpush.msra.mxu0 0.0
        %1856 = vmatpush.msra.mxu0 0.0
        %1857 = vmatpush.msra.mxu0 0.0
        %1858 = vmatpush.msra.mxu0 0.0
        %1859 = vmatpush.msra.mxu0 0.0
        %1860 = vmatpush.msra.mxu0 0.0
        %1861 = vmatpush.msra.mxu0 0.0
        %1862 = vmatpush.msra.mxu0 0.0
        %1863 = vmatpush.msra.mxu0 0.0
        %1864 = vmatpush.msra.mxu0 0.0
        %1865 = vmatpush.msra.mxu0 0.0
        %1866 = vmatpush.msra.mxu0 0.0
        %1867 = vmatpush.msra.mxu0 0.0
        %1868 = vmatpush.msra.mxu0 %v1751
        %1869 = vmatmul.f32.gmra.mxu0 %v1851
        %v1870 = vpop.f32.mrf.mxu0
        %v1871 = vadd.f32 0.0, %v1870
        %1872 = vdwg.mxu0
        %s1873 = scalar_lea.vmem %s751, 12
        %v1874 = vld [vmem:[%s1873] sm:$0xf]
        %v1875 = vunpack.c.l.bf16 %v1874
        %v1877 = vsel %vm971, %v1848, 0
        %v1880 = vsel %vm971, %v1871, 0
        %1882 = vmatpush.msra.mxu0 0.0
        %1883 = vmatpush.msra.mxu0 0.0
        %1884 = vmatpush.msra.mxu0 0.0
        %1885 = vmatpush.msra.mxu0 0.0
        %1886 = vmatpush.msra.mxu0 0.0
        %1887 = vmatpush.msra.mxu0 0.0
        %1888 = vmatpush.msra.mxu0 0.0
        %1889 = vmatpush.msra.mxu0 0.0
        %1890 = vmatpush.msra.mxu0 0.0
        %1891 = vmatpush.msra.mxu0 0.0
        %1892 = vmatpush.msra.mxu0 0.0
        %1893 = vmatpush.msra.mxu0 0.0
        %1894 = vmatpush.msra.mxu0 0.0
        %1895 = vmatpush.msra.mxu0 0.0
        %1896 = vmatpush.msra.mxu0 0.0
        %1897 = vmatpush.msra.mxu0 %v1875
        %1898 = vmatmul.f32.gmra.mxu0 %v1877
        %v1899 = vpop.f32.mrf.mxu0
        %v1900 = vadd.f32 0.0, %v1899
        %1901 = vmatmul.f32.gmra.mxu0 %v1880
        %v1902 = vpop.f32.mrf.mxu0
        %v1903 = vadd.f32 0.0, %v1902
        %1904 = vdwg.mxu0
        %v1905 = vadd.f32 %v1643, %v1900
        %v1906 = vadd.f32 %v1644, %v1903
        %v1907 = vadd.f32 %v799, %v1905
        %v1908 = vadd.f32 %v800, %v1906
        %v1909 = vld [vmem:[%s754] sm:$0x1]
        %v1911 = vperm.slane %v1909, 0
        %v1913 = vadd.f32 %v1907, %v1911
        %v1914 = vadd.f32 %v1908, %v1911
        %v1915 = vsel %vm803, %v1913, 0.0
        %1916 = vadd.xlane.f32.xlu0 %v1915
        %v1917 = vpop.xlane.xlu0 %1916
        %v1918 = vsel %vm803, %v1914, 0.0
        %1919 = vadd.xlane.f32.xlu0 %v1918
        %v1920 = vpop.xlane.xlu0 %1919
        %v1921 = vmul.f32 %v1917, %v816
        %v1922 = vmul.f32 %v1920, %v816
        %v1923 = vsub.f32 %v1913, %v1921
        %v1924 = vsub.f32 %v1914, %v1922
        %v1925 = vmul.f32 %v1923, %v1923
        %v1926 = vmul.f32 %v1924, %v1924
        %v1927 = vsel %vm803, %v1925, 0.0
        %1928 = vadd.xlane.f32.xlu0 %v1927
        %v1929 = vpop.xlane.xlu0 %1928
        %v1930 = vsel %vm803, %v1926, 0.0
        %1931 = vadd.xlane.f32.xlu0 %v1930
        %v1932 = vpop.xlane.xlu0 %1931
        %v1933 = vmul.f32 %v1929, %v816
        %v1934 = vmul.f32 %v1932, %v816
        %v1935 = vadd.f32 %v1933, 1e-05
        %v1936 = vadd.f32 %v1934, 1e-05
        %v1937 = vrsqrt.pop %v1935
        %v1938 = vmul.f32 %v1937, %v1935
        %v1939 = vmul.f32 %v1938, %v1937
        %v1940 = vmul.f32 0.5, %v1939
        %v1941 = vsub.f32 1.5, %v1940
        %v1942 = vmul.f32 %v1937, %v1941
        %vm1943 = vweird.f32 %v1935
        %vm1944 = vweird.f32 %v1937
        %vm1945 = vmor %vm1943, %vm1944
        %v1946 = vsel %vm1945, %v1937, %v1942
        %v1947 = vrsqrt.pop %v1936
        %v1948 = vmul.f32 %v1947, %v1936
        %v1949 = vmul.f32 %v1948, %v1947
        %v1950 = vmul.f32 0.5, %v1949
        %v1951 = vsub.f32 1.5, %v1950
        %v1952 = vmul.f32 %v1947, %v1951
        %vm1953 = vweird.f32 %v1936
        %vm1954 = vweird.f32 %v1947
        %vm1955 = vmor %vm1953, %vm1954
        %v1956 = vsel %vm1955, %v1947, %v1952
        %v1957 = vmul.f32 %v1923, %v1946
        %v1958 = vmul.f32 %v1924, %v1956
        %v1959 = vperm.slane %v801, 1
        %v1960 = vmul.f32 %v1957, %v1959
        %v1961 = vmul.f32 %v1958, %v1959
        %v1962 = vperm.slane %v802, 1
        %v1963 = vadd.f32 %v1960, %v1962
        %v1964 = vadd.f32 %v1961, %v1962
        %v1965 = vpack.c.bf16 %v1964, %v1963
        %v1966 = vld [vmem:[%s1] sm:$0xf]
        %v1967 = vld [vmem:[%s1 + $0x4] sm:$0xf]
        %v1968 = vld [vmem:[%s759] sm:$0xf]
        %v1969 = vld [vmem:[%s759 + $0x4] sm:$0xf]
        %v1970 = vld [vmem:[%s759 + $0x8] sm:$0xf]
        %v1971 = vld [vmem:[%s759 + $0xc] sm:$0xf]
        %v1972 = vld [vmem:[%s763] sm:$0x1]
        %v1974 = vperm.slane %v1972, 0
        %v1980 = vunpack.c.l.b16 %v1968
        %v1981 = vunpack.c.l.b16 %v1969
        %v1982 = vunpack.c.l.b16 %v1970
        %v1983 = vunpack.c.l.b16 %v1971
        %v1984 = vpack.c.b16 %v1981, %v1980
        %v1985 = vpack.c.b16 %v1983, %v1982
        %v1989 = vsel %vm803, %v1965, 0
        %1991 = vmatpush.bf16.msra.mxu0 0
        %1992 = vmatpush.bf16.msra.mxu0 0
        %1993 = vmatpush.bf16.msra.mxu0 0
        %1994 = vmatpush.bf16.msra.mxu0 0
        %1995 = vmatpush.bf16.msra.mxu0 0
        %1996 = vmatpush.bf16.msra.mxu0 0
        %1997 = vmatpush.bf16.msra.mxu0 %v1985
        %1998 = vmatpush.bf16.msra.mxu0 %v1984
        %1999 = vmatmul.bf16.gmra.mxu0 %v1989
        %v2000 = vpop.f32.mrf.mxu0
        %v2001 = vadd.f32 %v1974, %v2000
        %v2002 = vpop.f32.mrf.mxu0
        %v2003 = vadd.f32 %v1974, %v2002
        %2004 = vdwg.mxu0
        %s2005 = scalar_lea.vmem %s759, 64
        %v2006 = vld [vmem:[%s2005] sm:$0xf]
        %v2007 = vld [vmem:[%s2005 + $0x4] sm:$0xf]
        %v2008 = vld [vmem:[%s2005 + $0x8] sm:$0xf]
        %v2009 = vld [vmem:[%s2005 + $0xc] sm:$0xf]
        %s2010 = scalar_lea.vmem %s763, 4
        %v2011 = vld [vmem:[%s2010] sm:$0x1]
        %v2013 = vperm.slane %v2011, 0
        %v2017 = vunpack.c.l.b16 %v1966
        %v2018 = vunpack.c.l.b16 %v1967
        %v2019 = vpack.c.b16 %v2018, %v2017
        %v2024 = vunpack.c.l.b16 %v2006
        %v2025 = vunpack.c.l.b16 %v2007
        %v2026 = vunpack.c.l.b16 %v2008
        %v2027 = vunpack.c.l.b16 %v2009
        %v2028 = vpack.c.b16 %v2025, %v2024
        %v2029 = vpack.c.b16 %v2027, %v2026
        %v2033 = vsel %vm803, %v2019, 0
        %2035 = vmatpush.bf16.msra.mxu0 0
        %2036 = vmatpush.bf16.msra.mxu0 0
        %2037 = vmatpush.bf16.msra.mxu0 0
        %2038 = vmatpush.bf16.msra.mxu0 0
        %2039 = vmatpush.bf16.msra.mxu0 0
        %2040 = vmatpush.bf16.msra.mxu0 0
        %2041 = vmatpush.bf16.msra.mxu0 %v2029
        %2042 = vmatpush.bf16.msra.mxu0 %v2028
        %2043 = vmatmul.bf16.gmra.mxu0 %v2033
        %v2044 = vpop.f32.mrf.mxu0
        %v2045 = vadd.f32 %v2013, %v2044
        %v2046 = vpop.f32.mrf.mxu0
        %v2047 = vadd.f32 %v2013, %v2046
        %2048 = vdwg.mxu0
        %s2049 = scalar_lea.vmem %s759, 128
        %v2050 = vld [vmem:[%s2049] sm:$0xf]
        %v2051 = vld [vmem:[%s2049 + $0x4] sm:$0xf]
        %v2052 = vld [vmem:[%s2049 + $0x8] sm:$0xf]
        %v2053 = vld [vmem:[%s2049 + $0xc] sm:$0xf]
        %s2054 = scalar_lea.vmem %s763, 8
        %v2055 = vld [vmem:[%s2054] sm:$0x1]
        %v2057 = vperm.slane %v2055, 0
        %v2063 = vunpack.c.l.b16 %v2050
        %v2064 = vunpack.c.l.b16 %v2051
        %v2065 = vunpack.c.l.b16 %v2052
        %v2066 = vunpack.c.l.b16 %v2053
        %v2067 = vpack.c.b16 %v2064, %v2063
        %v2068 = vpack.c.b16 %v2066, %v2065
        %2071 = vmatpush.bf16.msra.mxu0 0
        %2072 = vmatpush.bf16.msra.mxu0 0
        %2073 = vmatpush.bf16.msra.mxu0 0
        %2074 = vmatpush.bf16.msra.mxu0 0
        %2075 = vmatpush.bf16.msra.mxu0 0
        %2076 = vmatpush.bf16.msra.mxu0 0
        %2077 = vmatpush.bf16.msra.mxu0 %v2068
        %2078 = vmatpush.bf16.msra.mxu0 %v2067
        %2079 = vmatmul.bf16.gmra.mxu0 %v2033
        %v2080 = vpop.f32.mrf.mxu0
        %v2081 = vadd.f32 %v2057, %v2080
        %v2082 = vpop.f32.mrf.mxu0
        %v2083 = vadd.f32 %v2057, %v2082
        %2084 = vdwg.mxu0
        %v2086 = vsel %vm971, %v2001, 0
        %v2089 = vsel %vm971, %v2045, 0
        %2091 = vmatpush.xpose.msra.mxu0 0.0
        %2092 = vmatpush.xpose.msra.mxu0 0.0
        %2093 = vmatpush.xpose.msra.mxu0 0.0
        %2094 = vmatpush.xpose.msra.mxu0 0.0
        %2095 = vmatpush.xpose.msra.mxu0 0.0
        %2096 = vmatpush.xpose.msra.mxu0 0.0
        %2097 = vmatpush.xpose.msra.mxu0 0.0
        %2098 = vmatpush.xpose.msra.mxu0 0.0
        %2099 = vmatpush.xpose.msra.mxu0 0.0
        %2100 = vmatpush.xpose.msra.mxu0 0.0
        %2101 = vmatpush.xpose.msra.mxu0 0.0
        %2102 = vmatpush.xpose.msra.mxu0 0.0
        %2103 = vmatpush.xpose.msra.mxu0 0.0
        %2104 = vmatpush.xpose.msra.mxu0 0.0
        %2105 = vmatpush.xpose.msra.mxu0 0.0
        %2106 = vmatpush.xpose.msra.mxu0 %v2089
        %2107 = vmatmul.f32.gmra.mxu0 %v2086
        %v2108 = vpop.f32.mrf.mxu0
        %v2109 = vadd.f32 0.0, %v2108
        %2110 = vdwg.mxu0
        %v2112 = vsel %vm971, %v2003, 0
        %v2115 = vsel %vm971, %v2047, 0
        %2117 = vmatpush.xpose.msra.mxu0 0.0
        %2118 = vmatpush.xpose.msra.mxu0 0.0
        %2119 = vmatpush.xpose.msra.mxu0 0.0
        %2120 = vmatpush.xpose.msra.mxu0 0.0
        %2121 = vmatpush.xpose.msra.mxu0 0.0
        %2122 = vmatpush.xpose.msra.mxu0 0.0
        %2123 = vmatpush.xpose.msra.mxu0 0.0
        %2124 = vmatpush.xpose.msra.mxu0 0.0
        %2125 = vmatpush.xpose.msra.mxu0 0.0
        %2126 = vmatpush.xpose.msra.mxu0 0.0
        %2127 = vmatpush.xpose.msra.mxu0 0.0
        %2128 = vmatpush.xpose.msra.mxu0 0.0
        %2129 = vmatpush.xpose.msra.mxu0 0.0
        %2130 = vmatpush.xpose.msra.mxu0 0.0
        %2131 = vmatpush.xpose.msra.mxu0 0.0
        %2132 = vmatpush.xpose.msra.mxu0 %v2115
        %2133 = vmatmul.f32.gmra.mxu0 %v2112
        %v2134 = vpop.f32.mrf.mxu0
        %v2135 = vadd.f32 0.0, %v2134
        %2136 = vdwg.mxu0
        %v2137 = vsel %vm971, %v2109, -inf
        %2138 = vmax.xlane.f32.xlu0 %v2137
        %v2139 = vpop.xlane.xlu0 %2138
        %v2140 = vsel %vm971, %v2135, -inf
        %2141 = vmax.xlane.f32.xlu0 %v2140
        %v2142 = vpop.xlane.xlu0 %2141
        %v2143 = vsub.f32 %v2109, %v2139
        %v2144 = vsub.f32 %v2135, %v2142
        %v2145 = vmul.f32 %v2143, 1.442695
        %v2146 = vpow.pop %v2145
        %v2147 = vmul.f32 %v2144, 1.442695
        %v2148 = vpow.pop %v2147
        %v2149 = vsel %vm971, %v2146, 0.0
        %2150 = vadd.xlane.f32.xlu0 %v2149
        %v2151 = vpop.xlane.xlu0 %2150
        %v2152 = vsel %vm971, %v2148, 0.0
        %2153 = vadd.xlane.f32.xlu0 %v2152
        %v2154 = vpop.xlane.xlu0 %2153
        %v2155 = vrcp.pop %v2151
        %v2156 = vrcp.pop %v2154
        %v2157 = vmul.f32 %v2146, %v2155
        %v2158 = vmul.f32 %v2148, %v2156
        %v2160 = vsel %vm971, %v2157, 0
        %2162 = vmatpush.msra.mxu0 0.0
        %2163 = vmatpush.msra.mxu0 0.0
        %2164 = vmatpush.msra.mxu0 0.0
        %2165 = vmatpush.msra.mxu0 0.0
        %2166 = vmatpush.msra.mxu0 0.0
        %2167 = vmatpush.msra.mxu0 0.0
        %2168 = vmatpush.msra.mxu0 0.0
        %2169 = vmatpush.msra.mxu0 0.0
        %2170 = vmatpush.msra.mxu0 0.0
        %2171 = vmatpush.msra.mxu0 0.0
        %2172 = vmatpush.msra.mxu0 0.0
        %2173 = vmatpush.msra.mxu0 0.0
        %2174 = vmatpush.msra.mxu0 0.0
        %2175 = vmatpush.msra.mxu0 0.0
        %2176 = vmatpush.msra.mxu0 0.0
        %2177 = vmatpush.msra.mxu0 %v2081
        %2178 = vmatmul.f32.gmra.mxu0 %v2160
        %v2179 = vpop.f32.mrf.mxu0
        %v2180 = vadd.f32 0.0, %v2179
        %2181 = vdwg.mxu0
        %v2183 = vsel %vm971, %v2158, 0
        %2185 = vmatpush.msra.mxu0 0.0
        %2186 = vmatpush.msra.mxu0 0.0
        %2187 = vmatpush.msra.mxu0 0.0
        %2188 = vmatpush.msra.mxu0 0.0
        %2189 = vmatpush.msra.mxu0 0.0
        %2190 = vmatpush.msra.mxu0 0.0
        %2191 = vmatpush.msra.mxu0 0.0
        %2192 = vmatpush.msra.mxu0 0.0
        %2193 = vmatpush.msra.mxu0 0.0
        %2194 = vmatpush.msra.mxu0 0.0
        %2195 = vmatpush.msra.mxu0 0.0
        %2196 = vmatpush.msra.mxu0 0.0
        %2197 = vmatpush.msra.mxu0 0.0
        %2198 = vmatpush.msra.mxu0 0.0
        %2199 = vmatpush.msra.mxu0 0.0
        %2200 = vmatpush.msra.mxu0 %v2083
        %2201 = vmatmul.f32.gmra.mxu0 %v2183
        %v2202 = vpop.f32.mrf.mxu0
        %v2203 = vadd.f32 0.0, %v2202
        %2204 = vdwg.mxu0
        %v2205 = vld [vmem:[%s768] sm:$0xf]
        %v2206 = vunpack.c.l.bf16 %v2205
        %s2207 = scalar_lea.vmem %s759, 16
        %v2208 = vld [vmem:[%s2207] sm:$0xf]
        %v2209 = vld [vmem:[%s2207 + $0x4] sm:$0xf]
        %v2210 = vld [vmem:[%s2207 + $0x8] sm:$0xf]
        %v2211 = vld [vmem:[%s2207 + $0xc] sm:$0xf]
        %s2212 = scalar_lea.vmem %s763, 1
        %v2213 = vld [vmem:[%s2212] sm:$0x1]
        %v2215 = vperm.slane %v2213, 0
        %v2221 = vunpack.c.l.b16 %v2208
        %v2222 = vunpack.c.l.b16 %v2209
        %v2223 = vunpack.c.l.b16 %v2210
        %v2224 = vunpack.c.l.b16 %v2211
        %v2225 = vpack.c.b16 %v2222, %v2221
        %v2226 = vpack.c.b16 %v2224, %v2223
        %2229 = vmatpush.bf16.msra.mxu0 0
        %2230 = vmatpush.bf16.msra.mxu0 0
        %2231 = vmatpush.bf16.msra.mxu0 0
        %2232 = vmatpush.bf16.msra.mxu0 0
        %2233 = vmatpush.bf16.msra.mxu0 0
        %2234 = vmatpush.bf16.msra.mxu0 0
        %2235 = vmatpush.bf16.msra.mxu0 %v2226
        %2236 = vmatpush.bf16.msra.mxu0 %v2225
        %2237 = vmatmul.bf16.gmra.mxu0 %v1989
        %v2238 = vpop.f32.mrf.mxu0
        %v2239 = vadd.f32 %v2215, %v2238
        %v2240 = vpop.f32.mrf.mxu0
        %v2241 = vadd.f32 %v2215, %v2240
        %2242 = vdwg.mxu0
        %s2243 = scalar_lea.vmem %s759, 80
        %v2244 = vld [vmem:[%s2243] sm:$0xf]
        %v2245 = vld [vmem:[%s2243 + $0x4] sm:$0xf]
        %v2246 = vld [vmem:[%s2243 + $0x8] sm:$0xf]
        %v2247 = vld [vmem:[%s2243 + $0xc] sm:$0xf]
        %s2248 = scalar_lea.vmem %s763, 5
        %v2249 = vld [vmem:[%s2248] sm:$0x1]
        %v2251 = vperm.slane %v2249, 0
        %v2257 = vunpack.c.l.b16 %v2244
        %v2258 = vunpack.c.l.b16 %v2245
        %v2259 = vunpack.c.l.b16 %v2246
        %v2260 = vunpack.c.l.b16 %v2247
        %v2261 = vpack.c.b16 %v2258, %v2257
        %v2262 = vpack.c.b16 %v2260, %v2259
        %2265 = vmatpush.bf16.msra.mxu0 0
        %2266 = vmatpush.bf16.msra.mxu0 0
        %2267 = vmatpush.bf16.msra.mxu0 0
        %2268 = vmatpush.bf16.msra.mxu0 0
        %2269 = vmatpush.bf16.msra.mxu0 0
        %2270 = vmatpush.bf16.msra.mxu0 0
        %2271 = vmatpush.bf16.msra.mxu0 %v2262
        %2272 = vmatpush.bf16.msra.mxu0 %v2261
        %2273 = vmatmul.bf16.gmra.mxu0 %v2033
        %v2274 = vpop.f32.mrf.mxu0
        %v2275 = vadd.f32 %v2251, %v2274
        %v2276 = vpop.f32.mrf.mxu0
        %v2277 = vadd.f32 %v2251, %v2276
        %2278 = vdwg.mxu0
        %s2279 = scalar_lea.vmem %s759, 144
        %v2280 = vld [vmem:[%s2279] sm:$0xf]
        %v2281 = vld [vmem:[%s2279 + $0x4] sm:$0xf]
        %v2282 = vld [vmem:[%s2279 + $0x8] sm:$0xf]
        %v2283 = vld [vmem:[%s2279 + $0xc] sm:$0xf]
        %s2284 = scalar_lea.vmem %s763, 9
        %v2285 = vld [vmem:[%s2284] sm:$0x1]
        %v2287 = vperm.slane %v2285, 0
        %v2293 = vunpack.c.l.b16 %v2280
        %v2294 = vunpack.c.l.b16 %v2281
        %v2295 = vunpack.c.l.b16 %v2282
        %v2296 = vunpack.c.l.b16 %v2283
        %v2297 = vpack.c.b16 %v2294, %v2293
        %v2298 = vpack.c.b16 %v2296, %v2295
        %2301 = vmatpush.bf16.msra.mxu0 0
        %2302 = vmatpush.bf16.msra.mxu0 0
        %2303 = vmatpush.bf16.msra.mxu0 0
        %2304 = vmatpush.bf16.msra.mxu0 0
        %2305 = vmatpush.bf16.msra.mxu0 0
        %2306 = vmatpush.bf16.msra.mxu0 0
        %2307 = vmatpush.bf16.msra.mxu0 %v2298
        %2308 = vmatpush.bf16.msra.mxu0 %v2297
        %2309 = vmatmul.bf16.gmra.mxu0 %v2033
        %v2310 = vpop.f32.mrf.mxu0
        %v2311 = vadd.f32 %v2287, %v2310
        %v2312 = vpop.f32.mrf.mxu0
        %v2313 = vadd.f32 %v2287, %v2312
        %2314 = vdwg.mxu0
        %v2316 = vsel %vm971, %v2239, 0
        %v2319 = vsel %vm971, %v2275, 0
        %2321 = vmatpush.xpose.msra.mxu0 0.0
        %2322 = vmatpush.xpose.msra.mxu0 0.0
        %2323 = vmatpush.xpose.msra.mxu0 0.0
        %2324 = vmatpush.xpose.msra.mxu0 0.0
        %2325 = vmatpush.xpose.msra.mxu0 0.0
        %2326 = vmatpush.xpose.msra.mxu0 0.0
        %2327 = vmatpush.xpose.msra.mxu0 0.0
        %2328 = vmatpush.xpose.msra.mxu0 0.0
        %2329 = vmatpush.xpose.msra.mxu0 0.0
        %2330 = vmatpush.xpose.msra.mxu0 0.0
        %2331 = vmatpush.xpose.msra.mxu0 0.0
        %2332 = vmatpush.xpose.msra.mxu0 0.0
        %2333 = vmatpush.xpose.msra.mxu0 0.0
        %2334 = vmatpush.xpose.msra.mxu0 0.0
        %2335 = vmatpush.xpose.msra.mxu0 0.0
        %2336 = vmatpush.xpose.msra.mxu0 %v2319
        %2337 = vmatmul.f32.gmra.mxu0 %v2316
        %v2338 = vpop.f32.mrf.mxu0
        %v2339 = vadd.f32 0.0, %v2338
        %2340 = vdwg.mxu0
        %v2342 = vsel %vm971, %v2241, 0
        %v2345 = vsel %vm971, %v2277, 0
        %2347 = vmatpush.xpose.msra.mxu0 0.0
        %2348 = vmatpush.xpose.msra.mxu0 0.0
        %2349 = vmatpush.xpose.msra.mxu0 0.0
        %2350 = vmatpush.xpose.msra.mxu0 0.0
        %2351 = vmatpush.xpose.msra.mxu0 0.0
        %2352 = vmatpush.xpose.msra.mxu0 0.0
        %2353 = vmatpush.xpose.msra.mxu0 0.0
        %2354 = vmatpush.xpose.msra.mxu0 0.0
        %2355 = vmatpush.xpose.msra.mxu0 0.0
        %2356 = vmatpush.xpose.msra.mxu0 0.0
        %2357 = vmatpush.xpose.msra.mxu0 0.0
        %2358 = vmatpush.xpose.msra.mxu0 0.0
        %2359 = vmatpush.xpose.msra.mxu0 0.0
        %2360 = vmatpush.xpose.msra.mxu0 0.0
        %2361 = vmatpush.xpose.msra.mxu0 0.0
        %2362 = vmatpush.xpose.msra.mxu0 %v2345
        %2363 = vmatmul.f32.gmra.mxu0 %v2342
        %v2364 = vpop.f32.mrf.mxu0
        %v2365 = vadd.f32 0.0, %v2364
        %2366 = vdwg.mxu0
        %v2367 = vsel %vm971, %v2339, -inf
        %2368 = vmax.xlane.f32.xlu0 %v2367
        %v2369 = vpop.xlane.xlu0 %2368
        %v2370 = vsel %vm971, %v2365, -inf
        %2371 = vmax.xlane.f32.xlu0 %v2370
        %v2372 = vpop.xlane.xlu0 %2371
        %v2373 = vsub.f32 %v2339, %v2369
        %v2374 = vsub.f32 %v2365, %v2372
        %v2375 = vmul.f32 %v2373, 1.442695
        %v2376 = vpow.pop %v2375
        %v2377 = vmul.f32 %v2374, 1.442695
        %v2378 = vpow.pop %v2377
        %v2379 = vsel %vm971, %v2376, 0.0
        %2380 = vadd.xlane.f32.xlu0 %v2379
        %v2381 = vpop.xlane.xlu0 %2380
        %v2382 = vsel %vm971, %v2378, 0.0
        %2383 = vadd.xlane.f32.xlu0 %v2382
        %v2384 = vpop.xlane.xlu0 %2383
        %v2385 = vrcp.pop %v2381
        %v2386 = vrcp.pop %v2384
        %v2387 = vmul.f32 %v2376, %v2385
        %v2388 = vmul.f32 %v2378, %v2386
        %v2390 = vsel %vm971, %v2387, 0
        %2392 = vmatpush.msra.mxu0 0.0
        %2393 = vmatpush.msra.mxu0 0.0
        %2394 = vmatpush.msra.mxu0 0.0
        %2395 = vmatpush.msra.mxu0 0.0
        %2396 = vmatpush.msra.mxu0 0.0
        %2397 = vmatpush.msra.mxu0 0.0
        %2398 = vmatpush.msra.mxu0 0.0
        %2399 = vmatpush.msra.mxu0 0.0
        %2400 = vmatpush.msra.mxu0 0.0
        %2401 = vmatpush.msra.mxu0 0.0
        %2402 = vmatpush.msra.mxu0 0.0
        %2403 = vmatpush.msra.mxu0 0.0
        %2404 = vmatpush.msra.mxu0 0.0
        %2405 = vmatpush.msra.mxu0 0.0
        %2406 = vmatpush.msra.mxu0 0.0
        %2407 = vmatpush.msra.mxu0 %v2311
        %2408 = vmatmul.f32.gmra.mxu0 %v2390
        %v2409 = vpop.f32.mrf.mxu0
        %v2410 = vadd.f32 0.0, %v2409
        %2411 = vdwg.mxu0
        %v2413 = vsel %vm971, %v2388, 0
        %2415 = vmatpush.msra.mxu0 0.0
        %2416 = vmatpush.msra.mxu0 0.0
        %2417 = vmatpush.msra.mxu0 0.0
        %2418 = vmatpush.msra.mxu0 0.0
        %2419 = vmatpush.msra.mxu0 0.0
        %2420 = vmatpush.msra.mxu0 0.0
        %2421 = vmatpush.msra.mxu0 0.0
        %2422 = vmatpush.msra.mxu0 0.0
        %2423 = vmatpush.msra.mxu0 0.0
        %2424 = vmatpush.msra.mxu0 0.0
        %2425 = vmatpush.msra.mxu0 0.0
        %2426 = vmatpush.msra.mxu0 0.0
        %2427 = vmatpush.msra.mxu0 0.0
        %2428 = vmatpush.msra.mxu0 0.0
        %2429 = vmatpush.msra.mxu0 0.0
        %2430 = vmatpush.msra.mxu0 %v2313
        %2431 = vmatmul.f32.gmra.mxu0 %v2413
        %v2432 = vpop.f32.mrf.mxu0
        %v2433 = vadd.f32 0.0, %v2432
        %2434 = vdwg.mxu0
        %s2435 = scalar_lea.vmem %s768, 4
        %v2436 = vld [vmem:[%s2435] sm:$0xf]
        %v2437 = vunpack.c.l.bf16 %v2436
        %v2439 = vsel %vm971, %v2410, 0
        %v2442 = vsel %vm971, %v2433, 0
        %2444 = vmatpush.msra.mxu0 0.0
        %2445 = vmatpush.msra.mxu0 0.0
        %2446 = vmatpush.msra.mxu0 0.0
        %2447 = vmatpush.msra.mxu0 0.0
        %2448 = vmatpush.msra.mxu0 0.0
        %2449 = vmatpush.msra.mxu0 0.0
        %2450 = vmatpush.msra.mxu0 0.0
        %2451 = vmatpush.msra.mxu0 0.0
        %2452 = vmatpush.msra.mxu0 0.0
        %2453 = vmatpush.msra.mxu0 0.0
        %2454 = vmatpush.msra.mxu0 0.0
        %2455 = vmatpush.msra.mxu0 0.0
        %2456 = vmatpush.msra.mxu0 0.0
        %2457 = vmatpush.msra.mxu0 0.0
        %2458 = vmatpush.msra.mxu0 0.0
        %2459 = vmatpush.msra.mxu0 %v2437
        %2460 = vmatmul.f32.gmra.mxu0 %v2439
        %v2461 = vpop.f32.mrf.mxu0
        %v2462 = vadd.f32 0.0, %v2461
        %2463 = vmatmul.f32.gmra.mxu0 %v2442
        %v2464 = vpop.f32.mrf.mxu0
        %v2465 = vadd.f32 0.0, %v2464
        %2466 = vdwg.mxu0
        %v2468 = vsel %vm971, %v2180, 0
        %v2471 = vsel %vm971, %v2203, 0
        %2473 = vmatpush.msra.mxu0 0.0
        %2474 = vmatpush.msra.mxu0 0.0
        %2475 = vmatpush.msra.mxu0 0.0
        %2476 = vmatpush.msra.mxu0 0.0
        %2477 = vmatpush.msra.mxu0 0.0
        %2478 = vmatpush.msra.mxu0 0.0
        %2479 = vmatpush.msra.mxu0 0.0
        %2480 = vmatpush.msra.mxu0 0.0
        %2481 = vmatpush.msra.mxu0 0.0
        %2482 = vmatpush.msra.mxu0 0.0
        %2483 = vmatpush.msra.mxu0 0.0
        %2484 = vmatpush.msra.mxu0 0.0
        %2485 = vmatpush.msra.mxu0 0.0
        %2486 = vmatpush.msra.mxu0 0.0
        %2487 = vmatpush.msra.mxu0 0.0
        %2488 = vmatpush.msra.mxu0 %v2206
        %2489 = vmatmul.f32.gmra.mxu0 %v2468
        %v2490 = vpop.f32.mrf.mxu0
        %v2491 = vadd.f32 %v2462, %v2490
        %2492 = vmatmul.f32.gmra.mxu0 %v2471
        %v2493 = vpop.f32.mrf.mxu0
        %v2494 = vadd.f32 %v2465, %v2493
        %2495 = vdwg.mxu0
        %s2496 = scalar_lea.vmem %s759, 32
        %v2497 = vld [vmem:[%s2496] sm:$0xf]
        %v2498 = vld [vmem:[%s2496 + $0x4] sm:$0xf]
        %v2499 = vld [vmem:[%s2496 + $0x8] sm:$0xf]
        %v2500 = vld [vmem:[%s2496 + $0xc] sm:$0xf]
        %s2501 = scalar_lea.vmem %s763, 2
        %v2502 = vld [vmem:[%s2501] sm:$0x1]
        %v2504 = vperm.slane %v2502, 0
        %v2510 = vunpack.c.l.b16 %v2497
        %v2511 = vunpack.c.l.b16 %v2498
        %v2512 = vunpack.c.l.b16 %v2499
        %v2513 = vunpack.c.l.b16 %v2500
        %v2514 = vpack.c.b16 %v2511, %v2510
        %v2515 = vpack.c.b16 %v2513, %v2512
        %2518 = vmatpush.bf16.msra.mxu0 0
        %2519 = vmatpush.bf16.msra.mxu0 0
        %2520 = vmatpush.bf16.msra.mxu0 0
        %2521 = vmatpush.bf16.msra.mxu0 0
        %2522 = vmatpush.bf16.msra.mxu0 0
        %2523 = vmatpush.bf16.msra.mxu0 0
        %2524 = vmatpush.bf16.msra.mxu0 %v2515
        %2525 = vmatpush.bf16.msra.mxu0 %v2514
        %2526 = vmatmul.bf16.gmra.mxu0 %v1989
        %v2527 = vpop.f32.mrf.mxu0
        %v2528 = vadd.f32 %v2504, %v2527
        %v2529 = vpop.f32.mrf.mxu0
        %v2530 = vadd.f32 %v2504, %v2529
        %2531 = vdwg.mxu0
        %s2532 = scalar_lea.vmem %s759, 96
        %v2533 = vld [vmem:[%s2532] sm:$0xf]
        %v2534 = vld [vmem:[%s2532 + $0x4] sm:$0xf]
        %v2535 = vld [vmem:[%s2532 + $0x8] sm:$0xf]
        %v2536 = vld [vmem:[%s2532 + $0xc] sm:$0xf]
        %s2537 = scalar_lea.vmem %s763, 6
        %v2538 = vld [vmem:[%s2537] sm:$0x1]
        %v2540 = vperm.slane %v2538, 0
        %v2546 = vunpack.c.l.b16 %v2533
        %v2547 = vunpack.c.l.b16 %v2534
        %v2548 = vunpack.c.l.b16 %v2535
        %v2549 = vunpack.c.l.b16 %v2536
        %v2550 = vpack.c.b16 %v2547, %v2546
        %v2551 = vpack.c.b16 %v2549, %v2548
        %2554 = vmatpush.bf16.msra.mxu0 0
        %2555 = vmatpush.bf16.msra.mxu0 0
        %2556 = vmatpush.bf16.msra.mxu0 0
        %2557 = vmatpush.bf16.msra.mxu0 0
        %2558 = vmatpush.bf16.msra.mxu0 0
        %2559 = vmatpush.bf16.msra.mxu0 0
        %2560 = vmatpush.bf16.msra.mxu0 %v2551
        %2561 = vmatpush.bf16.msra.mxu0 %v2550
        %2562 = vmatmul.bf16.gmra.mxu0 %v2033
        %v2563 = vpop.f32.mrf.mxu0
        %v2564 = vadd.f32 %v2540, %v2563
        %v2565 = vpop.f32.mrf.mxu0
        %v2566 = vadd.f32 %v2540, %v2565
        %2567 = vdwg.mxu0
        %s2568 = scalar_lea.vmem %s759, 160
        %v2569 = vld [vmem:[%s2568] sm:$0xf]
        %v2570 = vld [vmem:[%s2568 + $0x4] sm:$0xf]
        %v2571 = vld [vmem:[%s2568 + $0x8] sm:$0xf]
        %v2572 = vld [vmem:[%s2568 + $0xc] sm:$0xf]
        %s2573 = scalar_lea.vmem %s763, 10
        %v2574 = vld [vmem:[%s2573] sm:$0x1]
        %v2576 = vperm.slane %v2574, 0
        %v2582 = vunpack.c.l.b16 %v2569
        %v2583 = vunpack.c.l.b16 %v2570
        %v2584 = vunpack.c.l.b16 %v2571
        %v2585 = vunpack.c.l.b16 %v2572
        %v2586 = vpack.c.b16 %v2583, %v2582
        %v2587 = vpack.c.b16 %v2585, %v2584
        %2590 = vmatpush.bf16.msra.mxu0 0
        %2591 = vmatpush.bf16.msra.mxu0 0
        %2592 = vmatpush.bf16.msra.mxu0 0
        %2593 = vmatpush.bf16.msra.mxu0 0
        %2594 = vmatpush.bf16.msra.mxu0 0
        %2595 = vmatpush.bf16.msra.mxu0 0
        %2596 = vmatpush.bf16.msra.mxu0 %v2587
        %2597 = vmatpush.bf16.msra.mxu0 %v2586
        %2598 = vmatmul.bf16.gmra.mxu0 %v2033
        %v2599 = vpop.f32.mrf.mxu0
        %v2600 = vadd.f32 %v2576, %v2599
        %v2601 = vpop.f32.mrf.mxu0
        %v2602 = vadd.f32 %v2576, %v2601
        %2603 = vdwg.mxu0
        %v2605 = vsel %vm971, %v2528, 0
        %v2608 = vsel %vm971, %v2564, 0
        %2610 = vmatpush.xpose.msra.mxu0 0.0
        %2611 = vmatpush.xpose.msra.mxu0 0.0
        %2612 = vmatpush.xpose.msra.mxu0 0.0
        %2613 = vmatpush.xpose.msra.mxu0 0.0
        %2614 = vmatpush.xpose.msra.mxu0 0.0
        %2615 = vmatpush.xpose.msra.mxu0 0.0
        %2616 = vmatpush.xpose.msra.mxu0 0.0
        %2617 = vmatpush.xpose.msra.mxu0 0.0
        %2618 = vmatpush.xpose.msra.mxu0 0.0
        %2619 = vmatpush.xpose.msra.mxu0 0.0
        %2620 = vmatpush.xpose.msra.mxu0 0.0
        %2621 = vmatpush.xpose.msra.mxu0 0.0
        %2622 = vmatpush.xpose.msra.mxu0 0.0
        %2623 = vmatpush.xpose.msra.mxu0 0.0
        %2624 = vmatpush.xpose.msra.mxu0 0.0
        %2625 = vmatpush.xpose.msra.mxu0 %v2608
        %2626 = vmatmul.f32.gmra.mxu0 %v2605
        %v2627 = vpop.f32.mrf.mxu0
        %v2628 = vadd.f32 0.0, %v2627
        %2629 = vdwg.mxu0
        %v2631 = vsel %vm971, %v2530, 0
        %v2634 = vsel %vm971, %v2566, 0
        %2636 = vmatpush.xpose.msra.mxu0 0.0
        %2637 = vmatpush.xpose.msra.mxu0 0.0
        %2638 = vmatpush.xpose.msra.mxu0 0.0
        %2639 = vmatpush.xpose.msra.mxu0 0.0
        %2640 = vmatpush.xpose.msra.mxu0 0.0
        %2641 = vmatpush.xpose.msra.mxu0 0.0
        %2642 = vmatpush.xpose.msra.mxu0 0.0
        %2643 = vmatpush.xpose.msra.mxu0 0.0
        %2644 = vmatpush.xpose.msra.mxu0 0.0
        %2645 = vmatpush.xpose.msra.mxu0 0.0
        %2646 = vmatpush.xpose.msra.mxu0 0.0
        %2647 = vmatpush.xpose.msra.mxu0 0.0
        %2648 = vmatpush.xpose.msra.mxu0 0.0
        %2649 = vmatpush.xpose.msra.mxu0 0.0
        %2650 = vmatpush.xpose.msra.mxu0 0.0
        %2651 = vmatpush.xpose.msra.mxu0 %v2634
        %2652 = vmatmul.f32.gmra.mxu0 %v2631
        %v2653 = vpop.f32.mrf.mxu0
        %v2654 = vadd.f32 0.0, %v2653
        %2655 = vdwg.mxu0
        %v2656 = vsel %vm971, %v2628, -inf
        %2657 = vmax.xlane.f32.xlu0 %v2656
        %v2658 = vpop.xlane.xlu0 %2657
        %v2659 = vsel %vm971, %v2654, -inf
        %2660 = vmax.xlane.f32.xlu0 %v2659
        %v2661 = vpop.xlane.xlu0 %2660
        %v2662 = vsub.f32 %v2628, %v2658
        %v2663 = vsub.f32 %v2654, %v2661
        %v2664 = vmul.f32 %v2662, 1.442695
        %v2665 = vpow.pop %v2664
        %v2666 = vmul.f32 %v2663, 1.442695
        %v2667 = vpow.pop %v2666
        %v2668 = vsel %vm971, %v2665, 0.0
        %2669 = vadd.xlane.f32.xlu0 %v2668
        %v2670 = vpop.xlane.xlu0 %2669
        %v2671 = vsel %vm971, %v2667, 0.0
        %2672 = vadd.xlane.f32.xlu0 %v2671
        %v2673 = vpop.xlane.xlu0 %2672
        %v2674 = vrcp.pop %v2670
        %v2675 = vrcp.pop %v2673
        %v2676 = vmul.f32 %v2665, %v2674
        %v2677 = vmul.f32 %v2667, %v2675
        %v2679 = vsel %vm971, %v2676, 0
        %2681 = vmatpush.msra.mxu0 0.0
        %2682 = vmatpush.msra.mxu0 0.0
        %2683 = vmatpush.msra.mxu0 0.0
        %2684 = vmatpush.msra.mxu0 0.0
        %2685 = vmatpush.msra.mxu0 0.0
        %2686 = vmatpush.msra.mxu0 0.0
        %2687 = vmatpush.msra.mxu0 0.0
        %2688 = vmatpush.msra.mxu0 0.0
        %2689 = vmatpush.msra.mxu0 0.0
        %2690 = vmatpush.msra.mxu0 0.0
        %2691 = vmatpush.msra.mxu0 0.0
        %2692 = vmatpush.msra.mxu0 0.0
        %2693 = vmatpush.msra.mxu0 0.0
        %2694 = vmatpush.msra.mxu0 0.0
        %2695 = vmatpush.msra.mxu0 0.0
        %2696 = vmatpush.msra.mxu0 %v2600
        %2697 = vmatmul.f32.gmra.mxu0 %v2679
        %v2698 = vpop.f32.mrf.mxu0
        %v2699 = vadd.f32 0.0, %v2698
        %2700 = vdwg.mxu0
        %v2702 = vsel %vm971, %v2677, 0
        %2704 = vmatpush.msra.mxu0 0.0
        %2705 = vmatpush.msra.mxu0 0.0
        %2706 = vmatpush.msra.mxu0 0.0
        %2707 = vmatpush.msra.mxu0 0.0
        %2708 = vmatpush.msra.mxu0 0.0
        %2709 = vmatpush.msra.mxu0 0.0
        %2710 = vmatpush.msra.mxu0 0.0
        %2711 = vmatpush.msra.mxu0 0.0
        %2712 = vmatpush.msra.mxu0 0.0
        %2713 = vmatpush.msra.mxu0 0.0
        %2714 = vmatpush.msra.mxu0 0.0
        %2715 = vmatpush.msra.mxu0 0.0
        %2716 = vmatpush.msra.mxu0 0.0
        %2717 = vmatpush.msra.mxu0 0.0
        %2718 = vmatpush.msra.mxu0 0.0
        %2719 = vmatpush.msra.mxu0 %v2602
        %2720 = vmatmul.f32.gmra.mxu0 %v2702
        %v2721 = vpop.f32.mrf.mxu0
        %v2722 = vadd.f32 0.0, %v2721
        %2723 = vdwg.mxu0
        %s2724 = scalar_lea.vmem %s768, 8
        %v2725 = vld [vmem:[%s2724] sm:$0xf]
        %v2726 = vunpack.c.l.bf16 %v2725
        %v2728 = vsel %vm971, %v2699, 0
        %v2731 = vsel %vm971, %v2722, 0
        %2733 = vmatpush.msra.mxu0 0.0
        %2734 = vmatpush.msra.mxu0 0.0
        %2735 = vmatpush.msra.mxu0 0.0
        %2736 = vmatpush.msra.mxu0 0.0
        %2737 = vmatpush.msra.mxu0 0.0
        %2738 = vmatpush.msra.mxu0 0.0
        %2739 = vmatpush.msra.mxu0 0.0
        %2740 = vmatpush.msra.mxu0 0.0
        %2741 = vmatpush.msra.mxu0 0.0
        %2742 = vmatpush.msra.mxu0 0.0
        %2743 = vmatpush.msra.mxu0 0.0
        %2744 = vmatpush.msra.mxu0 0.0
        %2745 = vmatpush.msra.mxu0 0.0
        %2746 = vmatpush.msra.mxu0 0.0
        %2747 = vmatpush.msra.mxu0 0.0
        %2748 = vmatpush.msra.mxu0 %v2726
        %2749 = vmatmul.f32.gmra.mxu0 %v2728
        %v2750 = vpop.f32.mrf.mxu0
        %v2751 = vadd.f32 0.0, %v2750
        %2752 = vmatmul.f32.gmra.mxu0 %v2731
        %v2753 = vpop.f32.mrf.mxu0
        %v2754 = vadd.f32 0.0, %v2753
        %2755 = vdwg.mxu0
        %v2756 = vadd.f32 %v2491, %v2751
        %v2757 = vadd.f32 %v2494, %v2754
        %s2758 = scalar_lea.vmem %s759, 48
        %v2759 = vld [vmem:[%s2758] sm:$0xf]
        %v2760 = vld [vmem:[%s2758 + $0x4] sm:$0xf]
        %v2761 = vld [vmem:[%s2758 + $0x8] sm:$0xf]
        %v2762 = vld [vmem:[%s2758 + $0xc] sm:$0xf]
        %s2763 = scalar_lea.vmem %s763, 3
        %v2764 = vld [vmem:[%s2763] sm:$0x1]
        %v2766 = vperm.slane %v2764, 0
        %v2772 = vunpack.c.l.b16 %v2759
        %v2773 = vunpack.c.l.b16 %v2760
        %v2774 = vunpack.c.l.b16 %v2761
        %v2775 = vunpack.c.l.b16 %v2762
        %v2776 = vpack.c.b16 %v2773, %v2772
        %v2777 = vpack.c.b16 %v2775, %v2774
        %2780 = vmatpush.bf16.msra.mxu0 0
        %2781 = vmatpush.bf16.msra.mxu0 0
        %2782 = vmatpush.bf16.msra.mxu0 0
        %2783 = vmatpush.bf16.msra.mxu0 0
        %2784 = vmatpush.bf16.msra.mxu0 0
        %2785 = vmatpush.bf16.msra.mxu0 0
        %2786 = vmatpush.bf16.msra.mxu0 %v2777
        %2787 = vmatpush.bf16.msra.mxu0 %v2776
        %2788 = vmatmul.bf16.gmra.mxu0 %v1989
        %v2789 = vpop.f32.mrf.mxu0
        %v2790 = vadd.f32 %v2766, %v2789
        %v2791 = vpop.f32.mrf.mxu0
        %v2792 = vadd.f32 %v2766, %v2791
        %2793 = vdwg.mxu0
        %s2794 = scalar_lea.vmem %s759, 112
        %v2795 = vld [vmem:[%s2794] sm:$0xf]
        %v2796 = vld [vmem:[%s2794 + $0x4] sm:$0xf]
        %v2797 = vld [vmem:[%s2794 + $0x8] sm:$0xf]
        %v2798 = vld [vmem:[%s2794 + $0xc] sm:$0xf]
        %s2799 = scalar_lea.vmem %s763, 7
        %v2800 = vld [vmem:[%s2799] sm:$0x1]
        %v2802 = vperm.slane %v2800, 0
        %v2808 = vunpack.c.l.b16 %v2795
        %v2809 = vunpack.c.l.b16 %v2796
        %v2810 = vunpack.c.l.b16 %v2797
        %v2811 = vunpack.c.l.b16 %v2798
        %v2812 = vpack.c.b16 %v2809, %v2808
        %v2813 = vpack.c.b16 %v2811, %v2810
        %2816 = vmatpush.bf16.msra.mxu0 0
        %2817 = vmatpush.bf16.msra.mxu0 0
        %2818 = vmatpush.bf16.msra.mxu0 0
        %2819 = vmatpush.bf16.msra.mxu0 0
        %2820 = vmatpush.bf16.msra.mxu0 0
        %2821 = vmatpush.bf16.msra.mxu0 0
        %2822 = vmatpush.bf16.msra.mxu0 %v2813
        %2823 = vmatpush.bf16.msra.mxu0 %v2812
        %2824 = vmatmul.bf16.gmra.mxu0 %v2033
        %v2825 = vpop.f32.mrf.mxu0
        %v2826 = vadd.f32 %v2802, %v2825
        %v2827 = vpop.f32.mrf.mxu0
        %v2828 = vadd.f32 %v2802, %v2827
        %2829 = vdwg.mxu0
        %s2830 = scalar_lea.vmem %s759, 176
        %v2831 = vld [vmem:[%s2830] sm:$0xf]
        %v2832 = vld [vmem:[%s2830 + $0x4] sm:$0xf]
        %v2833 = vld [vmem:[%s2830 + $0x8] sm:$0xf]
        %v2834 = vld [vmem:[%s2830 + $0xc] sm:$0xf]
        %s2835 = scalar_lea.vmem %s763, 11
        %v2836 = vld [vmem:[%s2835] sm:$0x1]
        %v2838 = vperm.slane %v2836, 0
        %v2844 = vunpack.c.l.b16 %v2831
        %v2845 = vunpack.c.l.b16 %v2832
        %v2846 = vunpack.c.l.b16 %v2833
        %v2847 = vunpack.c.l.b16 %v2834
        %v2848 = vpack.c.b16 %v2845, %v2844
        %v2849 = vpack.c.b16 %v2847, %v2846
        %2852 = vmatpush.bf16.msra.mxu0 0
        %2853 = vmatpush.bf16.msra.mxu0 0
        %2854 = vmatpush.bf16.msra.mxu0 0
        %2855 = vmatpush.bf16.msra.mxu0 0
        %2856 = vmatpush.bf16.msra.mxu0 0
        %2857 = vmatpush.bf16.msra.mxu0 0
        %2858 = vmatpush.bf16.msra.mxu0 %v2849
        %2859 = vmatpush.bf16.msra.mxu0 %v2848
        %2860 = vmatmul.bf16.gmra.mxu0 %v2033
        %v2861 = vpop.f32.mrf.mxu0
        %v2862 = vadd.f32 %v2838, %v2861
        %v2863 = vpop.f32.mrf.mxu0
        %v2864 = vadd.f32 %v2838, %v2863
        %2865 = vdwg.mxu0
        %v2867 = vsel %vm971, %v2790, 0
        %v2870 = vsel %vm971, %v2826, 0
        %2872 = vmatpush.xpose.msra.mxu0 0.0
        %2873 = vmatpush.xpose.msra.mxu0 0.0
        %2874 = vmatpush.xpose.msra.mxu0 0.0
        %2875 = vmatpush.xpose.msra.mxu0 0.0
        %2876 = vmatpush.xpose.msra.mxu0 0.0
        %2877 = vmatpush.xpose.msra.mxu0 0.0
        %2878 = vmatpush.xpose.msra.mxu0 0.0
        %2879 = vmatpush.xpose.msra.mxu0 0.0
        %2880 = vmatpush.xpose.msra.mxu0 0.0
        %2881 = vmatpush.xpose.msra.mxu0 0.0
        %2882 = vmatpush.xpose.msra.mxu0 0.0
        %2883 = vmatpush.xpose.msra.mxu0 0.0
        %2884 = vmatpush.xpose.msra.mxu0 0.0
        %2885 = vmatpush.xpose.msra.mxu0 0.0
        %2886 = vmatpush.xpose.msra.mxu0 0.0
        %2887 = vmatpush.xpose.msra.mxu0 %v2870
        %2888 = vmatmul.f32.gmra.mxu0 %v2867
        %v2889 = vpop.f32.mrf.mxu0
        %v2890 = vadd.f32 0.0, %v2889
        %2891 = vdwg.mxu0
        %v2893 = vsel %vm971, %v2792, 0
        %v2896 = vsel %vm971, %v2828, 0
        %2898 = vmatpush.xpose.msra.mxu0 0.0
        %2899 = vmatpush.xpose.msra.mxu0 0.0
        %2900 = vmatpush.xpose.msra.mxu0 0.0
        %2901 = vmatpush.xpose.msra.mxu0 0.0
        %2902 = vmatpush.xpose.msra.mxu0 0.0
        %2903 = vmatpush.xpose.msra.mxu0 0.0
        %2904 = vmatpush.xpose.msra.mxu0 0.0
        %2905 = vmatpush.xpose.msra.mxu0 0.0
        %2906 = vmatpush.xpose.msra.mxu0 0.0
        %2907 = vmatpush.xpose.msra.mxu0 0.0
        %2908 = vmatpush.xpose.msra.mxu0 0.0
        %2909 = vmatpush.xpose.msra.mxu0 0.0
        %2910 = vmatpush.xpose.msra.mxu0 0.0
        %2911 = vmatpush.xpose.msra.mxu0 0.0
        %2912 = vmatpush.xpose.msra.mxu0 0.0
        %2913 = vmatpush.xpose.msra.mxu0 %v2896
        %2914 = vmatmul.f32.gmra.mxu0 %v2893
        %v2915 = vpop.f32.mrf.mxu0
        %v2916 = vadd.f32 0.0, %v2915
        %2917 = vdwg.mxu0
        %v2918 = vsel %vm971, %v2890, -inf
        %2919 = vmax.xlane.f32.xlu0 %v2918
        %v2920 = vpop.xlane.xlu0 %2919
        %v2921 = vsel %vm971, %v2916, -inf
        %2922 = vmax.xlane.f32.xlu0 %v2921
        %v2923 = vpop.xlane.xlu0 %2922
        %v2924 = vsub.f32 %v2890, %v2920
        %v2925 = vsub.f32 %v2916, %v2923
        %v2926 = vmul.f32 %v2924, 1.442695
        %v2927 = vpow.pop %v2926
        %v2928 = vmul.f32 %v2925, 1.442695
        %v2929 = vpow.pop %v2928
        %v2930 = vsel %vm971, %v2927, 0.0
        %2931 = vadd.xlane.f32.xlu0 %v2930
        %v2932 = vpop.xlane.xlu0 %2931
        %v2933 = vsel %vm971, %v2929, 0.0
        %2934 = vadd.xlane.f32.xlu0 %v2933
        %v2935 = vpop.xlane.xlu0 %2934
        %v2936 = vrcp.pop %v2932
        %v2937 = vrcp.pop %v2935
        %v2938 = vmul.f32 %v2927, %v2936
        %v2939 = vmul.f32 %v2929, %v2937
        %v2941 = vsel %vm971, %v2938, 0
        %2943 = vmatpush.msra.mxu0 0.0
        %2944 = vmatpush.msra.mxu0 0.0
        %2945 = vmatpush.msra.mxu0 0.0
        %2946 = vmatpush.msra.mxu0 0.0
        %2947 = vmatpush.msra.mxu0 0.0
        %2948 = vmatpush.msra.mxu0 0.0
        %2949 = vmatpush.msra.mxu0 0.0
        %2950 = vmatpush.msra.mxu0 0.0
        %2951 = vmatpush.msra.mxu0 0.0
        %2952 = vmatpush.msra.mxu0 0.0
        %2953 = vmatpush.msra.mxu0 0.0
        %2954 = vmatpush.msra.mxu0 0.0
        %2955 = vmatpush.msra.mxu0 0.0
        %2956 = vmatpush.msra.mxu0 0.0
        %2957 = vmatpush.msra.mxu0 0.0
        %2958 = vmatpush.msra.mxu0 %v2862
        %2959 = vmatmul.f32.gmra.mxu0 %v2941
        %v2960 = vpop.f32.mrf.mxu0
        %v2961 = vadd.f32 0.0, %v2960
        %2962 = vdwg.mxu0
        %v2964 = vsel %vm971, %v2939, 0
        %2966 = vmatpush.msra.mxu0 0.0
        %2967 = vmatpush.msra.mxu0 0.0
        %2968 = vmatpush.msra.mxu0 0.0
        %2969 = vmatpush.msra.mxu0 0.0
        %2970 = vmatpush.msra.mxu0 0.0
        %2971 = vmatpush.msra.mxu0 0.0
        %2972 = vmatpush.msra.mxu0 0.0
        %2973 = vmatpush.msra.mxu0 0.0
        %2974 = vmatpush.msra.mxu0 0.0
        %2975 = vmatpush.msra.mxu0 0.0
        %2976 = vmatpush.msra.mxu0 0.0
        %2977 = vmatpush.msra.mxu0 0.0
        %2978 = vmatpush.msra.mxu0 0.0
        %2979 = vmatpush.msra.mxu0 0.0
        %2980 = vmatpush.msra.mxu0 0.0
        %2981 = vmatpush.msra.mxu0 %v2864
        %2982 = vmatmul.f32.gmra.mxu0 %v2964
        %v2983 = vpop.f32.mrf.mxu0
        %v2984 = vadd.f32 0.0, %v2983
        %2985 = vdwg.mxu0
        %s2986 = scalar_lea.vmem %s768, 12
        %v2987 = vld [vmem:[%s2986] sm:$0xf]
        %v2988 = vunpack.c.l.bf16 %v2987
        %v2990 = vsel %vm971, %v2961, 0
        %v2993 = vsel %vm971, %v2984, 0
        %2995 = vmatpush.msra.mxu0 0.0
        %2996 = vmatpush.msra.mxu0 0.0
        %2997 = vmatpush.msra.mxu0 0.0
        %2998 = vmatpush.msra.mxu0 0.0
        %2999 = vmatpush.msra.mxu0 0.0
        %3000 = vmatpush.msra.mxu0 0.0
        %3001 = vmatpush.msra.mxu0 0.0
        %3002 = vmatpush.msra.mxu0 0.0
        %3003 = vmatpush.msra.mxu0 0.0
        %3004 = vmatpush.msra.mxu0 0.0
        %3005 = vmatpush.msra.mxu0 0.0
        %3006 = vmatpush.msra.mxu0 0.0
        %3007 = vmatpush.msra.mxu0 0.0
        %3008 = vmatpush.msra.mxu0 0.0
        %3009 = vmatpush.msra.mxu0 0.0
        %3010 = vmatpush.msra.mxu0 %v2988
        %3011 = vmatmul.f32.gmra.mxu0 %v2990
        %v3012 = vpop.f32.mrf.mxu0
        %v3013 = vadd.f32 0.0, %v3012
        %3014 = vmatmul.f32.gmra.mxu0 %v2993
        %v3015 = vpop.f32.mrf.mxu0
        %v3016 = vadd.f32 0.0, %v3015
        %3017 = vdwg.mxu0
        %v3018 = vadd.f32 %v2756, %v3013
        %v3019 = vadd.f32 %v2757, %v3016
        %v3020 = vadd.f32 %v1913, %v3018
        %v3021 = vadd.f32 %v1914, %v3019
        %v3022 = vld [vmem:[%s771] sm:$0x1]
        %v3024 = vperm.slane %v3022, 0
        %v3026 = vadd.f32 %v3020, %v3024
        %v3027 = vadd.f32 %v3021, %v3024
        %v3028 = vsel %vm803, %v3026, 0.0
        %3029 = vadd.xlane.f32.xlu0 %v3028
        %v3030 = vpop.xlane.xlu0 %3029
        %v3031 = vsel %vm803, %v3027, 0.0
        %3032 = vadd.xlane.f32.xlu0 %v3031
        %v3033 = vpop.xlane.xlu0 %3032
        %v3034 = vmul.f32 %v3030, %v816
        %v3035 = vmul.f32 %v3033, %v816
        %v3036 = vsub.f32 %v3026, %v3034
        %v3037 = vsub.f32 %v3027, %v3035
        %v3038 = vmul.f32 %v3036, %v3036
        %v3039 = vmul.f32 %v3037, %v3037
        %v3040 = vsel %vm803, %v3038, 0.0
        %3041 = vadd.xlane.f32.xlu0 %v3040
        %v3042 = vpop.xlane.xlu0 %3041
        %v3043 = vsel %vm803, %v3039, 0.0
        %3044 = vadd.xlane.f32.xlu0 %v3043
        %v3045 = vpop.xlane.xlu0 %3044
        %v3046 = vmul.f32 %v3042, %v816
        %v3047 = vmul.f32 %v3045, %v816
        %v3048 = vadd.f32 %v3046, 1e-05
        %v3049 = vadd.f32 %v3047, 1e-05
        %v3050 = vrsqrt.pop %v3048
        %v3051 = vmul.f32 %v3050, %v3048
        %v3052 = vmul.f32 %v3051, %v3050
        %v3053 = vmul.f32 0.5, %v3052
        %v3054 = vsub.f32 1.5, %v3053
        %v3055 = vmul.f32 %v3050, %v3054
        %vm3056 = vweird.f32 %v3048
        %vm3057 = vweird.f32 %v3050
        %vm3058 = vmor %vm3056, %vm3057
        %v3059 = vsel %vm3058, %v3050, %v3055
        %v3060 = vrsqrt.pop %v3049
        %v3061 = vmul.f32 %v3060, %v3049
        %v3062 = vmul.f32 %v3061, %v3060
        %v3063 = vmul.f32 0.5, %v3062
        %v3064 = vsub.f32 1.5, %v3063
        %v3065 = vmul.f32 %v3060, %v3064
        %vm3066 = vweird.f32 %v3049
        %vm3067 = vweird.f32 %v3060
        %vm3068 = vmor %vm3066, %vm3067
        %v3069 = vsel %vm3068, %v3060, %v3065
        %v3070 = vmul.f32 %v3036, %v3059
        %v3071 = vmul.f32 %v3037, %v3069
        %v3072 = vperm.slane %v801, 2
        %v3073 = vmul.f32 %v3070, %v3072
        %v3074 = vmul.f32 %v3071, %v3072
        %v3075 = vperm.slane %v802, 2
        %v3076 = vadd.f32 %v3073, %v3075
        %v3077 = vadd.f32 %v3074, %v3075
        %v3078 = vpack.c.bf16 %v3077, %v3076
        %v3079 = vld [vmem:[%s776] sm:$0xff]
        %v3080 = vld [vmem:[%s776 + $0x8] sm:$0xff]
        %v3081 = vld [vmem:[%s776 + $0x10] sm:$0xff]
        %v3082 = vld [vmem:[%s776 + $0x18] sm:$0xff]
        %v3083 = vld [vmem:[%s776 + $0x20] sm:$0xff]
        %v3084 = vld [vmem:[%s776 + $0x28] sm:$0xff]
        %v3085 = vld [vmem:[%s776 + $0x30] sm:$0xff]
        %v3086 = vld [vmem:[%s776 + $0x38] sm:$0xff]
        %v3087 = vld [vmem:[%s776 + $0x40] sm:$0xff]
        %v3088 = vld [vmem:[%s776 + $0x48] sm:$0xff]
        %v3089 = vld [vmem:[%s776 + $0x50] sm:$0xff]
        %v3090 = vld [vmem:[%s776 + $0x58] sm:$0xff]
        %v3091 = vld [vmem:[%s776 + $0x60] sm:$0xff]
        %v3092 = vld [vmem:[%s776 + $0x68] sm:$0xff]
        %v3093 = vld [vmem:[%s776 + $0x70] sm:$0xff]
        %v3094 = vld [vmem:[%s776 + $0x78] sm:$0xff]
        %v3095 = vld [vmem:[%s776 + $0x80] sm:$0xff]
        %v3096 = vld [vmem:[%s776 + $0x88] sm:$0xff]
        %v3097 = vld [vmem:[%s776 + $0x90] sm:$0xff]
        %v3098 = vld [vmem:[%s776 + $0x98] sm:$0xff]
        %v3099 = vld [vmem:[%s776 + $0xa0] sm:$0xff]
        %v3100 = vld [vmem:[%s776 + $0xa8] sm:$0xff]
        %v3101 = vld [vmem:[%s776 + $0xb0] sm:$0xff]
        %v3102 = vld [vmem:[%s776 + $0xb8] sm:$0xff]
        %v3103 = vld [vmem:[%s776 + $0xc0] sm:$0xff]
        %v3104 = vld [vmem:[%s776 + $0xc8] sm:$0xff]
        %v3105 = vld [vmem:[%s776 + $0xd0] sm:$0xff]
        %v3106 = vld [vmem:[%s776 + $0xd8] sm:$0xff]
        %v3107 = vld [vmem:[%s776 + $0xe0] sm:$0xff]
        %v3108 = vld [vmem:[%s776 + $0xe8] sm:$0xff]
        %v3109 = vld [vmem:[%s776 + $0xf0] sm:$0xff]
        %v3110 = vld [vmem:[%s776 + $0xf8] sm:$0xff]
        %v3111 = vld [vmem:[%s780] sm:$0xff]
        %v3112 = vld [vmem:[%s780 + $0x8] sm:$0xff]
        %v3115 = vperm.slane %v3111, 0
        %v3116 = vperm.slane %v3111, 1
        %v3117 = vperm.slane %v3111, 2
        %v3118 = vperm.slane %v3111, 3
        %v3119 = vperm.slane %v3111, 4
        %v3120 = vperm.slane %v3111, 5
        %v3121 = vperm.slane %v3111, 6
        %v3122 = vperm.slane %v3111, 7
        %v3123 = vperm.slane %v3112, 0
        %v3124 = vperm.slane %v3112, 1
        %v3125 = vperm.slane %v3112, 2
        %v3126 = vperm.slane %v3112, 3
        %v3127 = vperm.slane %v3112, 4
        %v3128 = vperm.slane %v3112, 5
        %v3129 = vperm.slane %v3112, 6
        %v3130 = vperm.slane %v3112, 7
        %v3179 = vunpack.c.l.b16 %v3079
        %v3180 = vunpack.c.h.b16 %v3079
        %v3181 = vunpack.c.l.b16 %v3080
        %v3182 = vunpack.c.h.b16 %v3080
        %v3183 = vunpack.c.l.b16 %v3081
        %v3184 = vunpack.c.h.b16 %v3081
        %v3185 = vunpack.c.l.b16 %v3082
        %v3186 = vunpack.c.h.b16 %v3082
        %v3187 = vunpack.c.l.b16 %v3083
        %v3188 = vunpack.c.h.b16 %v3083
        %v3189 = vunpack.c.l.b16 %v3084
        %v3190 = vunpack.c.h.b16 %v3084
        %v3191 = vunpack.c.l.b16 %v3085
        %v3192 = vunpack.c.h.b16 %v3085
        %v3193 = vunpack.c.l.b16 %v3086
        %v3194 = vunpack.c.h.b16 %v3086
        %v3195 = vunpack.c.l.b16 %v3087
        %v3196 = vunpack.c.h.b16 %v3087
        %v3197 = vunpack.c.l.b16 %v3088
        %v3198 = vunpack.c.h.b16 %v3088
        %v3199 = vunpack.c.l.b16 %v3089
        %v3200 = vunpack.c.h.b16 %v3089
        %v3201 = vunpack.c.l.b16 %v3090
        %v3202 = vunpack.c.h.b16 %v3090
        %v3203 = vunpack.c.l.b16 %v3091
        %v3204 = vunpack.c.h.b16 %v3091
        %v3205 = vunpack.c.l.b16 %v3092
        %v3206 = vunpack.c.h.b16 %v3092
        %v3207 = vunpack.c.l.b16 %v3093
        %v3208 = vunpack.c.h.b16 %v3093
        %v3209 = vunpack.c.l.b16 %v3094
        %v3210 = vunpack.c.h.b16 %v3094
        %v3211 = vunpack.c.l.b16 %v3095
        %v3212 = vunpack.c.h.b16 %v3095
        %v3213 = vunpack.c.l.b16 %v3096
        %v3214 = vunpack.c.h.b16 %v3096
        %v3215 = vunpack.c.l.b16 %v3097
        %v3216 = vunpack.c.h.b16 %v3097
        %v3217 = vunpack.c.l.b16 %v3098
        %v3218 = vunpack.c.h.b16 %v3098
        %v3219 = vunpack.c.l.b16 %v3099
        %v3220 = vunpack.c.h.b16 %v3099
        %v3221 = vunpack.c.l.b16 %v3100
        %v3222 = vunpack.c.h.b16 %v3100
        %v3223 = vunpack.c.l.b16 %v3101
        %v3224 = vunpack.c.h.b16 %v3101
        %v3225 = vunpack.c.l.b16 %v3102
        %v3226 = vunpack.c.h.b16 %v3102
        %v3227 = vunpack.c.l.b16 %v3103
        %v3228 = vunpack.c.h.b16 %v3103
        %v3229 = vunpack.c.l.b16 %v3104
        %v3230 = vunpack.c.h.b16 %v3104
        %v3231 = vunpack.c.l.b16 %v3105
        %v3232 = vunpack.c.h.b16 %v3105
        %v3233 = vunpack.c.l.b16 %v3106
        %v3234 = vunpack.c.h.b16 %v3106
        %v3235 = vunpack.c.l.b16 %v3107
        %v3236 = vunpack.c.h.b16 %v3107
        %v3237 = vunpack.c.l.b16 %v3108
        %v3238 = vunpack.c.h.b16 %v3108
        %v3239 = vunpack.c.l.b16 %v3109
        %v3240 = vunpack.c.h.b16 %v3109
        %v3241 = vunpack.c.l.b16 %v3110
        %v3242 = vunpack.c.h.b16 %v3110
        %v3243 = vpack.c.b16 %v3195, %v3179
        %v3244 = vpack.c.b16 %v3196, %v3180
        %v3245 = vpack.c.b16 %v3197, %v3181
        %v3246 = vpack.c.b16 %v3198, %v3182
        %v3247 = vpack.c.b16 %v3199, %v3183
        %v3248 = vpack.c.b16 %v3200, %v3184
        %v3249 = vpack.c.b16 %v3201, %v3185
        %v3250 = vpack.c.b16 %v3202, %v3186
        %v3251 = vpack.c.b16 %v3203, %v3187
        %v3252 = vpack.c.b16 %v3204, %v3188
        %v3253 = vpack.c.b16 %v3205, %v3189
        %v3254 = vpack.c.b16 %v3206, %v3190
        %v3255 = vpack.c.b16 %v3207, %v3191
        %v3256 = vpack.c.b16 %v3208, %v3192
        %v3257 = vpack.c.b16 %v3209, %v3193
        %v3258 = vpack.c.b16 %v3210, %v3194
        %v3259 = vpack.c.b16 %v3227, %v3211
        %v3260 = vpack.c.b16 %v3228, %v3212
        %v3261 = vpack.c.b16 %v3229, %v3213
        %v3262 = vpack.c.b16 %v3230, %v3214
        %v3263 = vpack.c.b16 %v3231, %v3215
        %v3264 = vpack.c.b16 %v3232, %v3216
        %v3265 = vpack.c.b16 %v3233, %v3217
        %v3266 = vpack.c.b16 %v3234, %v3218
        %v3267 = vpack.c.b16 %v3235, %v3219
        %v3268 = vpack.c.b16 %v3236, %v3220
        %v3269 = vpack.c.b16 %v3237, %v3221
        %v3270 = vpack.c.b16 %v3238, %v3222
        %v3271 = vpack.c.b16 %v3239, %v3223
        %v3272 = vpack.c.b16 %v3240, %v3224
        %v3273 = vpack.c.b16 %v3241, %v3225
        %v3274 = vpack.c.b16 %v3242, %v3226
        %v3308 = vsel %vm803, %v3078, 0
        %3310 = vmatpush.bf16.msra.mxu0 0
        %3311 = vmatpush.bf16.msra.mxu0 0
        %3312 = vmatpush.bf16.msra.mxu0 0
        %3313 = vmatpush.bf16.msra.mxu0 0
        %3314 = vmatpush.bf16.msra.mxu0 0
        %3315 = vmatpush.bf16.msra.mxu0 0
        %3316 = vmatpush.bf16.msra.mxu0 %v3259
        %3317 = vmatpush.bf16.msra.mxu0 %v3243
        %3318 = vmatmul.bf16.gmra.mxu0 %v3308
        %v3319 = vpop.f32.mrf.mxu0
        %v3320 = vadd.f32 %v3115, %v3319
        %v3321 = vpop.f32.mrf.mxu0
        %v3322 = vadd.f32 %v3115, %v3321
        %3323 = vdwg.mxu0
        %3324 = vmatpush.bf16.msra.mxu0 0
        %3325 = vmatpush.bf16.msra.mxu0 0
        %3326 = vmatpush.bf16.msra.mxu0 0
        %3327 = vmatpush.bf16.msra.mxu0 0
        %3328 = vmatpush.bf16.msra.mxu0 0
        %3329 = vmatpush.bf16.msra.mxu0 0
        %3330 = vmatpush.bf16.msra.mxu0 %v3260
        %3331 = vmatpush.bf16.msra.mxu0 %v3244
        %3332 = vmatmul.bf16.gmra.mxu0 %v3308
        %v3333 = vpop.f32.mrf.mxu0
        %v3334 = vadd.f32 %v3116, %v3333
        %v3335 = vpop.f32.mrf.mxu0
        %v3336 = vadd.f32 %v3116, %v3335
        %3337 = vdwg.mxu0
        %3338 = vmatpush.bf16.msra.mxu0 0
        %3339 = vmatpush.bf16.msra.mxu0 0
        %3340 = vmatpush.bf16.msra.mxu0 0
        %3341 = vmatpush.bf16.msra.mxu0 0
        %3342 = vmatpush.bf16.msra.mxu0 0
        %3343 = vmatpush.bf16.msra.mxu0 0
        %3344 = vmatpush.bf16.msra.mxu0 %v3261
        %3345 = vmatpush.bf16.msra.mxu0 %v3245
        %3346 = vmatmul.bf16.gmra.mxu0 %v3308
        %v3347 = vpop.f32.mrf.mxu0
        %v3348 = vadd.f32 %v3117, %v3347
        %v3349 = vpop.f32.mrf.mxu0
        %v3350 = vadd.f32 %v3117, %v3349
        %3351 = vdwg.mxu0
        %3352 = vmatpush.bf16.msra.mxu0 0
        %3353 = vmatpush.bf16.msra.mxu0 0
        %3354 = vmatpush.bf16.msra.mxu0 0
        %3355 = vmatpush.bf16.msra.mxu0 0
        %3356 = vmatpush.bf16.msra.mxu0 0
        %3357 = vmatpush.bf16.msra.mxu0 0
        %3358 = vmatpush.bf16.msra.mxu0 %v3262
        %3359 = vmatpush.bf16.msra.mxu0 %v3246
        %3360 = vmatmul.bf16.gmra.mxu0 %v3308
        %v3361 = vpop.f32.mrf.mxu0
        %v3362 = vadd.f32 %v3118, %v3361
        %v3363 = vpop.f32.mrf.mxu0
        %v3364 = vadd.f32 %v3118, %v3363
        %3365 = vdwg.mxu0
        %3366 = vmatpush.bf16.msra.mxu0 0
        %3367 = vmatpush.bf16.msra.mxu0 0
        %3368 = vmatpush.bf16.msra.mxu0 0
        %3369 = vmatpush.bf16.msra.mxu0 0
        %3370 = vmatpush.bf16.msra.mxu0 0
        %3371 = vmatpush.bf16.msra.mxu0 0
        %3372 = vmatpush.bf16.msra.mxu0 %v3263
        %3373 = vmatpush.bf16.msra.mxu0 %v3247
        %3374 = vmatmul.bf16.gmra.mxu0 %v3308
        %v3375 = vpop.f32.mrf.mxu0
        %v3376 = vadd.f32 %v3119, %v3375
        %v3377 = vpop.f32.mrf.mxu0
        %v3378 = vadd.f32 %v3119, %v3377
        %3379 = vdwg.mxu0
        %3380 = vmatpush.bf16.msra.mxu0 0
        %3381 = vmatpush.bf16.msra.mxu0 0
        %3382 = vmatpush.bf16.msra.mxu0 0
        %3383 = vmatpush.bf16.msra.mxu0 0
        %3384 = vmatpush.bf16.msra.mxu0 0
        %3385 = vmatpush.bf16.msra.mxu0 0
        %3386 = vmatpush.bf16.msra.mxu0 %v3264
        %3387 = vmatpush.bf16.msra.mxu0 %v3248
        %3388 = vmatmul.bf16.gmra.mxu0 %v3308
        %v3389 = vpop.f32.mrf.mxu0
        %v3390 = vadd.f32 %v3120, %v3389
        %v3391 = vpop.f32.mrf.mxu0
        %v3392 = vadd.f32 %v3120, %v3391
        %3393 = vdwg.mxu0
        %3394 = vmatpush.bf16.msra.mxu0 0
        %3395 = vmatpush.bf16.msra.mxu0 0
        %3396 = vmatpush.bf16.msra.mxu0 0
        %3397 = vmatpush.bf16.msra.mxu0 0
        %3398 = vmatpush.bf16.msra.mxu0 0
        %3399 = vmatpush.bf16.msra.mxu0 0
        %3400 = vmatpush.bf16.msra.mxu0 %v3265
        %3401 = vmatpush.bf16.msra.mxu0 %v3249
        %3402 = vmatmul.bf16.gmra.mxu0 %v3308
        %v3403 = vpop.f32.mrf.mxu0
        %v3404 = vadd.f32 %v3121, %v3403
        %v3405 = vpop.f32.mrf.mxu0
        %v3406 = vadd.f32 %v3121, %v3405
        %3407 = vdwg.mxu0
        %3408 = vmatpush.bf16.msra.mxu0 0
        %3409 = vmatpush.bf16.msra.mxu0 0
        %3410 = vmatpush.bf16.msra.mxu0 0
        %3411 = vmatpush.bf16.msra.mxu0 0
        %3412 = vmatpush.bf16.msra.mxu0 0
        %3413 = vmatpush.bf16.msra.mxu0 0
        %3414 = vmatpush.bf16.msra.mxu0 %v3266
        %3415 = vmatpush.bf16.msra.mxu0 %v3250
        %3416 = vmatmul.bf16.gmra.mxu0 %v3308
        %v3417 = vpop.f32.mrf.mxu0
        %v3418 = vadd.f32 %v3122, %v3417
        %v3419 = vpop.f32.mrf.mxu0
        %v3420 = vadd.f32 %v3122, %v3419
        %3421 = vdwg.mxu0
        %3422 = vmatpush.bf16.msra.mxu0 0
        %3423 = vmatpush.bf16.msra.mxu0 0
        %3424 = vmatpush.bf16.msra.mxu0 0
        %3425 = vmatpush.bf16.msra.mxu0 0
        %3426 = vmatpush.bf16.msra.mxu0 0
        %3427 = vmatpush.bf16.msra.mxu0 0
        %3428 = vmatpush.bf16.msra.mxu0 %v3267
        %3429 = vmatpush.bf16.msra.mxu0 %v3251
        %3430 = vmatmul.bf16.gmra.mxu0 %v3308
        %v3431 = vpop.f32.mrf.mxu0
        %v3432 = vadd.f32 %v3123, %v3431
        %v3433 = vpop.f32.mrf.mxu0
        %v3434 = vadd.f32 %v3123, %v3433
        %3435 = vdwg.mxu0
        %3436 = vmatpush.bf16.msra.mxu0 0
        %3437 = vmatpush.bf16.msra.mxu0 0
        %3438 = vmatpush.bf16.msra.mxu0 0
        %3439 = vmatpush.bf16.msra.mxu0 0
        %3440 = vmatpush.bf16.msra.mxu0 0
        %3441 = vmatpush.bf16.msra.mxu0 0
        %3442 = vmatpush.bf16.msra.mxu0 %v3268
        %3443 = vmatpush.bf16.msra.mxu0 %v3252
        %3444 = vmatmul.bf16.gmra.mxu0 %v3308
        %v3445 = vpop.f32.mrf.mxu0
        %v3446 = vadd.f32 %v3124, %v3445
        %v3447 = vpop.f32.mrf.mxu0
        %v3448 = vadd.f32 %v3124, %v3447
        %3449 = vdwg.mxu0
        %3450 = vmatpush.bf16.msra.mxu0 0
        %3451 = vmatpush.bf16.msra.mxu0 0
        %3452 = vmatpush.bf16.msra.mxu0 0
        %3453 = vmatpush.bf16.msra.mxu0 0
        %3454 = vmatpush.bf16.msra.mxu0 0
        %3455 = vmatpush.bf16.msra.mxu0 0
        %3456 = vmatpush.bf16.msra.mxu0 %v3269
        %3457 = vmatpush.bf16.msra.mxu0 %v3253
        %3458 = vmatmul.bf16.gmra.mxu0 %v3308
        %v3459 = vpop.f32.mrf.mxu0
        %v3460 = vadd.f32 %v3125, %v3459
        %v3461 = vpop.f32.mrf.mxu0
        %v3462 = vadd.f32 %v3125, %v3461
        %3463 = vdwg.mxu0
        %3464 = vmatpush.bf16.msra.mxu0 0
        %3465 = vmatpush.bf16.msra.mxu0 0
        %3466 = vmatpush.bf16.msra.mxu0 0
        %3467 = vmatpush.bf16.msra.mxu0 0
        %3468 = vmatpush.bf16.msra.mxu0 0
        %3469 = vmatpush.bf16.msra.mxu0 0
        %3470 = vmatpush.bf16.msra.mxu0 %v3270
        %3471 = vmatpush.bf16.msra.mxu0 %v3254
        %3472 = vmatmul.bf16.gmra.mxu0 %v3308
        %v3473 = vpop.f32.mrf.mxu0
        %v3474 = vadd.f32 %v3126, %v3473
        %v3475 = vpop.f32.mrf.mxu0
        %v3476 = vadd.f32 %v3126, %v3475
        %3477 = vdwg.mxu0
        %3478 = vmatpush.bf16.msra.mxu0 0
        %3479 = vmatpush.bf16.msra.mxu0 0
        %3480 = vmatpush.bf16.msra.mxu0 0
        %3481 = vmatpush.bf16.msra.mxu0 0
        %3482 = vmatpush.bf16.msra.mxu0 0
        %3483 = vmatpush.bf16.msra.mxu0 0
        %3484 = vmatpush.bf16.msra.mxu0 %v3271
        %3485 = vmatpush.bf16.msra.mxu0 %v3255
        %3486 = vmatmul.bf16.gmra.mxu0 %v3308
        %v3487 = vpop.f32.mrf.mxu0
        %v3488 = vadd.f32 %v3127, %v3487
        %v3489 = vpop.f32.mrf.mxu0
        %v3490 = vadd.f32 %v3127, %v3489
        %3491 = vdwg.mxu0
        %3492 = vmatpush.bf16.msra.mxu0 0
        %3493 = vmatpush.bf16.msra.mxu0 0
        %3494 = vmatpush.bf16.msra.mxu0 0
        %3495 = vmatpush.bf16.msra.mxu0 0
        %3496 = vmatpush.bf16.msra.mxu0 0
        %3497 = vmatpush.bf16.msra.mxu0 0
        %3498 = vmatpush.bf16.msra.mxu0 %v3272
        %3499 = vmatpush.bf16.msra.mxu0 %v3256
        %3500 = vmatmul.bf16.gmra.mxu0 %v3308
        %v3501 = vpop.f32.mrf.mxu0
        %v3502 = vadd.f32 %v3128, %v3501
        %v3503 = vpop.f32.mrf.mxu0
        %v3504 = vadd.f32 %v3128, %v3503
        %3505 = vdwg.mxu0
        %3506 = vmatpush.bf16.msra.mxu0 0
        %3507 = vmatpush.bf16.msra.mxu0 0
        %3508 = vmatpush.bf16.msra.mxu0 0
        %3509 = vmatpush.bf16.msra.mxu0 0
        %3510 = vmatpush.bf16.msra.mxu0 0
        %3511 = vmatpush.bf16.msra.mxu0 0
        %3512 = vmatpush.bf16.msra.mxu0 %v3273
        %3513 = vmatpush.bf16.msra.mxu0 %v3257
        %3514 = vmatmul.bf16.gmra.mxu0 %v3308
        %v3515 = vpop.f32.mrf.mxu0
        %v3516 = vadd.f32 %v3129, %v3515
        %v3517 = vpop.f32.mrf.mxu0
        %v3518 = vadd.f32 %v3129, %v3517
        %3519 = vdwg.mxu0
        %3520 = vmatpush.bf16.msra.mxu0 0
        %3521 = vmatpush.bf16.msra.mxu0 0
        %3522 = vmatpush.bf16.msra.mxu0 0
        %3523 = vmatpush.bf16.msra.mxu0 0
        %3524 = vmatpush.bf16.msra.mxu0 0
        %3525 = vmatpush.bf16.msra.mxu0 0
        %3526 = vmatpush.bf16.msra.mxu0 %v3274
        %3527 = vmatpush.bf16.msra.mxu0 %v3258
        %3528 = vmatmul.bf16.gmra.mxu0 %v3308
        %v3529 = vpop.f32.mrf.mxu0
        %v3530 = vadd.f32 %v3130, %v3529
        %v3531 = vpop.f32.mrf.mxu0
        %v3532 = vadd.f32 %v3130, %v3531
        %3533 = vdwg.mxu0
        %v3534 = vmax.f32 %v3320, 0.0
        %v3535 = vmax.f32 %v3334, 0.0
        %v3536 = vmax.f32 %v3348, 0.0
        %v3537 = vmax.f32 %v3362, 0.0
        %v3538 = vmax.f32 %v3376, 0.0
        %v3539 = vmax.f32 %v3390, 0.0
        %v3540 = vmax.f32 %v3404, 0.0
        %v3541 = vmax.f32 %v3418, 0.0
        %v3542 = vmax.f32 %v3432, 0.0
        %v3543 = vmax.f32 %v3446, 0.0
        %v3544 = vmax.f32 %v3460, 0.0
        %v3545 = vmax.f32 %v3474, 0.0
        %v3546 = vmax.f32 %v3488, 0.0
        %v3547 = vmax.f32 %v3502, 0.0
        %v3548 = vmax.f32 %v3516, 0.0
        %v3549 = vmax.f32 %v3530, 0.0
        %v3550 = vmax.f32 %v3322, 0.0
        %v3551 = vmax.f32 %v3336, 0.0
        %v3552 = vmax.f32 %v3350, 0.0
        %v3553 = vmax.f32 %v3364, 0.0
        %v3554 = vmax.f32 %v3378, 0.0
        %v3555 = vmax.f32 %v3392, 0.0
        %v3556 = vmax.f32 %v3406, 0.0
        %v3557 = vmax.f32 %v3420, 0.0
        %v3558 = vmax.f32 %v3434, 0.0
        %v3559 = vmax.f32 %v3448, 0.0
        %v3560 = vmax.f32 %v3462, 0.0
        %v3561 = vmax.f32 %v3476, 0.0
        %v3562 = vmax.f32 %v3490, 0.0
        %v3563 = vmax.f32 %v3504, 0.0
        %v3564 = vmax.f32 %v3518, 0.0
        %v3565 = vmax.f32 %v3532, 0.0
        %v3566 = vpack.c.bf16 %v3550, %v3534
        %v3567 = vpack.c.bf16 %v3551, %v3535
        %v3568 = vpack.c.bf16 %v3552, %v3536
        %v3569 = vpack.c.bf16 %v3553, %v3537
        %v3570 = vpack.c.bf16 %v3554, %v3538
        %v3571 = vpack.c.bf16 %v3555, %v3539
        %v3572 = vpack.c.bf16 %v3556, %v3540
        %v3573 = vpack.c.bf16 %v3557, %v3541
        %v3574 = vpack.c.bf16 %v3558, %v3542
        %v3575 = vpack.c.bf16 %v3559, %v3543
        %v3576 = vpack.c.bf16 %v3560, %v3544
        %v3577 = vpack.c.bf16 %v3561, %v3545
        %v3578 = vpack.c.bf16 %v3562, %v3546
        %v3579 = vpack.c.bf16 %v3563, %v3547
        %v3580 = vpack.c.bf16 %v3564, %v3548
        %v3581 = vpack.c.bf16 %v3565, %v3549
        %v3582 = vld [vmem:[%s785] sm:$0xf]
        %v3583 = vld [vmem:[%s785 + $0x4] sm:$0xf]
        %v3584 = vld [vmem:[%s785 + $0x8] sm:$0xf]
        %v3585 = vld [vmem:[%s785 + $0xc] sm:$0xf]
        %v3586 = vld [vmem:[%s785 + $0x10] sm:$0xf]
        %v3587 = vld [vmem:[%s785 + $0x14] sm:$0xf]
        %v3588 = vld [vmem:[%s785 + $0x18] sm:$0xf]
        %v3589 = vld [vmem:[%s785 + $0x1c] sm:$0xf]
        %v3590 = vld [vmem:[%s785 + $0x20] sm:$0xf]
        %v3591 = vld [vmem:[%s785 + $0x24] sm:$0xf]
        %v3592 = vld [vmem:[%s785 + $0x28] sm:$0xf]
        %v3593 = vld [vmem:[%s785 + $0x2c] sm:$0xf]
        %v3594 = vld [vmem:[%s785 + $0x30] sm:$0xf]
        %v3595 = vld [vmem:[%s785 + $0x34] sm:$0xf]
        %v3596 = vld [vmem:[%s785 + $0x38] sm:$0xf]
        %v3597 = vld [vmem:[%s785 + $0x3c] sm:$0xf]
        %v3598 = vld [vmem:[%s785 + $0x40] sm:$0xf]
        %v3599 = vld [vmem:[%s785 + $0x44] sm:$0xf]
        %v3600 = vld [vmem:[%s785 + $0x48] sm:$0xf]
        %v3601 = vld [vmem:[%s785 + $0x4c] sm:$0xf]
        %v3602 = vld [vmem:[%s785 + $0x50] sm:$0xf]
        %v3603 = vld [vmem:[%s785 + $0x54] sm:$0xf]
        %v3604 = vld [vmem:[%s785 + $0x58] sm:$0xf]
        %v3605 = vld [vmem:[%s785 + $0x5c] sm:$0xf]
        %v3606 = vld [vmem:[%s785 + $0x60] sm:$0xf]
        %v3607 = vld [vmem:[%s785 + $0x64] sm:$0xf]
        %v3608 = vld [vmem:[%s785 + $0x68] sm:$0xf]
        %v3609 = vld [vmem:[%s785 + $0x6c] sm:$0xf]
        %v3610 = vld [vmem:[%s785 + $0x70] sm:$0xf]
        %v3611 = vld [vmem:[%s785 + $0x74] sm:$0xf]
        %v3612 = vld [vmem:[%s785 + $0x78] sm:$0xf]
        %v3613 = vld [vmem:[%s785 + $0x7c] sm:$0xf]
        %v3614 = vld [vmem:[%s785 + $0x80] sm:$0xf]
        %v3615 = vld [vmem:[%s785 + $0x84] sm:$0xf]
        %v3616 = vld [vmem:[%s785 + $0x88] sm:$0xf]
        %v3617 = vld [vmem:[%s785 + $0x8c] sm:$0xf]
        %v3618 = vld [vmem:[%s785 + $0x90] sm:$0xf]
        %v3619 = vld [vmem:[%s785 + $0x94] sm:$0xf]
        %v3620 = vld [vmem:[%s785 + $0x98] sm:$0xf]
        %v3621 = vld [vmem:[%s785 + $0x9c] sm:$0xf]
        %v3622 = vld [vmem:[%s785 + $0xa0] sm:$0xf]
        %v3623 = vld [vmem:[%s785 + $0xa4] sm:$0xf]
        %v3624 = vld [vmem:[%s785 + $0xa8] sm:$0xf]
        %v3625 = vld [vmem:[%s785 + $0xac] sm:$0xf]
        %v3626 = vld [vmem:[%s785 + $0xb0] sm:$0xf]
        %v3627 = vld [vmem:[%s785 + $0xb4] sm:$0xf]
        %v3628 = vld [vmem:[%s785 + $0xb8] sm:$0xf]
        %v3629 = vld [vmem:[%s785 + $0xbc] sm:$0xf]
        %v3630 = vld [vmem:[%s785 + $0xc0] sm:$0xf]
        %v3631 = vld [vmem:[%s785 + $0xc4] sm:$0xf]
        %v3632 = vld [vmem:[%s785 + $0xc8] sm:$0xf]
        %v3633 = vld [vmem:[%s785 + $0xcc] sm:$0xf]
        %v3634 = vld [vmem:[%s785 + $0xd0] sm:$0xf]
        %v3635 = vld [vmem:[%s785 + $0xd4] sm:$0xf]
        %v3636 = vld [vmem:[%s785 + $0xd8] sm:$0xf]
        %v3637 = vld [vmem:[%s785 + $0xdc] sm:$0xf]
        %v3638 = vld [vmem:[%s785 + $0xe0] sm:$0xf]
        %v3639 = vld [vmem:[%s785 + $0xe4] sm:$0xf]
        %v3640 = vld [vmem:[%s785 + $0xe8] sm:$0xf]
        %v3641 = vld [vmem:[%s785 + $0xec] sm:$0xf]
        %v3642 = vld [vmem:[%s785 + $0xf0] sm:$0xf]
        %v3643 = vld [vmem:[%s785 + $0xf4] sm:$0xf]
        %v3644 = vld [vmem:[%s785 + $0xf8] sm:$0xf]
        %v3645 = vld [vmem:[%s785 + $0xfc] sm:$0xf]
        %v3646 = vld [vmem:[%s785 + $0x100] sm:$0xf]
        %v3647 = vld [vmem:[%s785 + $0x104] sm:$0xf]
        %v3648 = vld [vmem:[%s785 + $0x108] sm:$0xf]
        %v3649 = vld [vmem:[%s785 + $0x10c] sm:$0xf]
        %v3650 = vld [vmem:[%s785 + $0x110] sm:$0xf]
        %v3651 = vld [vmem:[%s785 + $0x114] sm:$0xf]
        %v3652 = vld [vmem:[%s785 + $0x118] sm:$0xf]
        %v3653 = vld [vmem:[%s785 + $0x11c] sm:$0xf]
        %v3654 = vld [vmem:[%s785 + $0x120] sm:$0xf]
        %v3655 = vld [vmem:[%s785 + $0x124] sm:$0xf]
        %v3656 = vld [vmem:[%s785 + $0x128] sm:$0xf]
        %v3657 = vld [vmem:[%s785 + $0x12c] sm:$0xf]
        %v3658 = vld [vmem:[%s785 + $0x130] sm:$0xf]
        %v3659 = vld [vmem:[%s785 + $0x134] sm:$0xf]
        %v3660 = vld [vmem:[%s785 + $0x138] sm:$0xf]
        %v3661 = vld [vmem:[%s785 + $0x13c] sm:$0xf]
        %v3662 = vld [vmem:[%s785 + $0x140] sm:$0xf]
        %v3663 = vld [vmem:[%s785 + $0x144] sm:$0xf]
        %v3664 = vld [vmem:[%s785 + $0x148] sm:$0xf]
        %v3665 = vld [vmem:[%s785 + $0x14c] sm:$0xf]
        %v3666 = vld [vmem:[%s785 + $0x150] sm:$0xf]
        %v3667 = vld [vmem:[%s785 + $0x154] sm:$0xf]
        %v3668 = vld [vmem:[%s785 + $0x158] sm:$0xf]
        %v3669 = vld [vmem:[%s785 + $0x15c] sm:$0xf]
        %v3670 = vld [vmem:[%s785 + $0x160] sm:$0xf]
        %v3671 = vld [vmem:[%s785 + $0x164] sm:$0xf]
        %v3672 = vld [vmem:[%s785 + $0x168] sm:$0xf]
        %v3673 = vld [vmem:[%s785 + $0x16c] sm:$0xf]
        %v3674 = vld [vmem:[%s785 + $0x170] sm:$0xf]
        %v3675 = vld [vmem:[%s785 + $0x174] sm:$0xf]
        %v3676 = vld [vmem:[%s785 + $0x178] sm:$0xf]
        %v3677 = vld [vmem:[%s785 + $0x17c] sm:$0xf]
        %v3678 = vld [vmem:[%s785 + $0x180] sm:$0xf]
        %v3679 = vld [vmem:[%s785 + $0x184] sm:$0xf]
        %v3680 = vld [vmem:[%s785 + $0x188] sm:$0xf]
        %v3681 = vld [vmem:[%s785 + $0x18c] sm:$0xf]
        %v3682 = vld [vmem:[%s785 + $0x190] sm:$0xf]
        %v3683 = vld [vmem:[%s785 + $0x194] sm:$0xf]
        %v3684 = vld [vmem:[%s785 + $0x198] sm:$0xf]
        %v3685 = vld [vmem:[%s785 + $0x19c] sm:$0xf]
        %v3686 = vld [vmem:[%s785 + $0x1a0] sm:$0xf]
        %v3687 = vld [vmem:[%s785 + $0x1a4] sm:$0xf]
        %v3688 = vld [vmem:[%s785 + $0x1a8] sm:$0xf]
        %v3689 = vld [vmem:[%s785 + $0x1ac] sm:$0xf]
        %v3690 = vld [vmem:[%s785 + $0x1b0] sm:$0xf]
        %v3691 = vld [vmem:[%s785 + $0x1b4] sm:$0xf]
        %v3692 = vld [vmem:[%s785 + $0x1b8] sm:$0xf]
        %v3693 = vld [vmem:[%s785 + $0x1bc] sm:$0xf]
        %v3694 = vld [vmem:[%s785 + $0x1c0] sm:$0xf]
        %v3695 = vld [vmem:[%s785 + $0x1c4] sm:$0xf]
        %v3696 = vld [vmem:[%s785 + $0x1c8] sm:$0xf]
        %v3697 = vld [vmem:[%s785 + $0x1cc] sm:$0xf]
        %v3698 = vld [vmem:[%s785 + $0x1d0] sm:$0xf]
        %v3699 = vld [vmem:[%s785 + $0x1d4] sm:$0xf]
        %v3700 = vld [vmem:[%s785 + $0x1d8] sm:$0xf]
        %v3701 = vld [vmem:[%s785 + $0x1dc] sm:$0xf]
        %v3702 = vld [vmem:[%s785 + $0x1e0] sm:$0xf]
        %v3703 = vld [vmem:[%s785 + $0x1e4] sm:$0xf]
        %v3704 = vld [vmem:[%s785 + $0x1e8] sm:$0xf]
        %v3705 = vld [vmem:[%s785 + $0x1ec] sm:$0xf]
        %v3706 = vld [vmem:[%s785 + $0x1f0] sm:$0xf]
        %v3707 = vld [vmem:[%s785 + $0x1f4] sm:$0xf]
        %v3708 = vld [vmem:[%s785 + $0x1f8] sm:$0xf]
        %v3709 = vld [vmem:[%s785 + $0x1fc] sm:$0xf]
        %v3710 = vld [vmem:[%s785 + $0x200] sm:$0xf]
        %v3711 = vld [vmem:[%s785 + $0x204] sm:$0xf]
        %v3712 = vld [vmem:[%s785 + $0x208] sm:$0xf]
        %v3713 = vld [vmem:[%s785 + $0x20c] sm:$0xf]
        %v3714 = vld [vmem:[%s785 + $0x210] sm:$0xf]
        %v3715 = vld [vmem:[%s785 + $0x214] sm:$0xf]
        %v3716 = vld [vmem:[%s785 + $0x218] sm:$0xf]
        %v3717 = vld [vmem:[%s785 + $0x21c] sm:$0xf]
        %v3718 = vld [vmem:[%s785 + $0x220] sm:$0xf]
        %v3719 = vld [vmem:[%s785 + $0x224] sm:$0xf]
        %v3720 = vld [vmem:[%s785 + $0x228] sm:$0xf]
        %v3721 = vld [vmem:[%s785 + $0x22c] sm:$0xf]
        %v3722 = vld [vmem:[%s785 + $0x230] sm:$0xf]
        %v3723 = vld [vmem:[%s785 + $0x234] sm:$0xf]
        %v3724 = vld [vmem:[%s785 + $0x238] sm:$0xf]
        %v3725 = vld [vmem:[%s785 + $0x23c] sm:$0xf]
        %v3726 = vld [vmem:[%s785 + $0x240] sm:$0xf]
        %v3727 = vld [vmem:[%s785 + $0x244] sm:$0xf]
        %v3728 = vld [vmem:[%s785 + $0x248] sm:$0xf]
        %v3729 = vld [vmem:[%s785 + $0x24c] sm:$0xf]
        %v3730 = vld [vmem:[%s785 + $0x250] sm:$0xf]
        %v3731 = vld [vmem:[%s785 + $0x254] sm:$0xf]
        %v3732 = vld [vmem:[%s785 + $0x258] sm:$0xf]
        %v3733 = vld [vmem:[%s785 + $0x25c] sm:$0xf]
        %v3734 = vld [vmem:[%s785 + $0x260] sm:$0xf]
        %v3735 = vld [vmem:[%s785 + $0x264] sm:$0xf]
        %v3736 = vld [vmem:[%s785 + $0x268] sm:$0xf]
        %v3737 = vld [vmem:[%s785 + $0x26c] sm:$0xf]
        %v3738 = vld [vmem:[%s785 + $0x270] sm:$0xf]
        %v3739 = vld [vmem:[%s785 + $0x274] sm:$0xf]
        %v3740 = vld [vmem:[%s785 + $0x278] sm:$0xf]
        %v3741 = vld [vmem:[%s785 + $0x27c] sm:$0xf]
        %v3742 = vld [vmem:[%s785 + $0x280] sm:$0xf]
        %v3743 = vld [vmem:[%s785 + $0x284] sm:$0xf]
        %v3744 = vld [vmem:[%s785 + $0x288] sm:$0xf]
        %v3745 = vld [vmem:[%s785 + $0x28c] sm:$0xf]
        %v3746 = vld [vmem:[%s785 + $0x290] sm:$0xf]
        %v3747 = vld [vmem:[%s785 + $0x294] sm:$0xf]
        %v3748 = vld [vmem:[%s785 + $0x298] sm:$0xf]
        %v3749 = vld [vmem:[%s785 + $0x29c] sm:$0xf]
        %v3750 = vld [vmem:[%s785 + $0x2a0] sm:$0xf]
        %v3751 = vld [vmem:[%s785 + $0x2a4] sm:$0xf]
        %v3752 = vld [vmem:[%s785 + $0x2a8] sm:$0xf]
        %v3753 = vld [vmem:[%s785 + $0x2ac] sm:$0xf]
        %v3754 = vld [vmem:[%s785 + $0x2b0] sm:$0xf]
        %v3755 = vld [vmem:[%s785 + $0x2b4] sm:$0xf]
        %v3756 = vld [vmem:[%s785 + $0x2b8] sm:$0xf]
        %v3757 = vld [vmem:[%s785 + $0x2bc] sm:$0xf]
        %v3758 = vld [vmem:[%s785 + $0x2c0] sm:$0xf]
        %v3759 = vld [vmem:[%s785 + $0x2c4] sm:$0xf]
        %v3760 = vld [vmem:[%s785 + $0x2c8] sm:$0xf]
        %v3761 = vld [vmem:[%s785 + $0x2cc] sm:$0xf]
        %v3762 = vld [vmem:[%s785 + $0x2d0] sm:$0xf]
        %v3763 = vld [vmem:[%s785 + $0x2d4] sm:$0xf]
        %v3764 = vld [vmem:[%s785 + $0x2d8] sm:$0xf]
        %v3765 = vld [vmem:[%s785 + $0x2dc] sm:$0xf]
        %v3766 = vld [vmem:[%s785 + $0x2e0] sm:$0xf]
        %v3767 = vld [vmem:[%s785 + $0x2e4] sm:$0xf]
        %v3768 = vld [vmem:[%s785 + $0x2e8] sm:$0xf]
        %v3769 = vld [vmem:[%s785 + $0x2ec] sm:$0xf]
        %v3770 = vld [vmem:[%s785 + $0x2f0] sm:$0xf]
        %v3771 = vld [vmem:[%s785 + $0x2f4] sm:$0xf]
        %v3772 = vld [vmem:[%s785 + $0x2f8] sm:$0xf]
        %v3773 = vld [vmem:[%s785 + $0x2fc] sm:$0xf]
        %v3774 = vld [vmem:[%s785 + $0x300] sm:$0xf]
        %v3775 = vld [vmem:[%s785 + $0x304] sm:$0xf]
        %v3776 = vld [vmem:[%s785 + $0x308] sm:$0xf]
        %v3777 = vld [vmem:[%s785 + $0x30c] sm:$0xf]
        %v3778 = vld [vmem:[%s785 + $0x310] sm:$0xf]
        %v3779 = vld [vmem:[%s785 + $0x314] sm:$0xf]
        %v3780 = vld [vmem:[%s785 + $0x318] sm:$0xf]
        %v3781 = vld [vmem:[%s785 + $0x31c] sm:$0xf]
        %v3782 = vld [vmem:[%s785 + $0x320] sm:$0xf]
        %v3783 = vld [vmem:[%s785 + $0x324] sm:$0xf]
        %v3784 = vld [vmem:[%s785 + $0x328] sm:$0xf]
        %v3785 = vld [vmem:[%s785 + $0x32c] sm:$0xf]
        %v3786 = vld [vmem:[%s785 + $0x330] sm:$0xf]
        %v3787 = vld [vmem:[%s785 + $0x334] sm:$0xf]
        %v3788 = vld [vmem:[%s785 + $0x338] sm:$0xf]
        %v3789 = vld [vmem:[%s785 + $0x33c] sm:$0xf]
        %v3790 = vld [vmem:[%s785 + $0x340] sm:$0xf]
        %v3791 = vld [vmem:[%s785 + $0x344] sm:$0xf]
        %v3792 = vld [vmem:[%s785 + $0x348] sm:$0xf]
        %v3793 = vld [vmem:[%s785 + $0x34c] sm:$0xf]
        %v3794 = vld [vmem:[%s785 + $0x350] sm:$0xf]
        %v3795 = vld [vmem:[%s785 + $0x354] sm:$0xf]
        %v3796 = vld [vmem:[%s785 + $0x358] sm:$0xf]
        %v3797 = vld [vmem:[%s785 + $0x35c] sm:$0xf]
        %v3798 = vld [vmem:[%s785 + $0x360] sm:$0xf]
        %v3799 = vld [vmem:[%s785 + $0x364] sm:$0xf]
        %v3800 = vld [vmem:[%s785 + $0x368] sm:$0xf]
        %v3801 = vld [vmem:[%s785 + $0x36c] sm:$0xf]
        %v3802 = vld [vmem:[%s785 + $0x370] sm:$0xf]
        %v3803 = vld [vmem:[%s785 + $0x374] sm:$0xf]
        %v3804 = vld [vmem:[%s785 + $0x378] sm:$0xf]
        %v3805 = vld [vmem:[%s785 + $0x37c] sm:$0xf]
        %v3806 = vld [vmem:[%s785 + $0x380] sm:$0xf]
        %v3807 = vld [vmem:[%s785 + $0x384] sm:$0xf]
        %v3808 = vld [vmem:[%s785 + $0x388] sm:$0xf]
        %v3809 = vld [vmem:[%s785 + $0x38c] sm:$0xf]
        %v3810 = vld [vmem:[%s785 + $0x390] sm:$0xf]
        %v3811 = vld [vmem:[%s785 + $0x394] sm:$0xf]
        %v3812 = vld [vmem:[%s785 + $0x398] sm:$0xf]
        %v3813 = vld [vmem:[%s785 + $0x39c] sm:$0xf]
        %v3814 = vld [vmem:[%s785 + $0x3a0] sm:$0xf]
        %v3815 = vld [vmem:[%s785 + $0x3a4] sm:$0xf]
        %v3816 = vld [vmem:[%s785 + $0x3a8] sm:$0xf]
        %v3817 = vld [vmem:[%s785 + $0x3ac] sm:$0xf]
        %v3818 = vld [vmem:[%s785 + $0x3b0] sm:$0xf]
        %v3819 = vld [vmem:[%s785 + $0x3b4] sm:$0xf]
        %v3820 = vld [vmem:[%s785 + $0x3b8] sm:$0xf]
        %v3821 = vld [vmem:[%s785 + $0x3bc] sm:$0xf]
        %v3822 = vld [vmem:[%s785 + $0x3c0] sm:$0xf]
        %v3823 = vld [vmem:[%s785 + $0x3c4] sm:$0xf]
        %v3824 = vld [vmem:[%s785 + $0x3c8] sm:$0xf]
        %v3825 = vld [vmem:[%s785 + $0x3cc] sm:$0xf]
        %v3826 = vld [vmem:[%s785 + $0x3d0] sm:$0xf]
        %v3827 = vld [vmem:[%s785 + $0x3d4] sm:$0xf]
        %v3828 = vld [vmem:[%s785 + $0x3d8] sm:$0xf]
        %v3829 = vld [vmem:[%s785 + $0x3dc] sm:$0xf]
        %v3830 = vld [vmem:[%s785 + $0x3e0] sm:$0xf]
        %v3831 = vld [vmem:[%s785 + $0x3e4] sm:$0xf]
        %v3832 = vld [vmem:[%s785 + $0x3e8] sm:$0xf]
        %v3833 = vld [vmem:[%s785 + $0x3ec] sm:$0xf]
        %v3834 = vld [vmem:[%s785 + $0x3f0] sm:$0xf]
        %v3835 = vld [vmem:[%s785 + $0x3f4] sm:$0xf]
        %v3836 = vld [vmem:[%s785 + $0x3f8] sm:$0xf]
        %v3837 = vld [vmem:[%s785 + $0x3fc] sm:$0xf]
        %v4094 = vunpack.c.l.b16 %v3582
        %v4095 = vunpack.c.l.b16 %v3583
        %v4096 = vunpack.c.l.b16 %v3584
        %v4097 = vunpack.c.l.b16 %v3585
        %v4098 = vunpack.c.l.b16 %v3586
        %v4099 = vunpack.c.l.b16 %v3587
        %v4100 = vunpack.c.l.b16 %v3588
        %v4101 = vunpack.c.l.b16 %v3589
        %v4102 = vunpack.c.l.b16 %v3590
        %v4103 = vunpack.c.l.b16 %v3591
        %v4104 = vunpack.c.l.b16 %v3592
        %v4105 = vunpack.c.l.b16 %v3593
        %v4106 = vunpack.c.l.b16 %v3594
        %v4107 = vunpack.c.l.b16 %v3595
        %v4108 = vunpack.c.l.b16 %v3596
        %v4109 = vunpack.c.l.b16 %v3597
        %v4110 = vunpack.c.l.b16 %v3598
        %v4111 = vunpack.c.l.b16 %v3599
        %v4112 = vunpack.c.l.b16 %v3600
        %v4113 = vunpack.c.l.b16 %v3601
        %v4114 = vunpack.c.l.b16 %v3602
        %v4115 = vunpack.c.l.b16 %v3603
        %v4116 = vunpack.c.l.b16 %v3604
        %v4117 = vunpack.c.l.b16 %v3605
        %v4118 = vunpack.c.l.b16 %v3606
        %v4119 = vunpack.c.l.b16 %v3607
        %v4120 = vunpack.c.l.b16 %v3608
        %v4121 = vunpack.c.l.b16 %v3609
        %v4122 = vunpack.c.l.b16 %v3610
        %v4123 = vunpack.c.l.b16 %v3611
        %v4124 = vunpack.c.l.b16 %v3612
        %v4125 = vunpack.c.l.b16 %v3613
        %v4126 = vunpack.c.l.b16 %v3614
        %v4127 = vunpack.c.l.b16 %v3615
        %v4128 = vunpack.c.l.b16 %v3616
        %v4129 = vunpack.c.l.b16 %v3617
        %v4130 = vunpack.c.l.b16 %v3618
        %v4131 = vunpack.c.l.b16 %v3619
        %v4132 = vunpack.c.l.b16 %v3620
        %v4133 = vunpack.c.l.b16 %v3621
        %v4134 = vunpack.c.l.b16 %v3622
        %v4135 = vunpack.c.l.b16 %v3623
        %v4136 = vunpack.c.l.b16 %v3624
        %v4137 = vunpack.c.l.b16 %v3625
        %v4138 = vunpack.c.l.b16 %v3626
        %v4139 = vunpack.c.l.b16 %v3627
        %v4140 = vunpack.c.l.b16 %v3628
        %v4141 = vunpack.c.l.b16 %v3629
        %v4142 = vunpack.c.l.b16 %v3630
        %v4143 = vunpack.c.l.b16 %v3631
        %v4144 = vunpack.c.l.b16 %v3632
        %v4145 = vunpack.c.l.b16 %v3633
        %v4146 = vunpack.c.l.b16 %v3634
        %v4147 = vunpack.c.l.b16 %v3635
        %v4148 = vunpack.c.l.b16 %v3636
        %v4149 = vunpack.c.l.b16 %v3637
        %v4150 = vunpack.c.l.b16 %v3638
        %v4151 = vunpack.c.l.b16 %v3639
        %v4152 = vunpack.c.l.b16 %v3640
        %v4153 = vunpack.c.l.b16 %v3641
        %v4154 = vunpack.c.l.b16 %v3642
        %v4155 = vunpack.c.l.b16 %v3643
        %v4156 = vunpack.c.l.b16 %v3644
        %v4157 = vunpack.c.l.b16 %v3645
        %v4158 = vunpack.c.l.b16 %v3646
        %v4159 = vunpack.c.l.b16 %v3647
        %v4160 = vunpack.c.l.b16 %v3648
        %v4161 = vunpack.c.l.b16 %v3649
        %v4162 = vunpack.c.l.b16 %v3650
        %v4163 = vunpack.c.l.b16 %v3651
        %v4164 = vunpack.c.l.b16 %v3652
        %v4165 = vunpack.c.l.b16 %v3653
        %v4166 = vunpack.c.l.b16 %v3654
        %v4167 = vunpack.c.l.b16 %v3655
        %v4168 = vunpack.c.l.b16 %v3656
        %v4169 = vunpack.c.l.b16 %v3657
        %v4170 = vunpack.c.l.b16 %v3658
        %v4171 = vunpack.c.l.b16 %v3659
        %v4172 = vunpack.c.l.b16 %v3660
        %v4173 = vunpack.c.l.b16 %v3661
        %v4174 = vunpack.c.l.b16 %v3662
        %v4175 = vunpack.c.l.b16 %v3663
        %v4176 = vunpack.c.l.b16 %v3664
        %v4177 = vunpack.c.l.b16 %v3665
        %v4178 = vunpack.c.l.b16 %v3666
        %v4179 = vunpack.c.l.b16 %v3667
        %v4180 = vunpack.c.l.b16 %v3668
        %v4181 = vunpack.c.l.b16 %v3669
        %v4182 = vunpack.c.l.b16 %v3670
        %v4183 = vunpack.c.l.b16 %v3671
        %v4184 = vunpack.c.l.b16 %v3672
        %v4185 = vunpack.c.l.b16 %v3673
        %v4186 = vunpack.c.l.b16 %v3674
        %v4187 = vunpack.c.l.b16 %v3675
        %v4188 = vunpack.c.l.b16 %v3676
        %v4189 = vunpack.c.l.b16 %v3677
        %v4190 = vunpack.c.l.b16 %v3678
        %v4191 = vunpack.c.l.b16 %v3679
        %v4192 = vunpack.c.l.b16 %v3680
        %v4193 = vunpack.c.l.b16 %v3681
        %v4194 = vunpack.c.l.b16 %v3682
        %v4195 = vunpack.c.l.b16 %v3683
        %v4196 = vunpack.c.l.b16 %v3684
        %v4197 = vunpack.c.l.b16 %v3685
        %v4198 = vunpack.c.l.b16 %v3686
        %v4199 = vunpack.c.l.b16 %v3687
        %v4200 = vunpack.c.l.b16 %v3688
        %v4201 = vunpack.c.l.b16 %v3689
        %v4202 = vunpack.c.l.b16 %v3690
        %v4203 = vunpack.c.l.b16 %v3691
        %v4204 = vunpack.c.l.b16 %v3692
        %v4205 = vunpack.c.l.b16 %v3693
        %v4206 = vunpack.c.l.b16 %v3694
        %v4207 = vunpack.c.l.b16 %v3695
        %v4208 = vunpack.c.l.b16 %v3696
        %v4209 = vunpack.c.l.b16 %v3697
        %v4210 = vunpack.c.l.b16 %v3698
        %v4211 = vunpack.c.l.b16 %v3699
        %v4212 = vunpack.c.l.b16 %v3700
        %v4213 = vunpack.c.l.b16 %v3701
        %v4214 = vunpack.c.l.b16 %v3702
        %v4215 = vunpack.c.l.b16 %v3703
        %v4216 = vunpack.c.l.b16 %v3704
        %v4217 = vunpack.c.l.b16 %v3705
        %v4218 = vunpack.c.l.b16 %v3706
        %v4219 = vunpack.c.l.b16 %v3707
        %v4220 = vunpack.c.l.b16 %v3708
        %v4221 = vunpack.c.l.b16 %v3709
        %v4222 = vunpack.c.l.b16 %v3710
        %v4223 = vunpack.c.l.b16 %v3711
        %v4224 = vunpack.c.l.b16 %v3712
        %v4225 = vunpack.c.l.b16 %v3713
        %v4226 = vunpack.c.l.b16 %v3714
        %v4227 = vunpack.c.l.b16 %v3715
        %v4228 = vunpack.c.l.b16 %v3716
        %v4229 = vunpack.c.l.b16 %v3717
        %v4230 = vunpack.c.l.b16 %v3718
        %v4231 = vunpack.c.l.b16 %v3719
        %v4232 = vunpack.c.l.b16 %v3720
        %v4233 = vunpack.c.l.b16 %v3721
        %v4234 = vunpack.c.l.b16 %v3722
        %v4235 = vunpack.c.l.b16 %v3723
        %v4236 = vunpack.c.l.b16 %v3724
        %v4237 = vunpack.c.l.b16 %v3725
        %v4238 = vunpack.c.l.b16 %v3726
        %v4239 = vunpack.c.l.b16 %v3727
        %v4240 = vunpack.c.l.b16 %v3728
        %v4241 = vunpack.c.l.b16 %v3729
        %v4242 = vunpack.c.l.b16 %v3730
        %v4243 = vunpack.c.l.b16 %v3731
        %v4244 = vunpack.c.l.b16 %v3732
        %v4245 = vunpack.c.l.b16 %v3733
        %v4246 = vunpack.c.l.b16 %v3734
        %v4247 = vunpack.c.l.b16 %v3735
        %v4248 = vunpack.c.l.b16 %v3736
        %v4249 = vunpack.c.l.b16 %v3737
        %v4250 = vunpack.c.l.b16 %v3738
        %v4251 = vunpack.c.l.b16 %v3739
        %v4252 = vunpack.c.l.b16 %v3740
        %v4253 = vunpack.c.l.b16 %v3741
        %v4254 = vunpack.c.l.b16 %v3742
        %v4255 = vunpack.c.l.b16 %v3743
        %v4256 = vunpack.c.l.b16 %v3744
        %v4257 = vunpack.c.l.b16 %v3745
        %v4258 = vunpack.c.l.b16 %v3746
        %v4259 = vunpack.c.l.b16 %v3747
        %v4260 = vunpack.c.l.b16 %v3748
        %v4261 = vunpack.c.l.b16 %v3749
        %v4262 = vunpack.c.l.b16 %v3750
        %v4263 = vunpack.c.l.b16 %v3751
        %v4264 = vunpack.c.l.b16 %v3752
        %v4265 = vunpack.c.l.b16 %v3753
        %v4266 = vunpack.c.l.b16 %v3754
        %v4267 = vunpack.c.l.b16 %v3755
        %v4268 = vunpack.c.l.b16 %v3756
        %v4269 = vunpack.c.l.b16 %v3757
        %v4270 = vunpack.c.l.b16 %v3758
        %v4271 = vunpack.c.l.b16 %v3759
        %v4272 = vunpack.c.l.b16 %v3760
        %v4273 = vunpack.c.l.b16 %v3761
        %v4274 = vunpack.c.l.b16 %v3762
        %v4275 = vunpack.c.l.b16 %v3763
        %v4276 = vunpack.c.l.b16 %v3764
        %v4277 = vunpack.c.l.b16 %v3765
        %v4278 = vunpack.c.l.b16 %v3766
        %v4279 = vunpack.c.l.b16 %v3767
        %v4280 = vunpack.c.l.b16 %v3768
        %v4281 = vunpack.c.l.b16 %v3769
        %v4282 = vunpack.c.l.b16 %v3770
        %v4283 = vunpack.c.l.b16 %v3771
        %v4284 = vunpack.c.l.b16 %v3772
        %v4285 = vunpack.c.l.b16 %v3773
        %v4286 = vunpack.c.l.b16 %v3774
        %v4287 = vunpack.c.l.b16 %v3775
        %v4288 = vunpack.c.l.b16 %v3776
        %v4289 = vunpack.c.l.b16 %v3777
        %v4290 = vunpack.c.l.b16 %v3778
        %v4291 = vunpack.c.l.b16 %v3779
        %v4292 = vunpack.c.l.b16 %v3780
        %v4293 = vunpack.c.l.b16 %v3781
        %v4294 = vunpack.c.l.b16 %v3782
        %v4295 = vunpack.c.l.b16 %v3783
        %v4296 = vunpack.c.l.b16 %v3784
        %v4297 = vunpack.c.l.b16 %v3785
        %v4298 = vunpack.c.l.b16 %v3786
        %v4299 = vunpack.c.l.b16 %v3787
        %v4300 = vunpack.c.l.b16 %v3788
        %v4301 = vunpack.c.l.b16 %v3789
        %v4302 = vunpack.c.l.b16 %v3790
        %v4303 = vunpack.c.l.b16 %v3791
        %v4304 = vunpack.c.l.b16 %v3792
        %v4305 = vunpack.c.l.b16 %v3793
        %v4306 = vunpack.c.l.b16 %v3794
        %v4307 = vunpack.c.l.b16 %v3795
        %v4308 = vunpack.c.l.b16 %v3796
        %v4309 = vunpack.c.l.b16 %v3797
        %v4310 = vunpack.c.l.b16 %v3798
        %v4311 = vunpack.c.l.b16 %v3799
        %v4312 = vunpack.c.l.b16 %v3800
        %v4313 = vunpack.c.l.b16 %v3801
        %v4314 = vunpack.c.l.b16 %v3802
        %v4315 = vunpack.c.l.b16 %v3803
        %v4316 = vunpack.c.l.b16 %v3804
        %v4317 = vunpack.c.l.b16 %v3805
        %v4318 = vunpack.c.l.b16 %v3806
        %v4319 = vunpack.c.l.b16 %v3807
        %v4320 = vunpack.c.l.b16 %v3808
        %v4321 = vunpack.c.l.b16 %v3809
        %v4322 = vunpack.c.l.b16 %v3810
        %v4323 = vunpack.c.l.b16 %v3811
        %v4324 = vunpack.c.l.b16 %v3812
        %v4325 = vunpack.c.l.b16 %v3813
        %v4326 = vunpack.c.l.b16 %v3814
        %v4327 = vunpack.c.l.b16 %v3815
        %v4328 = vunpack.c.l.b16 %v3816
        %v4329 = vunpack.c.l.b16 %v3817
        %v4330 = vunpack.c.l.b16 %v3818
        %v4331 = vunpack.c.l.b16 %v3819
        %v4332 = vunpack.c.l.b16 %v3820
        %v4333 = vunpack.c.l.b16 %v3821
        %v4334 = vunpack.c.l.b16 %v3822
        %v4335 = vunpack.c.l.b16 %v3823
        %v4336 = vunpack.c.l.b16 %v3824
        %v4337 = vunpack.c.l.b16 %v3825
        %v4338 = vunpack.c.l.b16 %v3826
        %v4339 = vunpack.c.l.b16 %v3827
        %v4340 = vunpack.c.l.b16 %v3828
        %v4341 = vunpack.c.l.b16 %v3829
        %v4342 = vunpack.c.l.b16 %v3830
        %v4343 = vunpack.c.l.b16 %v3831
        %v4344 = vunpack.c.l.b16 %v3832
        %v4345 = vunpack.c.l.b16 %v3833
        %v4346 = vunpack.c.l.b16 %v3834
        %v4347 = vunpack.c.l.b16 %v3835
        %v4348 = vunpack.c.l.b16 %v3836
        %v4349 = vunpack.c.l.b16 %v3837
        %v4350 = vpack.c.b16 %v4095, %v4094
        %v4351 = vpack.c.b16 %v4097, %v4096
        %v4352 = vpack.c.b16 %v4099, %v4098
        %v4353 = vpack.c.b16 %v4101, %v4100
        %v4354 = vpack.c.b16 %v4103, %v4102
        %v4355 = vpack.c.b16 %v4105, %v4104
        %v4356 = vpack.c.b16 %v4107, %v4106
        %v4357 = vpack.c.b16 %v4109, %v4108
        %v4358 = vpack.c.b16 %v4111, %v4110
        %v4359 = vpack.c.b16 %v4113, %v4112
        %v4360 = vpack.c.b16 %v4115, %v4114
        %v4361 = vpack.c.b16 %v4117, %v4116
        %v4362 = vpack.c.b16 %v4119, %v4118
        %v4363 = vpack.c.b16 %v4121, %v4120
        %v4364 = vpack.c.b16 %v4123, %v4122
        %v4365 = vpack.c.b16 %v4125, %v4124
        %v4366 = vpack.c.b16 %v4127, %v4126
        %v4367 = vpack.c.b16 %v4129, %v4128
        %v4368 = vpack.c.b16 %v4131, %v4130
        %v4369 = vpack.c.b16 %v4133, %v4132
        %v4370 = vpack.c.b16 %v4135, %v4134
        %v4371 = vpack.c.b16 %v4137, %v4136
        %v4372 = vpack.c.b16 %v4139, %v4138
        %v4373 = vpack.c.b16 %v4141, %v4140
        %v4374 = vpack.c.b16 %v4143, %v4142
        %v4375 = vpack.c.b16 %v4145, %v4144
        %v4376 = vpack.c.b16 %v4147, %v4146
        %v4377 = vpack.c.b16 %v4149, %v4148
        %v4378 = vpack.c.b16 %v4151, %v4150
        %v4379 = vpack.c.b16 %v4153, %v4152
        %v4380 = vpack.c.b16 %v4155, %v4154
        %v4381 = vpack.c.b16 %v4157, %v4156
        %v4382 = vpack.c.b16 %v4159, %v4158
        %v4383 = vpack.c.b16 %v4161, %v4160
        %v4384 = vpack.c.b16 %v4163, %v4162
        %v4385 = vpack.c.b16 %v4165, %v4164
        %v4386 = vpack.c.b16 %v4167, %v4166
        %v4387 = vpack.c.b16 %v4169, %v4168
        %v4388 = vpack.c.b16 %v4171, %v4170
        %v4389 = vpack.c.b16 %v4173, %v4172
        %v4390 = vpack.c.b16 %v4175, %v4174
        %v4391 = vpack.c.b16 %v4177, %v4176
        %v4392 = vpack.c.b16 %v4179, %v4178
        %v4393 = vpack.c.b16 %v4181, %v4180
        %v4394 = vpack.c.b16 %v4183, %v4182
        %v4395 = vpack.c.b16 %v4185, %v4184
        %v4396 = vpack.c.b16 %v4187, %v4186
        %v4397 = vpack.c.b16 %v4189, %v4188
        %v4398 = vpack.c.b16 %v4191, %v4190
        %v4399 = vpack.c.b16 %v4193, %v4192
        %v4400 = vpack.c.b16 %v4195, %v4194
        %v4401 = vpack.c.b16 %v4197, %v4196
        %v4402 = vpack.c.b16 %v4199, %v4198
        %v4403 = vpack.c.b16 %v4201, %v4200
        %v4404 = vpack.c.b16 %v4203, %v4202
        %v4405 = vpack.c.b16 %v4205, %v4204
        %v4406 = vpack.c.b16 %v4207, %v4206
        %v4407 = vpack.c.b16 %v4209, %v4208
        %v4408 = vpack.c.b16 %v4211, %v4210
        %v4409 = vpack.c.b16 %v4213, %v4212
        %v4410 = vpack.c.b16 %v4215, %v4214
        %v4411 = vpack.c.b16 %v4217, %v4216
        %v4412 = vpack.c.b16 %v4219, %v4218
        %v4413 = vpack.c.b16 %v4221, %v4220
        %v4414 = vpack.c.b16 %v4223, %v4222
        %v4415 = vpack.c.b16 %v4225, %v4224
        %v4416 = vpack.c.b16 %v4227, %v4226
        %v4417 = vpack.c.b16 %v4229, %v4228
        %v4418 = vpack.c.b16 %v4231, %v4230
        %v4419 = vpack.c.b16 %v4233, %v4232
        %v4420 = vpack.c.b16 %v4235, %v4234
        %v4421 = vpack.c.b16 %v4237, %v4236
        %v4422 = vpack.c.b16 %v4239, %v4238
        %v4423 = vpack.c.b16 %v4241, %v4240
        %v4424 = vpack.c.b16 %v4243, %v4242
        %v4425 = vpack.c.b16 %v4245, %v4244
        %v4426 = vpack.c.b16 %v4247, %v4246
        %v4427 = vpack.c.b16 %v4249, %v4248
        %v4428 = vpack.c.b16 %v4251, %v4250
        %v4429 = vpack.c.b16 %v4253, %v4252
        %v4430 = vpack.c.b16 %v4255, %v4254
        %v4431 = vpack.c.b16 %v4257, %v4256
        %v4432 = vpack.c.b16 %v4259, %v4258
        %v4433 = vpack.c.b16 %v4261, %v4260
        %v4434 = vpack.c.b16 %v4263, %v4262
        %v4435 = vpack.c.b16 %v4265, %v4264
        %v4436 = vpack.c.b16 %v4267, %v4266
        %v4437 = vpack.c.b16 %v4269, %v4268
        %v4438 = vpack.c.b16 %v4271, %v4270
        %v4439 = vpack.c.b16 %v4273, %v4272
        %v4440 = vpack.c.b16 %v4275, %v4274
        %v4441 = vpack.c.b16 %v4277, %v4276
        %v4442 = vpack.c.b16 %v4279, %v4278
        %v4443 = vpack.c.b16 %v4281, %v4280
        %v4444 = vpack.c.b16 %v4283, %v4282
        %v4445 = vpack.c.b16 %v4285, %v4284
        %v4446 = vpack.c.b16 %v4287, %v4286
        %v4447 = vpack.c.b16 %v4289, %v4288
        %v4448 = vpack.c.b16 %v4291, %v4290
        %v4449 = vpack.c.b16 %v4293, %v4292
        %v4450 = vpack.c.b16 %v4295, %v4294
        %v4451 = vpack.c.b16 %v4297, %v4296
        %v4452 = vpack.c.b16 %v4299, %v4298
        %v4453 = vpack.c.b16 %v4301, %v4300
        %v4454 = vpack.c.b16 %v4303, %v4302
        %v4455 = vpack.c.b16 %v4305, %v4304
        %v4456 = vpack.c.b16 %v4307, %v4306
        %v4457 = vpack.c.b16 %v4309, %v4308
        %v4458 = vpack.c.b16 %v4311, %v4310
        %v4459 = vpack.c.b16 %v4313, %v4312
        %v4460 = vpack.c.b16 %v4315, %v4314
        %v4461 = vpack.c.b16 %v4317, %v4316
        %v4462 = vpack.c.b16 %v4319, %v4318
        %v4463 = vpack.c.b16 %v4321, %v4320
        %v4464 = vpack.c.b16 %v4323, %v4322
        %v4465 = vpack.c.b16 %v4325, %v4324
        %v4466 = vpack.c.b16 %v4327, %v4326
        %v4467 = vpack.c.b16 %v4329, %v4328
        %v4468 = vpack.c.b16 %v4331, %v4330
        %v4469 = vpack.c.b16 %v4333, %v4332
        %v4470 = vpack.c.b16 %v4335, %v4334
        %v4471 = vpack.c.b16 %v4337, %v4336
        %v4472 = vpack.c.b16 %v4339, %v4338
        %v4473 = vpack.c.b16 %v4341, %v4340
        %v4474 = vpack.c.b16 %v4343, %v4342
        %v4475 = vpack.c.b16 %v4345, %v4344
        %v4476 = vpack.c.b16 %v4347, %v4346
        %v4477 = vpack.c.b16 %v4349, %v4348
        %4606 = vmatpush.bf16.msra.mxu0 %v4357
        %4607 = vmatpush.bf16.msra.mxu0 %v4356
        %4608 = vmatpush.bf16.msra.mxu0 %v4355
        %4609 = vmatpush.bf16.msra.mxu0 %v4354
        %4610 = vmatpush.bf16.msra.mxu0 %v4353
        %4611 = vmatpush.bf16.msra.mxu0 %v4352
        %4612 = vmatpush.bf16.msra.mxu0 %v4351
        %4613 = vmatpush.bf16.msra.mxu0 %v4350
        %4614 = vmatmul.bf16.gmra.mxu0 %v3566
        %v4615 = vpop.f32.mrf.mxu0
        %v4616 = vadd.f32 0.0, %v4615
        %v4617 = vpop.f32.mrf.mxu0
        %v4618 = vadd.f32 0.0, %v4617
        %4619 = vdwg.mxu0
        %4620 = vmatpush.bf16.msra.mxu0 %v4365
        %4621 = vmatpush.bf16.msra.mxu0 %v4364
        %4622 = vmatpush.bf16.msra.mxu0 %v4363
        %4623 = vmatpush.bf16.msra.mxu0 %v4362
        %4624 = vmatpush.bf16.msra.mxu0 %v4361
        %4625 = vmatpush.bf16.msra.mxu0 %v4360
        %4626 = vmatpush.bf16.msra.mxu0 %v4359
        %4627 = vmatpush.bf16.msra.mxu0 %v4358
        %4628 = vmatmul.bf16.gmra.mxu0 %v3567
        %v4629 = vpop.f32.mrf.mxu0
        %v4630 = vadd.f32 %v4616, %v4629
        %v4631 = vpop.f32.mrf.mxu0
        %v4632 = vadd.f32 %v4618, %v4631
        %4633 = vdwg.mxu0
        %4634 = vmatpush.bf16.msra.mxu0 %v4373
        %4635 = vmatpush.bf16.msra.mxu0 %v4372
        %4636 = vmatpush.bf16.msra.mxu0 %v4371
        %4637 = vmatpush.bf16.msra.mxu0 %v4370
        %4638 = vmatpush.bf16.msra.mxu0 %v4369
        %4639 = vmatpush.bf16.msra.mxu0 %v4368
        %4640 = vmatpush.bf16.msra.mxu0 %v4367
        %4641 = vmatpush.bf16.msra.mxu0 %v4366
        %4642 = vmatmul.bf16.gmra.mxu0 %v3568
        %v4643 = vpop.f32.mrf.mxu0
        %v4644 = vadd.f32 %v4630, %v4643
        %v4645 = vpop.f32.mrf.mxu0
        %v4646 = vadd.f32 %v4632, %v4645
        %4647 = vdwg.mxu0
        %4648 = vmatpush.bf16.msra.mxu0 %v4381
        %4649 = vmatpush.bf16.msra.mxu0 %v4380
        %4650 = vmatpush.bf16.msra.mxu0 %v4379
        %4651 = vmatpush.bf16.msra.mxu0 %v4378
        %4652 = vmatpush.bf16.msra.mxu0 %v4377
        %4653 = vmatpush.bf16.msra.mxu0 %v4376
        %4654 = vmatpush.bf16.msra.mxu0 %v4375
        %4655 = vmatpush.bf16.msra.mxu0 %v4374
        %4656 = vmatmul.bf16.gmra.mxu0 %v3569
        %v4657 = vpop.f32.mrf.mxu0
        %v4658 = vadd.f32 %v4644, %v4657
        %v4659 = vpop.f32.mrf.mxu0
        %v4660 = vadd.f32 %v4646, %v4659
        %4661 = vdwg.mxu0
        %4662 = vmatpush.bf16.msra.mxu0 %v4389
        %4663 = vmatpush.bf16.msra.mxu0 %v4388
        %4664 = vmatpush.bf16.msra.mxu0 %v4387
        %4665 = vmatpush.bf16.msra.mxu0 %v4386
        %4666 = vmatpush.bf16.msra.mxu0 %v4385
        %4667 = vmatpush.bf16.msra.mxu0 %v4384
        %4668 = vmatpush.bf16.msra.mxu0 %v4383
        %4669 = vmatpush.bf16.msra.mxu0 %v4382
        %4670 = vmatmul.bf16.gmra.mxu0 %v3570
        %v4671 = vpop.f32.mrf.mxu0
        %v4672 = vadd.f32 %v4658, %v4671
        %v4673 = vpop.f32.mrf.mxu0
        %v4674 = vadd.f32 %v4660, %v4673
        %4675 = vdwg.mxu0
        %4676 = vmatpush.bf16.msra.mxu0 %v4397
        %4677 = vmatpush.bf16.msra.mxu0 %v4396
        %4678 = vmatpush.bf16.msra.mxu0 %v4395
        %4679 = vmatpush.bf16.msra.mxu0 %v4394
        %4680 = vmatpush.bf16.msra.mxu0 %v4393
        %4681 = vmatpush.bf16.msra.mxu0 %v4392
        %4682 = vmatpush.bf16.msra.mxu0 %v4391
        %4683 = vmatpush.bf16.msra.mxu0 %v4390
        %4684 = vmatmul.bf16.gmra.mxu0 %v3571
        %v4685 = vpop.f32.mrf.mxu0
        %v4686 = vadd.f32 %v4672, %v4685
        %v4687 = vpop.f32.mrf.mxu0
        %v4688 = vadd.f32 %v4674, %v4687
        %4689 = vdwg.mxu0
        %4690 = vmatpush.bf16.msra.mxu0 %v4405
        %4691 = vmatpush.bf16.msra.mxu0 %v4404
        %4692 = vmatpush.bf16.msra.mxu0 %v4403
        %4693 = vmatpush.bf16.msra.mxu0 %v4402
        %4694 = vmatpush.bf16.msra.mxu0 %v4401
        %4695 = vmatpush.bf16.msra.mxu0 %v4400
        %4696 = vmatpush.bf16.msra.mxu0 %v4399
        %4697 = vmatpush.bf16.msra.mxu0 %v4398
        %4698 = vmatmul.bf16.gmra.mxu0 %v3572
        %v4699 = vpop.f32.mrf.mxu0
        %v4700 = vadd.f32 %v4686, %v4699
        %v4701 = vpop.f32.mrf.mxu0
        %v4702 = vadd.f32 %v4688, %v4701
        %4703 = vdwg.mxu0
        %4704 = vmatpush.bf16.msra.mxu0 %v4413
        %4705 = vmatpush.bf16.msra.mxu0 %v4412
        %4706 = vmatpush.bf16.msra.mxu0 %v4411
        %4707 = vmatpush.bf16.msra.mxu0 %v4410
        %4708 = vmatpush.bf16.msra.mxu0 %v4409
        %4709 = vmatpush.bf16.msra.mxu0 %v4408
        %4710 = vmatpush.bf16.msra.mxu0 %v4407
        %4711 = vmatpush.bf16.msra.mxu0 %v4406
        %4712 = vmatmul.bf16.gmra.mxu0 %v3573
        %v4713 = vpop.f32.mrf.mxu0
        %v4714 = vadd.f32 %v4700, %v4713
        %v4715 = vpop.f32.mrf.mxu0
        %v4716 = vadd.f32 %v4702, %v4715
        %4717 = vdwg.mxu0
        %4718 = vmatpush.bf16.msra.mxu0 %v4421
        %4719 = vmatpush.bf16.msra.mxu0 %v4420
        %4720 = vmatpush.bf16.msra.mxu0 %v4419
        %4721 = vmatpush.bf16.msra.mxu0 %v4418
        %4722 = vmatpush.bf16.msra.mxu0 %v4417
        %4723 = vmatpush.bf16.msra.mxu0 %v4416
        %4724 = vmatpush.bf16.msra.mxu0 %v4415
        %4725 = vmatpush.bf16.msra.mxu0 %v4414
        %4726 = vmatmul.bf16.gmra.mxu0 %v3574
        %v4727 = vpop.f32.mrf.mxu0
        %v4728 = vadd.f32 %v4714, %v4727
        %v4729 = vpop.f32.mrf.mxu0
        %v4730 = vadd.f32 %v4716, %v4729
        %4731 = vdwg.mxu0
        %4732 = vmatpush.bf16.msra.mxu0 %v4429
        %4733 = vmatpush.bf16.msra.mxu0 %v4428
        %4734 = vmatpush.bf16.msra.mxu0 %v4427
        %4735 = vmatpush.bf16.msra.mxu0 %v4426
        %4736 = vmatpush.bf16.msra.mxu0 %v4425
        %4737 = vmatpush.bf16.msra.mxu0 %v4424
        %4738 = vmatpush.bf16.msra.mxu0 %v4423
        %4739 = vmatpush.bf16.msra.mxu0 %v4422
        %4740 = vmatmul.bf16.gmra.mxu0 %v3575
        %v4741 = vpop.f32.mrf.mxu0
        %v4742 = vadd.f32 %v4728, %v4741
        %v4743 = vpop.f32.mrf.mxu0
        %v4744 = vadd.f32 %v4730, %v4743
        %4745 = vdwg.mxu0
        %4746 = vmatpush.bf16.msra.mxu0 %v4437
        %4747 = vmatpush.bf16.msra.mxu0 %v4436
        %4748 = vmatpush.bf16.msra.mxu0 %v4435
        %4749 = vmatpush.bf16.msra.mxu0 %v4434
        %4750 = vmatpush.bf16.msra.mxu0 %v4433
        %4751 = vmatpush.bf16.msra.mxu0 %v4432
        %4752 = vmatpush.bf16.msra.mxu0 %v4431
        %4753 = vmatpush.bf16.msra.mxu0 %v4430
        %4754 = vmatmul.bf16.gmra.mxu0 %v3576
        %v4755 = vpop.f32.mrf.mxu0
        %v4756 = vadd.f32 %v4742, %v4755
        %v4757 = vpop.f32.mrf.mxu0
        %v4758 = vadd.f32 %v4744, %v4757
        %4759 = vdwg.mxu0
        %4760 = vmatpush.bf16.msra.mxu0 %v4445
        %4761 = vmatpush.bf16.msra.mxu0 %v4444
        %4762 = vmatpush.bf16.msra.mxu0 %v4443
        %4763 = vmatpush.bf16.msra.mxu0 %v4442
        %4764 = vmatpush.bf16.msra.mxu0 %v4441
        %4765 = vmatpush.bf16.msra.mxu0 %v4440
        %4766 = vmatpush.bf16.msra.mxu0 %v4439
        %4767 = vmatpush.bf16.msra.mxu0 %v4438
        %4768 = vmatmul.bf16.gmra.mxu0 %v3577
        %v4769 = vpop.f32.mrf.mxu0
        %v4770 = vadd.f32 %v4756, %v4769
        %v4771 = vpop.f32.mrf.mxu0
        %v4772 = vadd.f32 %v4758, %v4771
        %4773 = vdwg.mxu0
        %4774 = vmatpush.bf16.msra.mxu0 %v4453
        %4775 = vmatpush.bf16.msra.mxu0 %v4452
        %4776 = vmatpush.bf16.msra.mxu0 %v4451
        %4777 = vmatpush.bf16.msra.mxu0 %v4450
        %4778 = vmatpush.bf16.msra.mxu0 %v4449
        %4779 = vmatpush.bf16.msra.mxu0 %v4448
        %4780 = vmatpush.bf16.msra.mxu0 %v4447
        %4781 = vmatpush.bf16.msra.mxu0 %v4446
        %4782 = vmatmul.bf16.gmra.mxu0 %v3578
        %v4783 = vpop.f32.mrf.mxu0
        %v4784 = vadd.f32 %v4770, %v4783
        %v4785 = vpop.f32.mrf.mxu0
        %v4786 = vadd.f32 %v4772, %v4785
        %4787 = vdwg.mxu0
        %4788 = vmatpush.bf16.msra.mxu0 %v4461
        %4789 = vmatpush.bf16.msra.mxu0 %v4460
        %4790 = vmatpush.bf16.msra.mxu0 %v4459
        %4791 = vmatpush.bf16.msra.mxu0 %v4458
        %4792 = vmatpush.bf16.msra.mxu0 %v4457
        %4793 = vmatpush.bf16.msra.mxu0 %v4456
        %4794 = vmatpush.bf16.msra.mxu0 %v4455
        %4795 = vmatpush.bf16.msra.mxu0 %v4454
        %4796 = vmatmul.bf16.gmra.mxu0 %v3579
        %v4797 = vpop.f32.mrf.mxu0
        %v4798 = vadd.f32 %v4784, %v4797
        %v4799 = vpop.f32.mrf.mxu0
        %v4800 = vadd.f32 %v4786, %v4799
        %4801 = vdwg.mxu0
        %4802 = vmatpush.bf16.msra.mxu0 %v4469
        %4803 = vmatpush.bf16.msra.mxu0 %v4468
        %4804 = vmatpush.bf16.msra.mxu0 %v4467
        %4805 = vmatpush.bf16.msra.mxu0 %v4466
        %4806 = vmatpush.bf16.msra.mxu0 %v4465
        %4807 = vmatpush.bf16.msra.mxu0 %v4464
        %4808 = vmatpush.bf16.msra.mxu0 %v4463
        %4809 = vmatpush.bf16.msra.mxu0 %v4462
        %4810 = vmatmul.bf16.gmra.mxu0 %v3580
        %v4811 = vpop.f32.mrf.mxu0
        %v4812 = vadd.f32 %v4798, %v4811
        %v4813 = vpop.f32.mrf.mxu0
        %v4814 = vadd.f32 %v4800, %v4813
        %4815 = vdwg.mxu0
        %4816 = vmatpush.bf16.msra.mxu0 %v4477
        %4817 = vmatpush.bf16.msra.mxu0 %v4476
        %4818 = vmatpush.bf16.msra.mxu0 %v4475
        %4819 = vmatpush.bf16.msra.mxu0 %v4474
        %4820 = vmatpush.bf16.msra.mxu0 %v4473
        %4821 = vmatpush.bf16.msra.mxu0 %v4472
        %4822 = vmatpush.bf16.msra.mxu0 %v4471
        %4823 = vmatpush.bf16.msra.mxu0 %v4470
        %4824 = vmatmul.bf16.gmra.mxu0 %v3581
        %v4825 = vpop.f32.mrf.mxu0
        %v4826 = vadd.f32 %v4812, %v4825
        %v4827 = vpop.f32.mrf.mxu0
        %v4828 = vadd.f32 %v4814, %v4827
        %4829 = vdwg.mxu0
        %v4830 = vadd.f32 %v3026, %v4826
        %v4831 = vadd.f32 %v3027, %v4828
        %v4832 = vld [vmem:[%s788] sm:$0x1]
        %v4834 = vperm.slane %v4832, 0
        %v4836 = vadd.f32 %v4830, %v4834
        %v4837 = vadd.f32 %v4831, %v4834
        %4838 = vst.msk [vmem:[#allocation2] sm:$0xff] %vm803, %v4836
        %4839 = vst.msk [vmem:[#allocation2 + $0x8] sm:$0xff] %vm803, %v4837
        %p4840 = scmp.eq.s32.totalorder %s30, 1
        // Predicated region
        $region97: #{tpu_custom_call.1} parent=91 // pred_check
          %p4841 = pneg %p4840
        $region98: #{tpu_custom_call.1} parent=91 // pred_check_branch
          %4843 = sbr.rel (%p4841) target = $region100
        $region99: #{tpu_custom_call.1} parent=91 // pred_region
          %v4844 = vld [vmem:[%s16] sm:$0x1]
          %v4845 = vld [vmem:[%s17] sm:$0x1]
          %v4846 = vsel %vm803, %v4836, 0.0
          %4847 = vadd.xlane.f32.xlu0 %v4846
          %v4848 = vpop.xlane.xlu0 %4847
          %v4849 = vsel %vm803, %v4837, 0.0
          %4850 = vadd.xlane.f32.xlu0 %v4849
          %v4851 = vpop.xlane.xlu0 %4850
          %v4852 = vmul.f32 %v4848, %v816
          %v4853 = vmul.f32 %v4851, %v816
          %v4854 = vsub.f32 %v4836, %v4852
          %v4855 = vsub.f32 %v4837, %v4853
          %v4856 = vmul.f32 %v4854, %v4854
          %v4857 = vmul.f32 %v4855, %v4855
          %v4858 = vsel %vm803, %v4856, 0.0
          %4859 = vadd.xlane.f32.xlu0 %v4858
          %v4860 = vpop.xlane.xlu0 %4859
          %v4861 = vsel %vm803, %v4857, 0.0
          %4862 = vadd.xlane.f32.xlu0 %v4861
          %v4863 = vpop.xlane.xlu0 %4862
          %v4864 = vmul.f32 %v4860, %v816
          %v4865 = vmul.f32 %v4863, %v816
          %v4866 = vadd.f32 %v4864, 1e-05
          %v4867 = vadd.f32 %v4865, 1e-05
          %v4868 = vrsqrt.pop %v4866
          %v4869 = vmul.f32 %v4868, %v4866
          %v4870 = vmul.f32 %v4869, %v4868
          %v4871 = vmul.f32 0.5, %v4870
          %v4872 = vsub.f32 1.5, %v4871
          %v4873 = vmul.f32 %v4868, %v4872
          %vm4874 = vweird.f32 %v4866
          %vm4875 = vweird.f32 %v4868
          %vm4876 = vmor %vm4874, %vm4875
          %v4877 = vsel %vm4876, %v4868, %v4873
          %v4878 = vrsqrt.pop %v4867
          %v4879 = vmul.f32 %v4878, %v4867
          %v4880 = vmul.f32 %v4879, %v4878
          %v4881 = vmul.f32 0.5, %v4880
          %v4882 = vsub.f32 1.5, %v4881
          %v4883 = vmul.f32 %v4878, %v4882
          %vm4884 = vweird.f32 %v4867
          %vm4885 = vweird.f32 %v4878
          %vm4886 = vmor %vm4884, %vm4885
          %v4887 = vsel %vm4886, %v4878, %v4883
          %v4888 = vmul.f32 %v4854, %v4877
          %v4889 = vmul.f32 %v4855, %v4887
          %v4891 = vperm.slane %v4844, 0
          %v4893 = vmul.f32 %v4888, %v4891
          %v4894 = vmul.f32 %v4889, %v4891
          %v4896 = vperm.slane %v4845, 0
          %v4898 = vadd.f32 %v4893, %v4896
          %v4899 = vadd.f32 %v4894, %v4896
          %4900 = vst.msk [vmem:[#allocation3] sm:$0xff] %vm803, %v4898
          %4901 = vst.msk [vmem:[#allocation3 + $0x8] sm:$0xff] %vm803, %v4899
        $region100: #{tpu_custom_call.1} parent=91 // pred_fallthru
          _
        // Predicated region
        $region101: #{tpu_custom_call.1} parent=91 // pred_check
          %p4902 = pneg %p491
        $region102: #{tpu_custom_call.1} parent=91 // pred_check_branch
          %4904 = sbr.rel (%p4902) target = $region104
        $region103: #{tpu_custom_call.1} parent=91 // pred_region
          %4906 = vsyncadd [#allocation4], 0
          %s4907 = sshll.u32 [#allocation3], 4
          %s4908 = int_to_ptr.vmem [resolvable:$true] %s4907
          %s4909 = sshll.u32 %s18, 4
          %s4910 = int_to_ptr.hbm [resolvable:$true] %s4909
          %4915 = dma.vmem_to_hbm [thread:$0]  %s4908, 256, %s4910, [#allocation4], 128, 128, 8
        $region104: #{tpu_custom_call.1} parent=91 // pred_fallthru
          _
        // Predicated region
        $region105: #{tpu_custom_call.1} parent=91 // pred_check
          %p4916 = pneg %p491
        $region106: #{tpu_custom_call.1} parent=91 // pred_check_branch
          %4918 = sbr.rel (%p4916) target = $region108
        $region107: #{tpu_custom_call.1} parent=91 // pred_region
          %4920 = dma.done [#allocation4], 256
        $region108: #{tpu_custom_call.1} parent=91 // pred_fallthru
          _
      $region92: #{tpu_custom_call.1} parent=5 // pred_fallthru
        _
      %p4921 = scmp.le.s32.totalorder 2, %s25
      // Predicated region
      $region109: #{tpu_custom_call.1} parent=5 // pred_check
        %p4922 = pneg %p4921
      $region110: #{tpu_custom_call.1} parent=5 // pred_check_branch
        %4924 = sbr.rel (%p4922) target = $region112
      $region111: #{tpu_custom_call.1} parent=5 // pred_region
        %s4925 = ssub.s32 %s25, 2
      $region112: #{tpu_custom_call.1} parent=5 // pred_fallthru
        _
    $region6: #{tpu_custom_call.1} parent=1 // loop_footer
      %s29 = sadd.s32 1, %s25
    $region7: #{tpu_custom_call.1} parent=1 // loop_footer_branch
      %24 = sbr.rel target = $region3
    $region8: #{tpu_custom_call.1} parent=1 // loop_exit
      _
    %4926 = vsyncpa [#allocation4], 1
    %s4927 = scalar_lea.sflag [#allocation4], 1
    %4928 = vsyncpa %s4927, 1

</llo_original>
